<compile_context>
chip_gen: v6e
topology: v6e:2x2x1
jax: 0.10.0
libtpu: 0.0.40
codegen_flags: <defaults>
</compile_context>

<pallas_src>
import math

import jax
import jax.numpy as jnp
from jax.experimental import pallas as pl
from jax.experimental.pallas import tpu as pltpu


# ----------------------------- fused kernel ---------------------------------


def make_fused_gru_fc_kernel(T, Bp, I, H, C, num_layers):
    """Build the fused GRU(+FC) kernel for static shapes.

    Kernel ref layout (inputs..., outputs..., scratch...):
      refs[0]              : x_tm     (T, Bp, I)   time-major, batch padded to Bp
      refs[1 + 4*l + 0]    : w_ih_t   (in_l, 3H)   gate order r, z, n
      refs[1 + 4*l + 1]    : w_hh_t   (H, 3H)
      refs[1 + 4*l + 2]    : b_gi     (1, 3H)      [bir+bhr, biz+bhz, bin]
      refs[1 + 4*l + 3]    : b_hn     (1, H)       b_hn (scaled by r)
      refs[1 + 4*L]        : w_fc_t   (H, C)
      refs[2 + 4*L]        : b_fc     (1, C)
      refs[3 + 4*L]        : out      (Bp, C)      only HBM writeback
      refs[4 + 4*L]        : gi0      (T, Bp, 3H)  VMEM scratch (layer-0 proj)
    """

    def kernel(*refs):
        x_ref = refs[0]
        layer_refs = refs[1:1 + 4 * num_layers]
        w_fc_ref = refs[1 + 4 * num_layers]
        b_fc_ref = refs[2 + 4 * num_layers]
        out_ref = refs[3 + 4 * num_layers]
        gi0_ref = refs[4 + 4 * num_layers]

        w_ih = [layer_refs[4 * l + 0][...] for l in range(num_layers)]
        w_hh = [layer_refs[4 * l + 1][...] for l in range(num_layers)]
        b_gi = [layer_refs[4 * l + 2][...] for l in range(num_layers)]
        # Hoist the (1, H) -> (Bp, H) broadcast out of the recurrence.
        b_hn_b = [jnp.broadcast_to(layer_refs[4 * l + 3][...], (Bp, H))
                  for l in range(num_layers)]

        # ---- Hoisted layer-0 input projection for ALL timesteps: one big MXU
        # matmul off the serial critical path; result lands in a timestep-major
        # (T, Bp, 3H) VMEM scratch so per-step reads are tile-aligned ref[t]
        # views and the big value's vreg live range is bounded.
        x2d = x_ref[...].reshape(T * Bp, I)
        gi0 = jnp.dot(x2d, w_ih[0], preferred_element_type=jnp.float32) + b_gi[0]
        gi0_ref[...] = gi0.reshape(T, Bp, 3 * H)

        def gru_cell(gi_t, h_prev, w_hh_l, b_hn_l):
            # Only the recurrent matmul sits on the serial chain.
            gh = jnp.dot(h_prev, w_hh_l, preferred_element_type=jnp.float32)
            rz = jax.nn.sigmoid(gi_t[:, :2 * H] + gh[:, :2 * H])
            r = rz[:, :H]
            z = rz[:, H:]
            n = jnp.tanh(gi_t[:, 2 * H:] + r * (gh[:, 2 * H:] + b_hn_l))
            return n + z * (h_prev - n)            # == (1-z)*n + z*h_prev

        # ---- Wavefront schedule: at step s, layer l processes time t = s - l.
        # All active (layer, t) cells within a step are mutually independent
        # (they only read the previous step's states), so the serial chain is
        # T + L - 1 steps instead of L * T.
        h = [jnp.zeros((Bp, H), dtype=jnp.float32) for _ in range(num_layers)]
        for s in range(T + num_layers - 1):        # tiny & static: full unroll
            prev = list(h)                          # snapshot of step-(s-1) states
            for l in range(num_layers):
                t = s - l
                if 0 <= t < T:
                    if l == 0:
                        gi_t = gi0_ref[t]                       # (Bp, 3H), aligned
                    else:
                        # Input is layer l-1's hidden at time t (from step s-1).
                        gi_t = (jnp.dot(prev[l - 1], w_ih[l],
                                        preferred_element_type=jnp.float32)
                                + b_gi[l])
                    h[l] = gru_cell(gi_t, prev[l], w_hh[l], b_hn_b[l])

        # Final classifier on the last timestep of the top layer.
        out_ref[...] = (jnp.dot(h[num_layers - 1], w_fc_ref[...],
                                preferred_element_type=jnp.float32)
                        + b_fc_ref[...])

    return kernel


# ----------------------------- wrapper ---------------------------------------


def gru_forward(params, x, sequence_length, input_size, num_batch_shards=None):
    """Full forward pass of the PyTorch GRU module (single fused pallas_call)."""
    # x.view(-1, sequence_length, input_size)
    x = x.reshape(-1, sequence_length, input_size).astype(jnp.float32)
    B, T, I = x.shape
    layers = params["layers"]
    H = layers[0]["w_hh_t"].shape[0]
    C = params["fc_w_t"].shape[1]
    L = len(layers)

    # Batch sharding across TensorCores (v7x has 2 TCs).  Only shard when every
    # shard still carries a full 8-row sublane tile of REAL batch rows; at tiny
    # batches a split would just duplicate padded work.
    if num_batch_shards is None:
        num_batch_shards = 2 if B >= 16 else 1
    G = max(1, int(num_batch_shards))
    gs = -(-B // G)                 # real rows per shard (ceil)
    Bp = -(-gs // 8) * 8            # padded rows per shard (sublane width)

    # Batch-first -> time-major relayout + zero padding, once, as tiny XLA ops
    # in the wrapper (off the kernel critical path).
    x_tm = jnp.transpose(x, (1, 0, 2))                          # (T, B, I)
    x_tm = jnp.pad(x_tm, ((0, 0), (0, G * gs - B), (0, 0)))     # (T, G*gs, I)
    x_tm = x_tm.reshape(T, G, gs, I)
    x_tm = jnp.pad(x_tm, ((0, 0), (0, 0), (0, Bp - gs), (0, 0)))
    x_tm = x_tm.reshape(T, G * Bp, I)                           # (T, G*Bp, I)

    inputs = [x_tm]
    for lyr in layers:
        inputs += [lyr["w_ih_t"], lyr["w_hh_t"], lyr["b_gi"], lyr["b_hn"]]
    inputs += [params["fc_w_t"], params["fc_b"]]

    def full_spec(a):
        # Whole-array VMEM-resident block, same for every grid step (weights).
        return pl.BlockSpec(a.shape, lambda g, _nd=a.ndim: (0,) * _nd)

    in_specs = [pl.BlockSpec((T, Bp, I), lambda g: (0, g, 0))]
    in_specs += [full_spec(a) for a in inputs[1:]]
    out_spec = pl.BlockSpec((Bp, C), lambda g: (g, 0))

    kernel = make_fused_gru_fc_kernel(T=T, Bp=Bp, I=I, H=H, C=C, num_layers=L)
    out = pl.pallas_call(
        kernel,
        grid=(G,),
        out_shape=jax.ShapeDtypeStruct((G * Bp, C), jnp.float32),
        in_specs=in_specs,
        out_specs=out_spec,
        scratch_shapes=[
            pltpu.VMEM((T, Bp, 3 * H), jnp.float32),   # hoisted layer-0 proj
        ],
        compiler_params=pltpu.CompilerParams(
            dimension_semantics=("parallel",)),        # shards -> both TCs on v7x
    )(*inputs)

    # Trim shard padding + batch padding (tiny XLA ops).
    out = out.reshape(G, Bp, C)[:, :gs, :].reshape(G * gs, C)[:B, :]
    return out


# ----------------------------- params ----------------------------------------


def init_gru_params(key, input_size, hidden_size, num_layers, num_classes):
    """PyTorch-style init (uniform(-1/sqrt(H), 1/sqrt(H))), weights pre-transposed
    to (in, 3H) with gate order [r, z, n]; biases pre-folded for the kernel."""
    H = hidden_size
    k = 1.0 / math.sqrt(H)
    params = {"layers": []}
    for layer in range(num_layers):
        in_dim = input_size if layer == 0 else H
        key, k1, k2, k3, k4 = jax.random.split(key, 5)
        w_ih_t = jax.random.uniform(k1, (in_dim, 3 * H), jnp.float32, -k, k)
        w_hh_t = jax.random.uniform(k2, (H, 3 * H), jnp.float32, -k, k)
        b_ih = jax.random.uniform(k3, (3 * H,), jnp.float32, -k, k)
        b_hh = jax.random.uniform(k4, (3 * H,), jnp.float32, -k, k)
        # Fold biases: r/z gates get b_ih + b_hh in the hoisted input projection,
        # the n gate keeps only b_ih there; b_hh_n stays separate (scaled by r).
        b_gi = jnp.concatenate([b_ih[:2 * H] + b_hh[:2 * H], b_ih[2 * H:]])
        b_hn = b_hh[2 * H:]
        params["layers"].append({
            "w_ih_t": w_ih_t,
            "w_hh_t": w_hh_t,
            "b_gi": b_gi.reshape(1, 3 * H),
            "b_hn": b_hn.reshape(1, H),
        })
    key, k5, k6 = jax.random.split(key, 3)
    params["fc_w_t"] = jax.random.uniform(k5, (H, num_classes), jnp.float32, -k, k)
    params["fc_b"] = jax.random.uniform(k6, (num_classes,), jnp.float32,
                                        -k, k).reshape(1, num_classes)
    return params


# ----------------------------- pure-JAX reference ----------------------------


def gru_reference(params, x, sequence_length, input_size):
    x = x.reshape(-1, sequence_length, input_size).astype(jnp.float32)
    B, T, _ = x.shape
    h_seq = x
    for lyr in params["layers"]:
        H = lyr["w_hh_t"].shape[0]
        w_ih, w_hh = lyr["w_ih_t"], lyr["w_hh_t"]
        b_gi, b_hn = lyr["b_gi"], lyr["b_hn"]
        h = jnp.zeros((B, H), jnp.float32)
        outs = []
        for t in range(T):
            gi = h_seq[:, t, :] @ w_ih + b_gi
            gh = h @ w_hh
            r = jax.nn.sigmoid(gi[:, :H] + gh[:, :H])
            z = jax.nn.sigmoid(gi[:, H:2 * H] + gh[:, H:2 * H])
            n = jnp.tanh(gi[:, 2 * H:] + r * (gh[:, 2 * H:] + b_hn))
            h = (1.0 - z) * n + z * h
            outs.append(h)
        h_seq = jnp.stack(outs, axis=1)
    return h_seq[:, -1, :] @ params["fc_w_t"] + params["fc_b"]


# ----------------------------- main -------------------------------------------

if __name__ == "__main__":
    sequence_length = 8
    input_size = 16
    hidden_size = 32
    num_layers = 2
    num_classes = 10
    batch = 4

    key = jax.random.PRNGKey(0)
    key, xkey = jax.random.split(key)
    x = jax.random.normal(xkey, (batch, sequence_length, input_size), jnp.float32)

    params = init_gru_params(key, input_size, hidden_size, num_layers, num_classes)

    # Small-batch path (grid=(1,), everything VMEM resident).
    out = gru_forward(params, x, sequence_length, input_size)
    out = jax.block_until_ready(out)
    assert out.shape == (batch, num_classes), out.shape
    ref = gru_reference(params, x, sequence_length, input_size)
    assert jnp.allclose(out, ref, atol=2e-3, rtol=2e-3), (
        float(jnp.max(jnp.abs(out - ref))))

    # Also exercise the 2-shard grid path (parallel dimension_semantics; uses
    # both TensorCores on v7x, runs sequentially on v5e/v6e).
    key, xkey2 = jax.random.split(key)
    x2 = jax.random.normal(xkey2, (16, sequence_length, input_size), jnp.float32)
    out2 = jax.block_until_ready(
        gru_forward(params, x2, sequence_length, input_size))
    assert out2.shape == (16, num_classes), out2.shape
    ref2 = gru_reference(params, x2, sequence_length, input_size)
    assert jnp.allclose(out2, ref2, atol=2e-3, rtol=2e-3), (
        float(jnp.max(jnp.abs(out2 - ref2))))

    print("KERNEL_OK")
</pallas_src>

<mosaic_0001>
module attributes {stable_mosaic.version = 11 : i64} {
  func.func @kernel(%arg0: i32, %arg1: memref<8x8x16xf32, #tpu.memory_space<vmem>>, %arg2: memref<16x96xf32, #tpu.memory_space<vmem>>, %arg3: memref<32x96xf32, #tpu.memory_space<vmem>>, %arg4: memref<1x96xf32, #tpu.memory_space<vmem>>, %arg5: memref<1x32xf32, #tpu.memory_space<vmem>>, %arg6: memref<32x96xf32, #tpu.memory_space<vmem>>, %arg7: memref<32x96xf32, #tpu.memory_space<vmem>>, %arg8: memref<1x96xf32, #tpu.memory_space<vmem>>, %arg9: memref<1x32xf32, #tpu.memory_space<vmem>>, %arg10: memref<32x10xf32, #tpu.memory_space<vmem>>, %arg11: memref<1x10xf32, #tpu.memory_space<vmem>>, %arg12: memref<8x10xf32, #tpu.memory_space<vmem>>, %arg13: memref<8x8x96xf32, #tpu.memory_space<vmem>>) attributes {dimension_semantics = [#tpu.dimension_semantics<parallel>], iteration_bounds = array<i64: 1>, scalar_prefetch = 0 : i64, scratch_operands = 1 : i64, tpu.core_type = #tpu.core_type<tc>, window_params = [{transform_indices = @transform_0, window_bounds = array<i64: 8, 8, 16>}, {pipeline_mode = #tpu.pipeline_mode<synchronous>, transform_indices = @transform_1, window_bounds = array<i64: 16, 96>}, {pipeline_mode = #tpu.pipeline_mode<synchronous>, transform_indices = @transform_2, window_bounds = array<i64: 32, 96>}, {pipeline_mode = #tpu.pipeline_mode<synchronous>, transform_indices = @transform_3, window_bounds = array<i64: 1, 96>}, {pipeline_mode = #tpu.pipeline_mode<synchronous>, transform_indices = @transform_4, window_bounds = array<i64: 1, 32>}, {pipeline_mode = #tpu.pipeline_mode<synchronous>, transform_indices = @transform_5, window_bounds = array<i64: 32, 96>}, {pipeline_mode = #tpu.pipeline_mode<synchronous>, transform_indices = @transform_6, window_bounds = array<i64: 32, 96>}, {pipeline_mode = #tpu.pipeline_mode<synchronous>, transform_indices = @transform_7, window_bounds = array<i64: 1, 96>}, {pipeline_mode = #tpu.pipeline_mode<synchronous>, transform_indices = @transform_8, window_bounds = array<i64: 1, 32>}, {pipeline_mode = #tpu.pipeline_mode<synchronous>, transform_indices = @transform_9, window_bounds = array<i64: 32, 10>}, {pipeline_mode = #tpu.pipeline_mode<synchronous>, transform_indices = @transform_10, window_bounds = array<i64: 1, 10>}, {transform_indices = @transform_11, window_bounds = array<i64: 8, 10>}]} {
    %c0 = arith.constant 0 : index
    %c0_0 = arith.constant 0 : index
    %0 = vector.load %arg2[%c0, %c0_0] : memref<16x96xf32, #tpu.memory_space<vmem>>, vector<16x96xf32>
    %c0_1 = arith.constant 0 : index
    %c0_2 = arith.constant 0 : index
    %1 = vector.load %arg6[%c0_1, %c0_2] : memref<32x96xf32, #tpu.memory_space<vmem>>, vector<32x96xf32>
    %c0_3 = arith.constant 0 : index
    %c0_4 = arith.constant 0 : index
    %2 = vector.load %arg3[%c0_3, %c0_4] : memref<32x96xf32, #tpu.memory_space<vmem>>, vector<32x96xf32>
    %c0_5 = arith.constant 0 : index
    %c0_6 = arith.constant 0 : index
    %3 = vector.load %arg7[%c0_5, %c0_6] : memref<32x96xf32, #tpu.memory_space<vmem>>, vector<32x96xf32>
    %c0_7 = arith.constant 0 : index
    %c0_8 = arith.constant 0 : index
    %4 = vector.load %arg4[%c0_7, %c0_8] : memref<1x96xf32, #tpu.memory_space<vmem>>, vector<1x96xf32>
    %c0_9 = arith.constant 0 : index
    %c0_10 = arith.constant 0 : index
    %5 = vector.load %arg8[%c0_9, %c0_10] : memref<1x96xf32, #tpu.memory_space<vmem>>, vector<1x96xf32>
    %c0_11 = arith.constant 0 : index
    %c0_12 = arith.constant 0 : index
    %6 = vector.load %arg5[%c0_11, %c0_12] : memref<1x32xf32, #tpu.memory_space<vmem>>, vector<1x32xf32>
    %7 = vector.shape_cast %6 : vector<1x32xf32> to vector<1x32xf32>
    %8 = vector.broadcast %7 : vector<1x32xf32> to vector<8x32xf32>
    %c0_13 = arith.constant 0 : index
    %c0_14 = arith.constant 0 : index
    %9 = vector.load %arg9[%c0_13, %c0_14] : memref<1x32xf32, #tpu.memory_space<vmem>>, vector<1x32xf32>
    %10 = vector.shape_cast %9 : vector<1x32xf32> to vector<1x32xf32>
    %11 = vector.broadcast %10 : vector<1x32xf32> to vector<8x32xf32>
    %c0_15 = arith.constant 0 : index
    %c0_16 = arith.constant 0 : index
    %c0_17 = arith.constant 0 : index
    %12 = vector.load %arg1[%c0_15, %c0_16, %c0_17] : memref<8x8x16xf32, #tpu.memory_space<vmem>>, vector<8x8x16xf32>
    %13 = vector.shape_cast %12 : vector<8x8x16xf32> to vector<64x16xf32>
    %cst = arith.constant dense<0.000000e+00> : vector<64x96xf32>
    %14 = tpu.matmul %13, %0, %cst {dimension_numbers = #tpu.dot_dimension_numbers<[1], [0], [0], [1], [0, 0, 1, 1], [], []>} : vector<64x16xf32>, vector<16x96xf32>, vector<64x96xf32> -> vector<64x96xf32>
    %15 = vector.broadcast %4 : vector<1x96xf32> to vector<64x96xf32>
    %16 = arith.addf %14, %15 : vector<64x96xf32>
    %17 = vector.shape_cast %16 : vector<64x96xf32> to vector<8x8x96xf32>
    %c0_18 = arith.constant 0 : index
    %c0_19 = arith.constant 0 : index
    %c0_20 = arith.constant 0 : index
    %18 = vector.load %arg13[%c0_18, %c0_19, %c0_20] : memref<8x8x96xf32, #tpu.memory_space<vmem>>, vector<8x8x96xf32>
    tpu.vector_store %arg13[%c0_18, %c0_19, %c0_20], %17 {strides = array<i32>} : memref<8x8x96xf32, #tpu.memory_space<vmem>>, vector<8x8x96xf32>,
    %cst_21 = arith.constant 0.000000e+00 : f32
    %19 = vector.broadcast %cst_21 : f32 to vector<8x32xf32>
    %cst_22 = arith.constant 0.000000e+00 : f32
    %20 = vector.broadcast %cst_22 : f32 to vector<8x32xf32>
    %c0_23 = arith.constant 0 : index
    %c0_24 = arith.constant 0 : index
    %c0_25 = arith.constant 0 : index
    %21 = vector.load %arg13[%c0_23, %c0_24, %c0_25] : memref<8x8x96xf32, #tpu.memory_space<vmem>>, vector<1x8x96xf32>
    %22 = vector.shape_cast %21 : vector<1x8x96xf32> to vector<8x96xf32>
    %cst_26 = arith.constant dense<0.000000e+00> : vector<8x96xf32>
    %23 = tpu.matmul %19, %2, %cst_26 {dimension_numbers = #tpu.dot_dimension_numbers<[1], [0], [0], [1], [0, 0, 1, 1], [], []>} : vector<8x32xf32>, vector<32x96xf32>, vector<8x96xf32> -> vector<8x96xf32>
    %24 = vector.extract_strided_slice %22 {offsets = [0, 0], sizes = [8, 64], strides = [1, 1]} : vector<8x96xf32> to vector<8x64xf32>
    %25 = vector.extract_strided_slice %23 {offsets = [0, 0], sizes = [8, 64], strides = [1, 1]} : vector<8x96xf32> to vector<8x64xf32>
    %26 = arith.addf %24, %25 : vector<8x64xf32>
    %27 = arith.negf %26 : vector<8x64xf32>
    %28 = math.exp %27 : vector<8x64xf32>
    %cst_27 = arith.constant 1.000000e+00 : f32
    %29 = vector.broadcast %cst_27 : f32 to vector<8x64xf32>
    %30 = arith.addf %29, %28 : vector<8x64xf32>
    %31 = arith.divf %29, %30 : vector<8x64xf32>
    %32 = vector.extract_strided_slice %31 {offsets = [0, 0], sizes = [8, 32], strides = [1, 1]} : vector<8x64xf32> to vector<8x32xf32>
    %33 = vector.extract_strided_slice %31 {offsets = [0, 32], sizes = [8, 32], strides = [1, 1]} : vector<8x64xf32> to vector<8x32xf32>
    %34 = vector.extract_strided_slice %22 {offsets = [0, 64], sizes = [8, 32], strides = [1, 1]} : vector<8x96xf32> to vector<8x32xf32>
    %35 = vector.extract_strided_slice %23 {offsets = [0, 64], sizes = [8, 32], strides = [1, 1]} : vector<8x96xf32> to vector<8x32xf32>
    %36 = arith.addf %35, %8 : vector<8x32xf32>
    %37 = arith.mulf %32, %36 : vector<8x32xf32>
    %38 = arith.addf %34, %37 : vector<8x32xf32>
    %39 = math.tanh %38 : vector<8x32xf32>
    %40 = arith.subf %19, %39 : vector<8x32xf32>
    %41 = arith.mulf %33, %40 : vector<8x32xf32>
    %42 = arith.addf %39, %41 : vector<8x32xf32>
    %c1 = arith.constant 1 : index
    %c0_28 = arith.constant 0 : index
    %c0_29 = arith.constant 0 : index
    %43 = vector.load %arg13[%c1, %c0_28, %c0_29] : memref<8x8x96xf32, #tpu.memory_space<vmem>>, vector<1x8x96xf32>
    %44 = vector.shape_cast %43 : vector<1x8x96xf32> to vector<8x96xf32>
    %cst_30 = arith.constant dense<0.000000e+00> : vector<8x96xf32>
    %45 = tpu.matmul %42, %2, %cst_30 {dimension_numbers = #tpu.dot_dimension_numbers<[1], [0], [0], [1], [0, 0, 1, 1], [], []>} : vector<8x32xf32>, vector<32x96xf32>, vector<8x96xf32> -> vector<8x96xf32>
    %46 = vector.extract_strided_slice %44 {offsets = [0, 0], sizes = [8, 64], strides = [1, 1]} : vector<8x96xf32> to vector<8x64xf32>
    %47 = vector.extract_strided_slice %45 {offsets = [0, 0], sizes = [8, 64], strides = [1, 1]} : vector<8x96xf32> to vector<8x64xf32>
    %48 = arith.addf %46, %47 : vector<8x64xf32>
    %49 = arith.negf %48 : vector<8x64xf32>
    %50 = math.exp %49 : vector<8x64xf32>
    %cst_31 = arith.constant 1.000000e+00 : f32
    %51 = vector.broadcast %cst_31 : f32 to vector<8x64xf32>
    %52 = arith.addf %51, %50 : vector<8x64xf32>
    %53 = arith.divf %51, %52 : vector<8x64xf32>
    %54 = vector.extract_strided_slice %53 {offsets = [0, 0], sizes = [8, 32], strides = [1, 1]} : vector<8x64xf32> to vector<8x32xf32>
    %55 = vector.extract_strided_slice %53 {offsets = [0, 32], sizes = [8, 32], strides = [1, 1]} : vector<8x64xf32> to vector<8x32xf32>
    %56 = vector.extract_strided_slice %44 {offsets = [0, 64], sizes = [8, 32], strides = [1, 1]} : vector<8x96xf32> to vector<8x32xf32>
    %57 = vector.extract_strided_slice %45 {offsets = [0, 64], sizes = [8, 32], strides = [1, 1]} : vector<8x96xf32> to vector<8x32xf32>
    %58 = arith.addf %57, %8 : vector<8x32xf32>
    %59 = arith.mulf %54, %58 : vector<8x32xf32>
    %60 = arith.addf %56, %59 : vector<8x32xf32>
    %61 = math.tanh %60 : vector<8x32xf32>
    %62 = arith.subf %42, %61 : vector<8x32xf32>
    %63 = arith.mulf %55, %62 : vector<8x32xf32>
    %64 = arith.addf %61, %63 : vector<8x32xf32>
    %cst_32 = arith.constant dense<0.000000e+00> : vector<8x96xf32>
    %65 = tpu.matmul %42, %1, %cst_32 {dimension_numbers = #tpu.dot_dimension_numbers<[1], [0], [0], [1], [0, 0, 1, 1], [], []>} : vector<8x32xf32>, vector<32x96xf32>, vector<8x96xf32> -> vector<8x96xf32>
    %66 = vector.broadcast %5 : vector<1x96xf32> to vector<8x96xf32>
    %67 = arith.addf %65, %66 : vector<8x96xf32>
    %cst_33 = arith.constant dense<0.000000e+00> : vector<8x96xf32>
    %68 = tpu.matmul %20, %3, %cst_33 {dimension_numbers = #tpu.dot_dimension_numbers<[1], [0], [0], [1], [0, 0, 1, 1], [], []>} : vector<8x32xf32>, vector<32x96xf32>, vector<8x96xf32> -> vector<8x96xf32>
    %69 = vector.extract_strided_slice %67 {offsets = [0, 0], sizes = [8, 64], strides = [1, 1]} : vector<8x96xf32> to vector<8x64xf32>
    %70 = vector.extract_strided_slice %68 {offsets = [0, 0], sizes = [8, 64], strides = [1, 1]} : vector<8x96xf32> to vector<8x64xf32>
    %71 = arith.addf %69, %70 : vector<8x64xf32>
    %72 = arith.negf %71 : vector<8x64xf32>
    %73 = math.exp %72 : vector<8x64xf32>
    %cst_34 = arith.constant 1.000000e+00 : f32
    %74 = vector.broadcast %cst_34 : f32 to vector<8x64xf32>
    %75 = arith.addf %74, %73 : vector<8x64xf32>
    %76 = arith.divf %74, %75 : vector<8x64xf32>
    %77 = vector.extract_strided_slice %76 {offsets = [0, 0], sizes = [8, 32], strides = [1, 1]} : vector<8x64xf32> to vector<8x32xf32>
    %78 = vector.extract_strided_slice %76 {offsets = [0, 32], sizes = [8, 32], strides = [1, 1]} : vector<8x64xf32> to vector<8x32xf32>
    %79 = vector.extract_strided_slice %67 {offsets = [0, 64], sizes = [8, 32], strides = [1, 1]} : vector<8x96xf32> to vector<8x32xf32>
    %80 = vector.extract_strided_slice %68 {offsets = [0, 64], sizes = [8, 32], strides = [1, 1]} : vector<8x96xf32> to vector<8x32xf32>
    %81 = arith.addf %80, %11 : vector<8x32xf32>
    %82 = arith.mulf %77, %81 : vector<8x32xf32>
    %83 = arith.addf %79, %82 : vector<8x32xf32>
    %84 = math.tanh %83 : vector<8x32xf32>
    %85 = arith.subf %20, %84 : vector<8x32xf32>
    %86 = arith.mulf %78, %85 : vector<8x32xf32>
    %87 = arith.addf %84, %86 : vector<8x32xf32>
    %c2 = arith.constant 2 : index
    %c0_35 = arith.constant 0 : index
    %c0_36 = arith.constant 0 : index
    %88 = vector.load %arg13[%c2, %c0_35, %c0_36] : memref<8x8x96xf32, #tpu.memory_space<vmem>>, vector<1x8x96xf32>
    %89 = vector.shape_cast %88 : vector<1x8x96xf32> to vector<8x96xf32>
    %cst_37 = arith.constant dense<0.000000e+00> : vector<8x96xf32>
    %90 = tpu.matmul %64, %2, %cst_37 {dimension_numbers = #tpu.dot_dimension_numbers<[1], [0], [0], [1], [0, 0, 1, 1], [], []>} : vector<8x32xf32>, vector<32x96xf32>, vector<8x96xf32> -> vector<8x96xf32>
    %91 = vector.extract_strided_slice %89 {offsets = [0, 0], sizes = [8, 64], strides = [1, 1]} : vector<8x96xf32> to vector<8x64xf32>
    %92 = vector.extract_strided_slice %90 {offsets = [0, 0], sizes = [8, 64], strides = [1, 1]} : vector<8x96xf32> to vector<8x64xf32>
    %93 = arith.addf %91, %92 : vector<8x64xf32>
    %94 = arith.negf %93 : vector<8x64xf32>
    %95 = math.exp %94 : vector<8x64xf32>
    %cst_38 = arith.constant 1.000000e+00 : f32
    %96 = vector.broadcast %cst_38 : f32 to vector<8x64xf32>
    %97 = arith.addf %96, %95 : vector<8x64xf32>
    %98 = arith.divf %96, %97 : vector<8x64xf32>
    %99 = vector.extract_strided_slice %98 {offsets = [0, 0], sizes = [8, 32], strides = [1, 1]} : vector<8x64xf32> to vector<8x32xf32>
    %100 = vector.extract_strided_slice %98 {offsets = [0, 32], sizes = [8, 32], strides = [1, 1]} : vector<8x64xf32> to vector<8x32xf32>
    %101 = vector.extract_strided_slice %89 {offsets = [0, 64], sizes = [8, 32], strides = [1, 1]} : vector<8x96xf32> to vector<8x32xf32>
    %102 = vector.extract_strided_slice %90 {offsets = [0, 64], sizes = [8, 32], strides = [1, 1]} : vector<8x96xf32> to vector<8x32xf32>
    %103 = arith.addf %102, %8 : vector<8x32xf32>
    %104 = arith.mulf %99, %103 : vector<8x32xf32>
    %105 = arith.addf %101, %104 : vector<8x32xf32>
    %106 = math.tanh %105 : vector<8x32xf32>
    %107 = arith.subf %64, %106 : vector<8x32xf32>
    %108 = arith.mulf %100, %107 : vector<8x32xf32>
    %109 = arith.addf %106, %108 : vector<8x32xf32>
    %cst_39 = arith.constant dense<0.000000e+00> : vector<8x96xf32>
    %110 = tpu.matmul %64, %1, %cst_39 {dimension_numbers = #tpu.dot_dimension_numbers<[1], [0], [0], [1], [0, 0, 1, 1], [], []>} : vector<8x32xf32>, vector<32x96xf32>, vector<8x96xf32> -> vector<8x96xf32>
    %111 = vector.broadcast %5 : vector<1x96xf32> to vector<8x96xf32>
    %112 = arith.addf %110, %111 : vector<8x96xf32>
    %cst_40 = arith.constant dense<0.000000e+00> : vector<8x96xf32>
    %113 = tpu.matmul %87, %3, %cst_40 {dimension_numbers = #tpu.dot_dimension_numbers<[1], [0], [0], [1], [0, 0, 1, 1], [], []>} : vector<8x32xf32>, vector<32x96xf32>, vector<8x96xf32> -> vector<8x96xf32>
    %114 = vector.extract_strided_slice %112 {offsets = [0, 0], sizes = [8, 64], strides = [1, 1]} : vector<8x96xf32> to vector<8x64xf32>
    %115 = vector.extract_strided_slice %113 {offsets = [0, 0], sizes = [8, 64], strides = [1, 1]} : vector<8x96xf32> to vector<8x64xf32>
    %116 = arith.addf %114, %115 : vector<8x64xf32>
    %117 = arith.negf %116 : vector<8x64xf32>
    %118 = math.exp %117 : vector<8x64xf32>
    %cst_41 = arith.constant 1.000000e+00 : f32
    %119 = vector.broadcast %cst_41 : f32 to vector<8x64xf32>
    %120 = arith.addf %119, %118 : vector<8x64xf32>
    %121 = arith.divf %119, %120 : vector<8x64xf32>
    %122 = vector.extract_strided_slice %121 {offsets = [0, 0], sizes = [8, 32], strides = [1, 1]} : vector<8x64xf32> to vector<8x32xf32>
    %123 = vector.extract_strided_slice %121 {offsets = [0, 32], sizes = [8, 32], strides = [1, 1]} : vector<8x64xf32> to vector<8x32xf32>
    %124 = vector.extract_strided_slice %112 {offsets = [0, 64], sizes = [8, 32], strides = [1, 1]} : vector<8x96xf32> to vector<8x32xf32>
    %125 = vector.extract_strided_slice %113 {offsets = [0, 64], sizes = [8, 32], strides = [1, 1]} : vector<8x96xf32> to vector<8x32xf32>
    %126 = arith.addf %125, %11 : vector<8x32xf32>
    %127 = arith.mulf %122, %126 : vector<8x32xf32>
    %128 = arith.addf %124, %127 : vector<8x32xf32>
    %129 = math.tanh %128 : vector<8x32xf32>
    %130 = arith.subf %87, %129 : vector<8x32xf32>
    %131 = arith.mulf %123, %130 : vector<8x32xf32>
    %132 = arith.addf %129, %131 : vector<8x32xf32>
    %c3 = arith.constant 3 : index
    %c0_42 = arith.constant 0 : index
    %c0_43 = arith.constant 0 : index
    %133 = vector.load %arg13[%c3, %c0_42, %c0_43] : memref<8x8x96xf32, #tpu.memory_space<vmem>>, vector<1x8x96xf32>
    %134 = vector.shape_cast %133 : vector<1x8x96xf32> to vector<8x96xf32>
    %cst_44 = arith.constant dense<0.000000e+00> : vector<8x96xf32>
    %135 = tpu.matmul %109, %2, %cst_44 {dimension_numbers = #tpu.dot_dimension_numbers<[1], [0], [0], [1], [0, 0, 1, 1], [], []>} : vector<8x32xf32>, vector<32x96xf32>, vector<8x96xf32> -> vector<8x96xf32>
    %136 = vector.extract_strided_slice %134 {offsets = [0, 0], sizes = [8, 64], strides = [1, 1]} : vector<8x96xf32> to vector<8x64xf32>
    %137 = vector.extract_strided_slice %135 {offsets = [0, 0], sizes = [8, 64], strides = [1, 1]} : vector<8x96xf32> to vector<8x64xf32>
    %138 = arith.addf %136, %137 : vector<8x64xf32>
    %139 = arith.negf %138 : vector<8x64xf32>
    %140 = math.exp %139 : vector<8x64xf32>
    %cst_45 = arith.constant 1.000000e+00 : f32
    %141 = vector.broadcast %cst_45 : f32 to vector<8x64xf32>
    %142 = arith.addf %141, %140 : vector<8x64xf32>
    %143 = arith.divf %141, %142 : vector<8x64xf32>
    %144 = vector.extract_strided_slice %143 {offsets = [0, 0], sizes = [8, 32], strides = [1, 1]} : vector<8x64xf32> to vector<8x32xf32>
    %145 = vector.extract_strided_slice %143 {offsets = [0, 32], sizes = [8, 32], strides = [1, 1]} : vector<8x64xf32> to vector<8x32xf32>
    %146 = vector.extract_strided_slice %134 {offsets = [0, 64], sizes = [8, 32], strides = [1, 1]} : vector<8x96xf32> to vector<8x32xf32>
    %147 = vector.extract_strided_slice %135 {offsets = [0, 64], sizes = [8, 32], strides = [1, 1]} : vector<8x96xf32> to vector<8x32xf32>
    %148 = arith.addf %147, %8 : vector<8x32xf32>
    %149 = arith.mulf %144, %148 : vector<8x32xf32>
    %150 = arith.addf %146, %149 : vector<8x32xf32>
    %151 = math.tanh %150 : vector<8x32xf32>
    %152 = arith.subf %109, %151 : vector<8x32xf32>
    %153 = arith.mulf %145, %152 : vector<8x32xf32>
    %154 = arith.addf %151, %153 : vector<8x32xf32>
    %cst_46 = arith.constant dense<0.000000e+00> : vector<8x96xf32>
    %155 = tpu.matmul %109, %1, %cst_46 {dimension_numbers = #tpu.dot_dimension_numbers<[1], [0], [0], [1], [0, 0, 1, 1], [], []>} : vector<8x32xf32>, vector<32x96xf32>, vector<8x96xf32> -> vector<8x96xf32>
    %156 = vector.broadcast %5 : vector<1x96xf32> to vector<8x96xf32>
    %157 = arith.addf %155, %156 : vector<8x96xf32>
    %cst_47 = arith.constant dense<0.000000e+00> : vector<8x96xf32>
    %158 = tpu.matmul %132, %3, %cst_47 {dimension_numbers = #tpu.dot_dimension_numbers<[1], [0], [0], [1], [0, 0, 1, 1], [], []>} : vector<8x32xf32>, vector<32x96xf32>, vector<8x96xf32> -> vector<8x96xf32>
    %159 = vector.extract_strided_slice %157 {offsets = [0, 0], sizes = [8, 64], strides = [1, 1]} : vector<8x96xf32> to vector<8x64xf32>
    %160 = vector.extract_strided_slice %158 {offsets = [0, 0], sizes = [8, 64], strides = [1, 1]} : vector<8x96xf32> to vector<8x64xf32>
    %161 = arith.addf %159, %160 : vector<8x64xf32>
    %162 = arith.negf %161 : vector<8x64xf32>
    %163 = math.exp %162 : vector<8x64xf32>
    %cst_48 = arith.constant 1.000000e+00 : f32
    %164 = vector.broadcast %cst_48 : f32 to vector<8x64xf32>
    %165 = arith.addf %164, %163 : vector<8x64xf32>
    %166 = arith.divf %164, %165 : vector<8x64xf32>
    %167 = vector.extract_strided_slice %166 {offsets = [0, 0], sizes = [8, 32], strides = [1, 1]} : vector<8x64xf32> to vector<8x32xf32>
    %168 = vector.extract_strided_slice %166 {offsets = [0, 32], sizes = [8, 32], strides = [1, 1]} : vector<8x64xf32> to vector<8x32xf32>
    %169 = vector.extract_strided_slice %157 {offsets = [0, 64], sizes = [8, 32], strides = [1, 1]} : vector<8x96xf32> to vector<8x32xf32>
    %170 = vector.extract_strided_slice %158 {offsets = [0, 64], sizes = [8, 32], strides = [1, 1]} : vector<8x96xf32> to vector<8x32xf32>
    %171 = arith.addf %170, %11 : vector<8x32xf32>
    %172 = arith.mulf %167, %171 : vector<8x32xf32>
    %173 = arith.addf %169, %172 : vector<8x32xf32>
    %174 = math.tanh %173 : vector<8x32xf32>
    %175 = arith.subf %132, %174 : vector<8x32xf32>
    %176 = arith.mulf %168, %175 : vector<8x32xf32>
    %177 = arith.addf %174, %176 : vector<8x32xf32>
    %c4 = arith.constant 4 : index
    %c0_49 = arith.constant 0 : index
    %c0_50 = arith.constant 0 : index
    %178 = vector.load %arg13[%c4, %c0_49, %c0_50] : memref<8x8x96xf32, #tpu.memory_space<vmem>>, vector<1x8x96xf32>
    %179 = vector.shape_cast %178 : vector<1x8x96xf32> to vector<8x96xf32>
    %cst_51 = arith.constant dense<0.000000e+00> : vector<8x96xf32>
    %180 = tpu.matmul %154, %2, %cst_51 {dimension_numbers = #tpu.dot_dimension_numbers<[1], [0], [0], [1], [0, 0, 1, 1], [], []>} : vector<8x32xf32>, vector<32x96xf32>, vector<8x96xf32> -> vector<8x96xf32>
    %181 = vector.extract_strided_slice %179 {offsets = [0, 0], sizes = [8, 64], strides = [1, 1]} : vector<8x96xf32> to vector<8x64xf32>
    %182 = vector.extract_strided_slice %180 {offsets = [0, 0], sizes = [8, 64], strides = [1, 1]} : vector<8x96xf32> to vector<8x64xf32>
    %183 = arith.addf %181, %182 : vector<8x64xf32>
    %184 = arith.negf %183 : vector<8x64xf32>
    %185 = math.exp %184 : vector<8x64xf32>
    %cst_52 = arith.constant 1.000000e+00 : f32
    %186 = vector.broadcast %cst_52 : f32 to vector<8x64xf32>
    %187 = arith.addf %186, %185 : vector<8x64xf32>
    %188 = arith.divf %186, %187 : vector<8x64xf32>
    %189 = vector.extract_strided_slice %188 {offsets = [0, 0], sizes = [8, 32], strides = [1, 1]} : vector<8x64xf32> to vector<8x32xf32>
    %190 = vector.extract_strided_slice %188 {offsets = [0, 32], sizes = [8, 32], strides = [1, 1]} : vector<8x64xf32> to vector<8x32xf32>
    %191 = vector.extract_strided_slice %179 {offsets = [0, 64], sizes = [8, 32], strides = [1, 1]} : vector<8x96xf32> to vector<8x32xf32>
    %192 = vector.extract_strided_slice %180 {offsets = [0, 64], sizes = [8, 32], strides = [1, 1]} : vector<8x96xf32> to vector<8x32xf32>
    %193 = arith.addf %192, %8 : vector<8x32xf32>
    %194 = arith.mulf %189, %193 : vector<8x32xf32>
    %195 = arith.addf %191, %194 : vector<8x32xf32>
    %196 = math.tanh %195 : vector<8x32xf32>
    %197 = arith.subf %154, %196 : vector<8x32xf32>
    %198 = arith.mulf %190, %197 : vector<8x32xf32>
    %199 = arith.addf %196, %198 : vector<8x32xf32>
    %cst_53 = arith.constant dense<0.000000e+00> : vector<8x96xf32>
    %200 = tpu.matmul %154, %1, %cst_53 {dimension_numbers = #tpu.dot_dimension_numbers<[1], [0], [0], [1], [0, 0, 1, 1], [], []>} : vector<8x32xf32>, vector<32x96xf32>, vector<8x96xf32> -> vector<8x96xf32>
    %201 = vector.broadcast %5 : vector<1x96xf32> to vector<8x96xf32>
    %202 = arith.addf %200, %201 : vector<8x96xf32>
    %cst_54 = arith.constant dense<0.000000e+00> : vector<8x96xf32>
    %203 = tpu.matmul %177, %3, %cst_54 {dimension_numbers = #tpu.dot_dimension_numbers<[1], [0], [0], [1], [0, 0, 1, 1], [], []>} : vector<8x32xf32>, vector<32x96xf32>, vector<8x96xf32> -> vector<8x96xf32>
    %204 = vector.extract_strided_slice %202 {offsets = [0, 0], sizes = [8, 64], strides = [1, 1]} : vector<8x96xf32> to vector<8x64xf32>
    %205 = vector.extract_strided_slice %203 {offsets = [0, 0], sizes = [8, 64], strides = [1, 1]} : vector<8x96xf32> to vector<8x64xf32>
    %206 = arith.addf %204, %205 : vector<8x64xf32>
    %207 = arith.negf %206 : vector<8x64xf32>
    %208 = math.exp %207 : vector<8x64xf32>
    %cst_55 = arith.constant 1.000000e+00 : f32
    %209 = vector.broadcast %cst_55 : f32 to vector<8x64xf32>
    %210 = arith.addf %209, %208 : vector<8x64xf32>
    %211 = arith.divf %209, %210 : vector<8x64xf32>
    %212 = vector.extract_strided_slice %211 {offsets = [0, 0], sizes = [8, 32], strides = [1, 1]} : vector<8x64xf32> to vector<8x32xf32>
    %213 = vector.extract_strided_slice %211 {offsets = [0, 32], sizes = [8, 32], strides = [1, 1]} : vector<8x64xf32> to vector<8x32xf32>
    %214 = vector.extract_strided_slice %202 {offsets = [0, 64], sizes = [8, 32], strides = [1, 1]} : vector<8x96xf32> to vector<8x32xf32>
    %215 = vector.extract_strided_slice %203 {offsets = [0, 64], sizes = [8, 32], strides = [1, 1]} : vector<8x96xf32> to vector<8x32xf32>
    %216 = arith.addf %215, %11 : vector<8x32xf32>
    %217 = arith.mulf %212, %216 : vector<8x32xf32>
    %218 = arith.addf %214, %217 : vector<8x32xf32>
    %219 = math.tanh %218 : vector<8x32xf32>
    %220 = arith.subf %177, %219 : vector<8x32xf32>
    %221 = arith.mulf %213, %220 : vector<8x32xf32>
    %222 = arith.addf %219, %221 : vector<8x32xf32>
    %c5 = arith.constant 5 : index
    %c0_56 = arith.constant 0 : index
    %c0_57 = arith.constant 0 : index
    %223 = vector.load %arg13[%c5, %c0_56, %c0_57] : memref<8x8x96xf32, #tpu.memory_space<vmem>>, vector<1x8x96xf32>
    %224 = vector.shape_cast %223 : vector<1x8x96xf32> to vector<8x96xf32>
    %cst_58 = arith.constant dense<0.000000e+00> : vector<8x96xf32>
    %225 = tpu.matmul %199, %2, %cst_58 {dimension_numbers = #tpu.dot_dimension_numbers<[1], [0], [0], [1], [0, 0, 1, 1], [], []>} : vector<8x32xf32>, vector<32x96xf32>, vector<8x96xf32> -> vector<8x96xf32>
    %226 = vector.extract_strided_slice %224 {offsets = [0, 0], sizes = [8, 64], strides = [1, 1]} : vector<8x96xf32> to vector<8x64xf32>
    %227 = vector.extract_strided_slice %225 {offsets = [0, 0], sizes = [8, 64], strides = [1, 1]} : vector<8x96xf32> to vector<8x64xf32>
    %228 = arith.addf %226, %227 : vector<8x64xf32>
    %229 = arith.negf %228 : vector<8x64xf32>
    %230 = math.exp %229 : vector<8x64xf32>
    %cst_59 = arith.constant 1.000000e+00 : f32
    %231 = vector.broadcast %cst_59 : f32 to vector<8x64xf32>
    %232 = arith.addf %231, %230 : vector<8x64xf32>
    %233 = arith.divf %231, %232 : vector<8x64xf32>
    %234 = vector.extract_strided_slice %233 {offsets = [0, 0], sizes = [8, 32], strides = [1, 1]} : vector<8x64xf32> to vector<8x32xf32>
    %235 = vector.extract_strided_slice %233 {offsets = [0, 32], sizes = [8, 32], strides = [1, 1]} : vector<8x64xf32> to vector<8x32xf32>
    %236 = vector.extract_strided_slice %224 {offsets = [0, 64], sizes = [8, 32], strides = [1, 1]} : vector<8x96xf32> to vector<8x32xf32>
    %237 = vector.extract_strided_slice %225 {offsets = [0, 64], sizes = [8, 32], strides = [1, 1]} : vector<8x96xf32> to vector<8x32xf32>
    %238 = arith.addf %237, %8 : vector<8x32xf32>
    %239 = arith.mulf %234, %238 : vector<8x32xf32>
    %240 = arith.addf %236, %239 : vector<8x32xf32>
    %241 = math.tanh %240 : vector<8x32xf32>
    %242 = arith.subf %199, %241 : vector<8x32xf32>
    %243 = arith.mulf %235, %242 : vector<8x32xf32>
    %244 = arith.addf %241, %243 : vector<8x32xf32>
    %cst_60 = arith.constant dense<0.000000e+00> : vector<8x96xf32>
    %245 = tpu.matmul %199, %1, %cst_60 {dimension_numbers = #tpu.dot_dimension_numbers<[1], [0], [0], [1], [0, 0, 1, 1], [], []>} : vector<8x32xf32>, vector<32x96xf32>, vector<8x96xf32> -> vector<8x96xf32>
    %246 = vector.broadcast %5 : vector<1x96xf32> to vector<8x96xf32>
    %247 = arith.addf %245, %246 : vector<8x96xf32>
    %cst_61 = arith.constant dense<0.000000e+00> : vector<8x96xf32>
    %248 = tpu.matmul %222, %3, %cst_61 {dimension_numbers = #tpu.dot_dimension_numbers<[1], [0], [0], [1], [0, 0, 1, 1], [], []>} : vector<8x32xf32>, vector<32x96xf32>, vector<8x96xf32> -> vector<8x96xf32>
    %249 = vector.extract_strided_slice %247 {offsets = [0, 0], sizes = [8, 64], strides = [1, 1]} : vector<8x96xf32> to vector<8x64xf32>
    %250 = vector.extract_strided_slice %248 {offsets = [0, 0], sizes = [8, 64], strides = [1, 1]} : vector<8x96xf32> to vector<8x64xf32>
    %251 = arith.addf %249, %250 : vector<8x64xf32>
    %252 = arith.negf %251 : vector<8x64xf32>
    %253 = math.exp %252 : vector<8x64xf32>
    %cst_62 = arith.constant 1.000000e+00 : f32
    %254 = vector.broadcast %cst_62 : f32 to vector<8x64xf32>
    %255 = arith.addf %254, %253 : vector<8x64xf32>
    %256 = arith.divf %254, %255 : vector<8x64xf32>
    %257 = vector.extract_strided_slice %256 {offsets = [0, 0], sizes = [8, 32], strides = [1, 1]} : vector<8x64xf32> to vector<8x32xf32>
    %258 = vector.extract_strided_slice %256 {offsets = [0, 32], sizes = [8, 32], strides = [1, 1]} : vector<8x64xf32> to vector<8x32xf32>
    %259 = vector.extract_strided_slice %247 {offsets = [0, 64], sizes = [8, 32], strides = [1, 1]} : vector<8x96xf32> to vector<8x32xf32>
    %260 = vector.extract_strided_slice %248 {offsets = [0, 64], sizes = [8, 32], strides = [1, 1]} : vector<8x96xf32> to vector<8x32xf32>
    %261 = arith.addf %260, %11 : vector<8x32xf32>
    %262 = arith.mulf %257, %261 : vector<8x32xf32>
    %263 = arith.addf %259, %262 : vector<8x32xf32>
    %264 = math.tanh %263 : vector<8x32xf32>
    %265 = arith.subf %222, %264 : vector<8x32xf32>
    %266 = arith.mulf %258, %265 : vector<8x32xf32>
    %267 = arith.addf %264, %266 : vector<8x32xf32>
    %c6 = arith.constant 6 : index
    %c0_63 = arith.constant 0 : index
    %c0_64 = arith.constant 0 : index
    %268 = vector.load %arg13[%c6, %c0_63, %c0_64] : memref<8x8x96xf32, #tpu.memory_space<vmem>>, vector<1x8x96xf32>
    %269 = vector.shape_cast %268 : vector<1x8x96xf32> to vector<8x96xf32>
    %cst_65 = arith.constant dense<0.000000e+00> : vector<8x96xf32>
    %270 = tpu.matmul %244, %2, %cst_65 {dimension_numbers = #tpu.dot_dimension_numbers<[1], [0], [0], [1], [0, 0, 1, 1], [], []>} : vector<8x32xf32>, vector<32x96xf32>, vector<8x96xf32> -> vector<8x96xf32>
    %271 = vector.extract_strided_slice %269 {offsets = [0, 0], sizes = [8, 64], strides = [1, 1]} : vector<8x96xf32> to vector<8x64xf32>
    %272 = vector.extract_strided_slice %270 {offsets = [0, 0], sizes = [8, 64], strides = [1, 1]} : vector<8x96xf32> to vector<8x64xf32>
    %273 = arith.addf %271, %272 : vector<8x64xf32>
    %274 = arith.negf %273 : vector<8x64xf32>
    %275 = math.exp %274 : vector<8x64xf32>
    %cst_66 = arith.constant 1.000000e+00 : f32
    %276 = vector.broadcast %cst_66 : f32 to vector<8x64xf32>
    %277 = arith.addf %276, %275 : vector<8x64xf32>
    %278 = arith.divf %276, %277 : vector<8x64xf32>
    %279 = vector.extract_strided_slice %278 {offsets = [0, 0], sizes = [8, 32], strides = [1, 1]} : vector<8x64xf32> to vector<8x32xf32>
    %280 = vector.extract_strided_slice %278 {offsets = [0, 32], sizes = [8, 32], strides = [1, 1]} : vector<8x64xf32> to vector<8x32xf32>
    %281 = vector.extract_strided_slice %269 {offsets = [0, 64], sizes = [8, 32], strides = [1, 1]} : vector<8x96xf32> to vector<8x32xf32>
    %282 = vector.extract_strided_slice %270 {offsets = [0, 64], sizes = [8, 32], strides = [1, 1]} : vector<8x96xf32> to vector<8x32xf32>
    %283 = arith.addf %282, %8 : vector<8x32xf32>
    %284 = arith.mulf %279, %283 : vector<8x32xf32>
    %285 = arith.addf %281, %284 : vector<8x32xf32>
    %286 = math.tanh %285 : vector<8x32xf32>
    %287 = arith.subf %244, %286 : vector<8x32xf32>
    %288 = arith.mulf %280, %287 : vector<8x32xf32>
    %289 = arith.addf %286, %288 : vector<8x32xf32>
    %cst_67 = arith.constant dense<0.000000e+00> : vector<8x96xf32>
    %290 = tpu.matmul %244, %1, %cst_67 {dimension_numbers = #tpu.dot_dimension_numbers<[1], [0], [0], [1], [0, 0, 1, 1], [], []>} : vector<8x32xf32>, vector<32x96xf32>, vector<8x96xf32> -> vector<8x96xf32>
    %291 = vector.broadcast %5 : vector<1x96xf32> to vector<8x96xf32>
    %292 = arith.addf %290, %291 : vector<8x96xf32>
    %cst_68 = arith.constant dense<0.000000e+00> : vector<8x96xf32>
    %293 = tpu.matmul %267, %3, %cst_68 {dimension_numbers = #tpu.dot_dimension_numbers<[1], [0], [0], [1], [0, 0, 1, 1], [], []>} : vector<8x32xf32>, vector<32x96xf32>, vector<8x96xf32> -> vector<8x96xf32>
    %294 = vector.extract_strided_slice %292 {offsets = [0, 0], sizes = [8, 64], strides = [1, 1]} : vector<8x96xf32> to vector<8x64xf32>
    %295 = vector.extract_strided_slice %293 {offsets = [0, 0], sizes = [8, 64], strides = [1, 1]} : vector<8x96xf32> to vector<8x64xf32>
    %296 = arith.addf %294, %295 : vector<8x64xf32>
    %297 = arith.negf %296 : vector<8x64xf32>
    %298 = math.exp %297 : vector<8x64xf32>
    %cst_69 = arith.constant 1.000000e+00 : f32
    %299 = vector.broadcast %cst_69 : f32 to vector<8x64xf32>
    %300 = arith.addf %299, %298 : vector<8x64xf32>
    %301 = arith.divf %299, %300 : vector<8x64xf32>
    %302 = vector.extract_strided_slice %301 {offsets = [0, 0], sizes = [8, 32], strides = [1, 1]} : vector<8x64xf32> to vector<8x32xf32>
    %303 = vector.extract_strided_slice %301 {offsets = [0, 32], sizes = [8, 32], strides = [1, 1]} : vector<8x64xf32> to vector<8x32xf32>
    %304 = vector.extract_strided_slice %292 {offsets = [0, 64], sizes = [8, 32], strides = [1, 1]} : vector<8x96xf32> to vector<8x32xf32>
    %305 = vector.extract_strided_slice %293 {offsets = [0, 64], sizes = [8, 32], strides = [1, 1]} : vector<8x96xf32> to vector<8x32xf32>
    %306 = arith.addf %305, %11 : vector<8x32xf32>
    %307 = arith.mulf %302, %306 : vector<8x32xf32>
    %308 = arith.addf %304, %307 : vector<8x32xf32>
    %309 = math.tanh %308 : vector<8x32xf32>
    %310 = arith.subf %267, %309 : vector<8x32xf32>
    %311 = arith.mulf %303, %310 : vector<8x32xf32>
    %312 = arith.addf %309, %311 : vector<8x32xf32>
    %c7 = arith.constant 7 : index
    %c0_70 = arith.constant 0 : index
    %c0_71 = arith.constant 0 : index
    %313 = vector.load %arg13[%c7, %c0_70, %c0_71] : memref<8x8x96xf32, #tpu.memory_space<vmem>>, vector<1x8x96xf32>
    %314 = vector.shape_cast %313 : vector<1x8x96xf32> to vector<8x96xf32>
    %cst_72 = arith.constant dense<0.000000e+00> : vector<8x96xf32>
    %315 = tpu.matmul %289, %2, %cst_72 {dimension_numbers = #tpu.dot_dimension_numbers<[1], [0], [0], [1], [0, 0, 1, 1], [], []>} : vector<8x32xf32>, vector<32x96xf32>, vector<8x96xf32> -> vector<8x96xf32>
    %316 = vector.extract_strided_slice %314 {offsets = [0, 0], sizes = [8, 64], strides = [1, 1]} : vector<8x96xf32> to vector<8x64xf32>
    %317 = vector.extract_strided_slice %315 {offsets = [0, 0], sizes = [8, 64], strides = [1, 1]} : vector<8x96xf32> to vector<8x64xf32>
    %318 = arith.addf %316, %317 : vector<8x64xf32>
    %319 = arith.negf %318 : vector<8x64xf32>
    %320 = math.exp %319 : vector<8x64xf32>
    %cst_73 = arith.constant 1.000000e+00 : f32
    %321 = vector.broadcast %cst_73 : f32 to vector<8x64xf32>
    %322 = arith.addf %321, %320 : vector<8x64xf32>
    %323 = arith.divf %321, %322 : vector<8x64xf32>
    %324 = vector.extract_strided_slice %323 {offsets = [0, 0], sizes = [8, 32], strides = [1, 1]} : vector<8x64xf32> to vector<8x32xf32>
    %325 = vector.extract_strided_slice %323 {offsets = [0, 32], sizes = [8, 32], strides = [1, 1]} : vector<8x64xf32> to vector<8x32xf32>
    %326 = vector.extract_strided_slice %314 {offsets = [0, 64], sizes = [8, 32], strides = [1, 1]} : vector<8x96xf32> to vector<8x32xf32>
    %327 = vector.extract_strided_slice %315 {offsets = [0, 64], sizes = [8, 32], strides = [1, 1]} : vector<8x96xf32> to vector<8x32xf32>
    %328 = arith.addf %327, %8 : vector<8x32xf32>
    %329 = arith.mulf %324, %328 : vector<8x32xf32>
    %330 = arith.addf %326, %329 : vector<8x32xf32>
    %331 = math.tanh %330 : vector<8x32xf32>
    %332 = arith.subf %289, %331 : vector<8x32xf32>
    %333 = arith.mulf %325, %332 : vector<8x32xf32>
    %334 = arith.addf %331, %333 : vector<8x32xf32>
    %cst_74 = arith.constant dense<0.000000e+00> : vector<8x96xf32>
    %335 = tpu.matmul %289, %1, %cst_74 {dimension_numbers = #tpu.dot_dimension_numbers<[1], [0], [0], [1], [0, 0, 1, 1], [], []>} : vector<8x32xf32>, vector<32x96xf32>, vector<8x96xf32> -> vector<8x96xf32>
    %336 = vector.broadcast %5 : vector<1x96xf32> to vector<8x96xf32>
    %337 = arith.addf %335, %336 : vector<8x96xf32>
    %cst_75 = arith.constant dense<0.000000e+00> : vector<8x96xf32>
    %338 = tpu.matmul %312, %3, %cst_75 {dimension_numbers = #tpu.dot_dimension_numbers<[1], [0], [0], [1], [0, 0, 1, 1], [], []>} : vector<8x32xf32>, vector<32x96xf32>, vector<8x96xf32> -> vector<8x96xf32>
    %339 = vector.extract_strided_slice %337 {offsets = [0, 0], sizes = [8, 64], strides = [1, 1]} : vector<8x96xf32> to vector<8x64xf32>
    %340 = vector.extract_strided_slice %338 {offsets = [0, 0], sizes = [8, 64], strides = [1, 1]} : vector<8x96xf32> to vector<8x64xf32>
    %341 = arith.addf %339, %340 : vector<8x64xf32>
    %342 = arith.negf %341 : vector<8x64xf32>
    %343 = math.exp %342 : vector<8x64xf32>
    %cst_76 = arith.constant 1.000000e+00 : f32
    %344 = vector.broadcast %cst_76 : f32 to vector<8x64xf32>
    %345 = arith.addf %344, %343 : vector<8x64xf32>
    %346 = arith.divf %344, %345 : vector<8x64xf32>
    %347 = vector.extract_strided_slice %346 {offsets = [0, 0], sizes = [8, 32], strides = [1, 1]} : vector<8x64xf32> to vector<8x32xf32>
    %348 = vector.extract_strided_slice %346 {offsets = [0, 32], sizes = [8, 32], strides = [1, 1]} : vector<8x64xf32> to vector<8x32xf32>
    %349 = vector.extract_strided_slice %337 {offsets = [0, 64], sizes = [8, 32], strides = [1, 1]} : vector<8x96xf32> to vector<8x32xf32>
    %350 = vector.extract_strided_slice %338 {offsets = [0, 64], sizes = [8, 32], strides = [1, 1]} : vector<8x96xf32> to vector<8x32xf32>
    %351 = arith.addf %350, %11 : vector<8x32xf32>
    %352 = arith.mulf %347, %351 : vector<8x32xf32>
    %353 = arith.addf %349, %352 : vector<8x32xf32>
    %354 = math.tanh %353 : vector<8x32xf32>
    %355 = arith.subf %312, %354 : vector<8x32xf32>
    %356 = arith.mulf %348, %355 : vector<8x32xf32>
    %357 = arith.addf %354, %356 : vector<8x32xf32>
    %cst_77 = arith.constant dense<0.000000e+00> : vector<8x96xf32>
    %358 = tpu.matmul %334, %1, %cst_77 {dimension_numbers = #tpu.dot_dimension_numbers<[1], [0], [0], [1], [0, 0, 1, 1], [], []>} : vector<8x32xf32>, vector<32x96xf32>, vector<8x96xf32> -> vector<8x96xf32>
    %359 = vector.broadcast %5 : vector<1x96xf32> to vector<8x96xf32>
    %360 = arith.addf %358, %359 : vector<8x96xf32>
    %cst_78 = arith.constant dense<0.000000e+00> : vector<8x96xf32>
    %361 = tpu.matmul %357, %3, %cst_78 {dimension_numbers = #tpu.dot_dimension_numbers<[1], [0], [0], [1], [0, 0, 1, 1], [], []>} : vector<8x32xf32>, vector<32x96xf32>, vector<8x96xf32> -> vector<8x96xf32>
    %362 = vector.extract_strided_slice %360 {offsets = [0, 0], sizes = [8, 64], strides = [1, 1]} : vector<8x96xf32> to vector<8x64xf32>
    %363 = vector.extract_strided_slice %361 {offsets = [0, 0], sizes = [8, 64], strides = [1, 1]} : vector<8x96xf32> to vector<8x64xf32>
    %364 = arith.addf %362, %363 : vector<8x64xf32>
    %365 = arith.negf %364 : vector<8x64xf32>
    %366 = math.exp %365 : vector<8x64xf32>
    %cst_79 = arith.constant 1.000000e+00 : f32
    %367 = vector.broadcast %cst_79 : f32 to vector<8x64xf32>
    %368 = arith.addf %367, %366 : vector<8x64xf32>
    %369 = arith.divf %367, %368 : vector<8x64xf32>
    %370 = vector.extract_strided_slice %369 {offsets = [0, 0], sizes = [8, 32], strides = [1, 1]} : vector<8x64xf32> to vector<8x32xf32>
    %371 = vector.extract_strided_slice %369 {offsets = [0, 32], sizes = [8, 32], strides = [1, 1]} : vector<8x64xf32> to vector<8x32xf32>
    %372 = vector.extract_strided_slice %360 {offsets = [0, 64], sizes = [8, 32], strides = [1, 1]} : vector<8x96xf32> to vector<8x32xf32>
    %373 = vector.extract_strided_slice %361 {offsets = [0, 64], sizes = [8, 32], strides = [1, 1]} : vector<8x96xf32> to vector<8x32xf32>
    %374 = arith.addf %373, %11 : vector<8x32xf32>
    %375 = arith.mulf %370, %374 : vector<8x32xf32>
    %376 = arith.addf %372, %375 : vector<8x32xf32>
    %377 = math.tanh %376 : vector<8x32xf32>
    %378 = arith.subf %357, %377 : vector<8x32xf32>
    %379 = arith.mulf %371, %378 : vector<8x32xf32>
    %380 = arith.addf %377, %379 : vector<8x32xf32>
    %c0_80 = arith.constant 0 : index
    %c0_81 = arith.constant 0 : index
    %381 = vector.load %arg10[%c0_80, %c0_81] : memref<32x10xf32, #tpu.memory_space<vmem>>, vector<32x10xf32>
    %cst_82 = arith.constant dense<0.000000e+00> : vector<8x10xf32>
    %382 = tpu.matmul %380, %381, %cst_82 {dimension_numbers = #tpu.dot_dimension_numbers<[1], [0], [0], [1], [0, 0, 1, 1], [], []>} : vector<8x32xf32>, vector<32x10xf32>, vector<8x10xf32> -> vector<8x10xf32>
    %c0_83 = arith.constant 0 : index
    %c0_84 = arith.constant 0 : index
    %383 = vector.load %arg11[%c0_83, %c0_84] : memref<1x10xf32, #tpu.memory_space<vmem>>, vector<1x10xf32>
    %384 = vector.broadcast %383 : vector<1x10xf32> to vector<8x10xf32>
    %385 = arith.addf %382, %384 : vector<8x10xf32>
    %c0_85 = arith.constant 0 : index
    %c0_86 = arith.constant 0 : index
    %386 = vector.load %arg12[%c0_85, %c0_86] : memref<8x10xf32, #tpu.memory_space<vmem>>, vector<8x10xf32>
    tpu.vector_store %arg12[%c0_85, %c0_86], %385 {strides = array<i32>} : memref<8x10xf32, #tpu.memory_space<vmem>>, vector<8x10xf32>,
    return
  }
  func.func @transform_0(%arg0: i32) -> (i32, i32, i32) {
    %c0_i32 = arith.constant 0 : i32
    %c0_i32_0 = arith.constant 0 : i32
    %c0_i32_1 = arith.constant 0 : i32
    return %c0_i32, %arg0, %c0_i32_0 : i32, i32, i32
  }
  func.func @transform_1(%arg0: i32) -> (i32, i32) {
    %c0_i32 = arith.constant 0 : i32
    %c0_i32_0 = arith.constant 0 : i32
    %c0_i32_1 = arith.constant 0 : i32
    return %c0_i32, %c0_i32_0 : i32, i32
  }
  func.func @transform_2(%arg0: i32) -> (i32, i32) {
    %c0_i32 = arith.constant 0 : i32
    %c0_i32_0 = arith.constant 0 : i32
    %c0_i32_1 = arith.constant 0 : i32
    return %c0_i32, %c0_i32_0 : i32, i32
  }
  func.func @transform_3(%arg0: i32) -> (i32, i32) {
    %c0_i32 = arith.constant 0 : i32
    %c0_i32_0 = arith.constant 0 : i32
    %c0_i32_1 = arith.constant 0 : i32
    return %c0_i32, %c0_i32_0 : i32, i32
  }
  func.func @transform_4(%arg0: i32) -> (i32, i32) {
    %c0_i32 = arith.constant 0 : i32
    %c0_i32_0 = arith.constant 0 : i32
    %c0_i32_1 = arith.constant 0 : i32
    return %c0_i32, %c0_i32_0 : i32, i32
  }
  func.func @transform_5(%arg0: i32) -> (i32, i32) {
    %c0_i32 = arith.constant 0 : i32
    %c0_i32_0 = arith.constant 0 : i32
    %c0_i32_1 = arith.constant 0 : i32
    return %c0_i32, %c0_i32_0 : i32, i32
  }
  func.func @transform_6(%arg0: i32) -> (i32, i32) {
    %c0_i32 = arith.constant 0 : i32
    %c0_i32_0 = arith.constant 0 : i32
    %c0_i32_1 = arith.constant 0 : i32
    return %c0_i32, %c0_i32_0 : i32, i32
  }
  func.func @transform_7(%arg0: i32) -> (i32, i32) {
    %c0_i32 = arith.constant 0 : i32
    %c0_i32_0 = arith.constant 0 : i32
    %c0_i32_1 = arith.constant 0 : i32
    return %c0_i32, %c0_i32_0 : i32, i32
  }
  func.func @transform_8(%arg0: i32) -> (i32, i32) {
    %c0_i32 = arith.constant 0 : i32
    %c0_i32_0 = arith.constant 0 : i32
    %c0_i32_1 = arith.constant 0 : i32
    return %c0_i32, %c0_i32_0 : i32, i32
  }
  func.func @transform_9(%arg0: i32) -> (i32, i32) {
    %c0_i32 = arith.constant 0 : i32
    %c0_i32_0 = arith.constant 0 : i32
    %c0_i32_1 = arith.constant 0 : i32
    return %c0_i32, %c0_i32_0 : i32, i32
  }
  func.func @transform_10(%arg0: i32) -> (i32, i32) {
    %c0_i32 = arith.constant 0 : i32
    %c0_i32_0 = arith.constant 0 : i32
    %c0_i32_1 = arith.constant 0 : i32
    return %c0_i32, %c0_i32_0 : i32, i32
  }
  func.func @transform_11(%arg0: i32) -> (i32, i32) {
    %c0_i32 = arith.constant 0 : i32
    %c0_i32_0 = arith.constant 0 : i32
    return %arg0, %c0_i32 : i32, i32
  }
}

</mosaic_0001>

<llo_original>
// kernel: tpu_custom_call.1
$region0: #{tpu_custom_call.1}
  #allocation0 [shape = 'u32[]', space=smem, size = 0x4, offset = 0x4, fixed_abs, tag = 'smem constant byte address 0x4 - core index']
  #allocation1 [shape = 'u32[144,128]{1,0:T(1,128)}', space=vmem, size = 0x12000, scoped, tag = 'internal scratch']
  #allocation2 [shape = 'f32[8,8,96]{2,1,0:T(8,128)}', space=vmem, size = 0x8000, scoped, tag = 'scratch operand']
  %s0 = inlined_call_operand.hbm [shape: f32[8,8,16], index: 0, kind: input, shape index: {}]
  %s1 = inlined_call_operand.vmem [shape: f32[16,96], index: 1, kind: input, shape index: {}]
  %s2 = inlined_call_operand.vmem [shape: f32[32,96], index: 2, kind: input, shape index: {}]
  %s3 = inlined_call_operand.hbm [shape: f32[1,96], index: 3, kind: input, shape index: {}]
  %s4 = inlined_call_operand.hbm [shape: f32[1,32], index: 4, kind: input, shape index: {}]
  %s5 = inlined_call_operand.hbm [shape: f32[32,96], index: 5, kind: input, shape index: {}]
  %s6 = inlined_call_operand.hbm [shape: f32[32,96], index: 6, kind: input, shape index: {}]
  %s7 = inlined_call_operand.hbm [shape: f32[1,96], index: 7, kind: input, shape index: {}]
  %s8 = inlined_call_operand.hbm [shape: f32[1,32], index: 8, kind: input, shape index: {}]
  %s9 = inlined_call_operand.vmem [shape: f32[32,10], index: 9, kind: input, shape index: {}]
  %s10 = inlined_call_operand.vmem [shape: f32[1,10], index: 10, kind: input, shape index: {}]
  %s11 = inlined_call_operand.hbm [shape: f32[8,10], index: 11, kind: output, shape index: {}]
  %s12 = sld [smem:[#allocation0]]
  $region82: #{tpu_custom_call.1} parent=0
    _
  %s14 = ssub.s32 1, %s12
  %s15 = scalar_select 0, %s14, %s12
  $region1: #{tpu_custom_call.1} parent=0
    #allocation3 [shape = 'u8[32768]{0}', space=vmem, size = 0x8000, scoped, tag = 'input window, operand 0, single buffered']
    #allocation4 [shape = 's32[1]{0}', space=sflag, size = 0x4, scoped, tag = 'scoped memory for tpu_custom_call.1']
    #allocation5 [shape = 's32[1]{0}', space=sflag, size = 0x4, scoped, tag = 'scoped memory for tpu_custom_call.1']
    #allocation6 [shape = 'u8[512]{0}', space=vmem, size = 0x400, scoped, tag = 'input window, operand 3, single buffered']
    #allocation7 [shape = 's32[1]{0}', space=sflag, size = 0x4, scoped, tag = 'scoped memory for tpu_custom_call.1']
    #allocation8 [shape = 'u8[512]{0}', space=vmem, size = 0x400, scoped, tag = 'input window, operand 4, single buffered']
    #allocation9 [shape = 'u8[16384]{0}', space=vmem, size = 0x4000, scoped, tag = 'input window, operand 5, single buffered']
    #allocation10 [shape = 's32[1]{0}', space=sflag, size = 0x4, scoped, tag = 'scoped memory for tpu_custom_call.1']
    #allocation11 [shape = 'u8[16384]{0}', space=vmem, size = 0x4000, scoped, tag = 'input window, operand 6, single buffered']
    #allocation12 [shape = 'u8[512]{0}', space=vmem, size = 0x400, scoped, tag = 'input window, operand 7, single buffered']
    #allocation13 [shape = 's32[1]{0}', space=sflag, size = 0x4, scoped, tag = 'scoped memory for tpu_custom_call.1']
    #allocation14 [shape = 'u8[512]{0}', space=vmem, size = 0x400, scoped, tag = 'input window, operand 8, single buffered']
    #allocation15 [shape = 'u8[4096]{0}', space=vmem, size = 0x1000, scoped, tag = 'output window, operand 0, single buffered']
    %16 = vsyncpa [#allocation4], 0
    %17 = vsyncpa [#allocation7], 0
    %18 = vsyncpa [#allocation10], 0
    %19 = vsyncpa [#allocation13], 0
    %20 = vsyncpa [#allocation5], 0
    // Predicated region
    $region2: #{tpu_custom_call.1} parent=1 // pred_check
      _
    $region3: #{tpu_custom_call.1} parent=1 // pred_check_branch
      %22 = sbr.rel (0) target = $region5
    $region4: #{tpu_custom_call.1} parent=1 // pred_region
      %s24 = ssub.s32 1024, 1024
      %25 = vsyncadd [#allocation4], %s24
      %s26 = sshll.u32 [#allocation3], 4
      %s27 = int_to_ptr.vmem [resolvable:$true] %s26
      %32 = dma.hbm_to_vmem [thread:$0]  %s0, 1024, %s27, [#allocation4], 128, 128, 8
    $region5: #{tpu_custom_call.1} parent=1 // pred_fallthru
      _
    // Predicated region
    $region6: #{tpu_custom_call.1} parent=1 // pred_check
      _
    $region7: #{tpu_custom_call.1} parent=1 // pred_check_branch
      %34 = sbr.rel (0) target = $region9
    $region8: #{tpu_custom_call.1} parent=1 // pred_region
      _
    $region9: #{tpu_custom_call.1} parent=1 // pred_fallthru
      _
    // Predicated region
    $region10: #{tpu_custom_call.1} parent=1 // pred_check
      _
    $region11: #{tpu_custom_call.1} parent=1 // pred_check_branch
      %36 = sbr.rel (0) target = $region13
    $region12: #{tpu_custom_call.1} parent=1 // pred_region
      _
    $region13: #{tpu_custom_call.1} parent=1 // pred_fallthru
      _
    // Predicated region
    $region14: #{tpu_custom_call.1} parent=1 // pred_check
      _
    $region15: #{tpu_custom_call.1} parent=1 // pred_check_branch
      %38 = sbr.rel (0) target = $region17
    $region16: #{tpu_custom_call.1} parent=1 // pred_region
      %s40 = ssub.s32 16, 16
      %41 = vsyncadd [#allocation7], %s40
      %s43 = sshll.u32 [#allocation6], 4
      %s44 = int_to_ptr.vmem [resolvable:$true] %s43
      %46 = dma.hbm_to_vmem [thread:$0]  %s3, 16, %s44, [#allocation7]
    $region17: #{tpu_custom_call.1} parent=1 // pred_fallthru
      _
    // Predicated region
    $region18: #{tpu_custom_call.1} parent=1 // pred_check
      _
    $region19: #{tpu_custom_call.1} parent=1 // pred_check_branch
      %48 = sbr.rel (0) target = $region21
    $region20: #{tpu_custom_call.1} parent=1 // pred_region
      %s50 = ssub.s32 16, 16
      %51 = vsyncadd [#allocation7], %s50
      %s53 = sshll.u32 [#allocation8], 4
      %s54 = int_to_ptr.vmem [resolvable:$true] %s53
      %56 = dma.hbm_to_vmem [thread:$0]  %s4, 16, %s54, [#allocation7]
    $region21: #{tpu_custom_call.1} parent=1 // pred_fallthru
      _
    // Predicated region
    $region22: #{tpu_custom_call.1} parent=1 // pred_check
      _
    $region23: #{tpu_custom_call.1} parent=1 // pred_check_branch
      %58 = sbr.rel (0) target = $region25
    $region24: #{tpu_custom_call.1} parent=1 // pred_region
      %s60 = ssub.s32 512, 512
      %61 = vsyncadd [#allocation10], %s60
      %s62 = sshll.u32 [#allocation9], 4
      %s63 = int_to_ptr.vmem [resolvable:$true] %s62
      %68 = dma.hbm_to_vmem [thread:$0]  %s5, 512, %s63, [#allocation10], 128, 128, 8
    $region25: #{tpu_custom_call.1} parent=1 // pred_fallthru
      _
    // Predicated region
    $region26: #{tpu_custom_call.1} parent=1 // pred_check
      _
    $region27: #{tpu_custom_call.1} parent=1 // pred_check_branch
      %70 = sbr.rel (0) target = $region29
    $region28: #{tpu_custom_call.1} parent=1 // pred_region
      %s72 = ssub.s32 512, 512
      %73 = vsyncadd [#allocation10], %s72
      %s74 = sshll.u32 [#allocation11], 4
      %s75 = int_to_ptr.vmem [resolvable:$true] %s74
      %80 = dma.hbm_to_vmem [thread:$0]  %s6, 512, %s75, [#allocation10], 128, 128, 8
    $region29: #{tpu_custom_call.1} parent=1 // pred_fallthru
      _
    // Predicated region
    $region30: #{tpu_custom_call.1} parent=1 // pred_check
      _
    $region31: #{tpu_custom_call.1} parent=1 // pred_check_branch
      %82 = sbr.rel (0) target = $region33
    $region32: #{tpu_custom_call.1} parent=1 // pred_region
      %s84 = ssub.s32 16, 16
      %85 = vsyncadd [#allocation13], %s84
      %s87 = sshll.u32 [#allocation12], 4
      %s88 = int_to_ptr.vmem [resolvable:$true] %s87
      %90 = dma.hbm_to_vmem [thread:$0]  %s7, 16, %s88, [#allocation13]
    $region33: #{tpu_custom_call.1} parent=1 // pred_fallthru
      _
    // Predicated region
    $region34: #{tpu_custom_call.1} parent=1 // pred_check
      _
    $region35: #{tpu_custom_call.1} parent=1 // pred_check_branch
      %92 = sbr.rel (0) target = $region37
    $region36: #{tpu_custom_call.1} parent=1 // pred_region
      %s94 = ssub.s32 16, 16
      %95 = vsyncadd [#allocation13], %s94
      %s97 = sshll.u32 [#allocation14], 4
      %s98 = int_to_ptr.vmem [resolvable:$true] %s97
      %100 = dma.hbm_to_vmem [thread:$0]  %s8, 16, %s98, [#allocation13]
    $region37: #{tpu_custom_call.1} parent=1 // pred_fallthru
      _
    // Predicated region
    $region38: #{tpu_custom_call.1} parent=1 // pred_check
      _
    $region39: #{tpu_custom_call.1} parent=1 // pred_check_branch
      %102 = sbr.rel (0) target = $region41
    $region40: #{tpu_custom_call.1} parent=1 // pred_region
      _
    $region41: #{tpu_custom_call.1} parent=1 // pred_fallthru
      _
    // Predicated region
    $region42: #{tpu_custom_call.1} parent=1 // pred_check
      _
    $region43: #{tpu_custom_call.1} parent=1 // pred_check_branch
      %104 = sbr.rel (0) target = $region45
    $region44: #{tpu_custom_call.1} parent=1 // pred_region
      _
    $region45: #{tpu_custom_call.1} parent=1 // pred_fallthru
      _
    // Predicated region
    $region46: #{tpu_custom_call.1} parent=1 // pred_check
      _
    $region47: #{tpu_custom_call.1} parent=1 // pred_check_branch
      %106 = sbr.rel (0) target = $region49
    $region48: #{tpu_custom_call.1} parent=1 // pred_region
      %107 = dma.done [#allocation4], 1024
    $region49: #{tpu_custom_call.1} parent=1 // pred_fallthru
      _
    // Predicated region
    $region50: #{tpu_custom_call.1} parent=1 // pred_check
      _
    $region51: #{tpu_custom_call.1} parent=1 // pred_check_branch
      %109 = sbr.rel (0) target = $region53
    $region52: #{tpu_custom_call.1} parent=1 // pred_region
      %110 = dma.done [#allocation7], 16
    $region53: #{tpu_custom_call.1} parent=1 // pred_fallthru
      _
    // Predicated region
    $region54: #{tpu_custom_call.1} parent=1 // pred_check
      _
    $region55: #{tpu_custom_call.1} parent=1 // pred_check_branch
      %112 = sbr.rel (0) target = $region57
    $region56: #{tpu_custom_call.1} parent=1 // pred_region
      %113 = dma.done [#allocation7], 16
    $region57: #{tpu_custom_call.1} parent=1 // pred_fallthru
      _
    // Predicated region
    $region58: #{tpu_custom_call.1} parent=1 // pred_check
      _
    $region59: #{tpu_custom_call.1} parent=1 // pred_check_branch
      %115 = sbr.rel (0) target = $region61
    $region60: #{tpu_custom_call.1} parent=1 // pred_region
      %116 = dma.done [#allocation10], 512
    $region61: #{tpu_custom_call.1} parent=1 // pred_fallthru
      _
    // Predicated region
    $region62: #{tpu_custom_call.1} parent=1 // pred_check
      _
    $region63: #{tpu_custom_call.1} parent=1 // pred_check_branch
      %118 = sbr.rel (0) target = $region65
    $region64: #{tpu_custom_call.1} parent=1 // pred_region
      %119 = dma.done [#allocation10], 512
    $region65: #{tpu_custom_call.1} parent=1 // pred_fallthru
      _
    // Predicated region
    $region66: #{tpu_custom_call.1} parent=1 // pred_check
      _
    $region67: #{tpu_custom_call.1} parent=1 // pred_check_branch
      %121 = sbr.rel (0) target = $region69
    $region68: #{tpu_custom_call.1} parent=1 // pred_region
      %122 = dma.done [#allocation13], 16
    $region69: #{tpu_custom_call.1} parent=1 // pred_fallthru
      _
    // Predicated region
    $region70: #{tpu_custom_call.1} parent=1 // pred_check
      _
    $region71: #{tpu_custom_call.1} parent=1 // pred_check_branch
      %124 = sbr.rel (0) target = $region73
    $region72: #{tpu_custom_call.1} parent=1 // pred_region
      %125 = dma.done [#allocation13], 16
    $region73: #{tpu_custom_call.1} parent=1 // pred_fallthru
      _
    %v126 = vld [vmem:[%s1] sm:$0xff]
    %v127 = vld [vmem:[%s1 + $0x8] sm:$0xff]
    %v128 = vld [vmem:[#allocation9] sm:$0xff]
    %v129 = vld [vmem:[#allocation9 + $0x8] sm:$0xff]
    %v130 = vld [vmem:[#allocation9 + $0x10] sm:$0xff]
    %v131 = vld [vmem:[#allocation9 + $0x18] sm:$0xff]
    %v132 = vld [vmem:[%s2] sm:$0xff]
    %v133 = vld [vmem:[%s2 + $0x8] sm:$0xff]
    %v134 = vld [vmem:[%s2 + $0x10] sm:$0xff]
    %v135 = vld [vmem:[%s2 + $0x18] sm:$0xff]
    %v136 = vld [vmem:[#allocation11] sm:$0xff]
    %v137 = vld [vmem:[#allocation11 + $0x8] sm:$0xff]
    %v138 = vld [vmem:[#allocation11 + $0x10] sm:$0xff]
    %v139 = vld [vmem:[#allocation11 + $0x18] sm:$0xff]
    %v140 = vld [vmem:[#allocation6] sm:$0x1]
    %v141 = vld [vmem:[#allocation12] sm:$0x1]
    %v142 = vld [vmem:[#allocation8] sm:$0x1]
    %v144 = vlaneseq
    %v145 = vshrl.u32 %v144, 7
    %v146 = vsub.s32 0, %v145
    %v147 = vrot.slane %v142, %v146
    %v148 = vld [vmem:[#allocation14] sm:$0x1]
    %v150 = vlaneseq
    %v151 = vshrl.u32 %v150, 7
    %v152 = vsub.s32 0, %v151
    %v153 = vrot.slane %v148, %v152
    %v154 = vld [vmem:[#allocation3] sm:$0xff]
    %v155 = vld [vmem:[#allocation3 + $0x8] sm:$0xff]
    %v156 = vld [vmem:[#allocation3 + $0x10] sm:$0xff]
    %v157 = vld [vmem:[#allocation3 + $0x18] sm:$0xff]
    %v158 = vld [vmem:[#allocation3 + $0x20] sm:$0xff]
    %v159 = vld [vmem:[#allocation3 + $0x28] sm:$0xff]
    %v160 = vld [vmem:[#allocation3 + $0x30] sm:$0xff]
    %v161 = vld [vmem:[#allocation3 + $0x38] sm:$0xff]
    %v163 = vlaneseq
    %v164 = vshrl.u32 %v163, 7
    %v165 = vsub.s32 0, %v164
    %v166 = vrot.slane %v140, %v165
    %vm168 = vcmask 130048
    %v170 = vsel %vm168, %v154, 0
    %v173 = vsel %vm168, %v155, 0
    %v176 = vsel %vm168, %v156, 0
    %v179 = vsel %vm168, %v157, 0
    %v182 = vsel %vm168, %v158, 0
    %v185 = vsel %vm168, %v159, 0
    %v188 = vsel %vm168, %v160, 0
    %v191 = vsel %vm168, %v161, 0
    %193 = vmatprep.subr.mxu0 0.0
    %194 = vmatpush1.msra.mxu0 0.0
    %195 = vmatprep.subr.mxu0 0.0
    %196 = vmatpush1.msra.mxu0 0.0
    %197 = vmatprep.subr.mxu0 0.0
    %198 = vmatpush1.msra.mxu0 0.0
    %199 = vmatprep.subr.mxu0 0.0
    %200 = vmatpush1.msra.mxu0 0.0
    %201 = vmatprep.subr.mxu0 0.0
    %202 = vmatpush1.msra.mxu0 0.0
    %203 = vmatprep.subr.mxu0 0.0
    %204 = vmatpush1.msra.mxu0 0.0
    %205 = vmatprep.subr.mxu0 0.0
    %206 = vmatpush1.msra.mxu0 0.0
    %207 = vmatprep.subr.mxu0 0.0
    %208 = vmatpush1.msra.mxu0 0.0
    %209 = vmatprep.subr.mxu0 0.0
    %210 = vmatpush1.msra.mxu0 0.0
    %211 = vmatprep.subr.mxu0 0.0
    %212 = vmatpush1.msra.mxu0 0.0
    %213 = vmatprep.subr.mxu0 0.0
    %214 = vmatpush1.msra.mxu0 0.0
    %215 = vmatprep.subr.mxu0 0.0
    %216 = vmatpush1.msra.mxu0 0.0
    %217 = vmatprep.subr.mxu0 0.0
    %218 = vmatpush1.msra.mxu0 0.0
    %219 = vmatprep.subr.mxu0 0.0
    %220 = vmatpush1.msra.mxu0 0.0
    %221 = vmatprep.subr.mxu0 0.0
    %222 = vmatpush1.msra.mxu0 %v127
    %223 = vmatprep.subr.mxu0 0.0
    %224 = vmatpush1.msra.mxu0 %v126
    %225 = vmatprep.subr.mxu0 0.0
    %226 = vmatpush2.msra.mxu0 0.0
    %227 = vmatprep.subr.mxu0 0.0
    %228 = vmatpush2.msra.mxu0 0.0
    %229 = vmatprep.subr.mxu0 0.0
    %230 = vmatpush2.msra.mxu0 0.0
    %231 = vmatprep.subr.mxu0 0.0
    %232 = vmatpush2.msra.mxu0 0.0
    %233 = vmatprep.subr.mxu0 0.0
    %234 = vmatpush2.msra.mxu0 0.0
    %235 = vmatprep.subr.mxu0 0.0
    %236 = vmatpush2.msra.mxu0 0.0
    %237 = vmatprep.subr.mxu0 0.0
    %238 = vmatpush2.msra.mxu0 0.0
    %239 = vmatprep.subr.mxu0 0.0
    %240 = vmatpush2.msra.mxu0 0.0
    %241 = vmatprep.subr.mxu0 0.0
    %242 = vmatpush2.msra.mxu0 0.0
    %243 = vmatprep.subr.mxu0 0.0
    %244 = vmatpush2.msra.mxu0 0.0
    %245 = vmatprep.subr.mxu0 0.0
    %246 = vmatpush2.msra.mxu0 0.0
    %247 = vmatprep.subr.mxu0 0.0
    %248 = vmatpush2.msra.mxu0 0.0
    %249 = vmatprep.subr.mxu0 0.0
    %250 = vmatpush2.msra.mxu0 0.0
    %251 = vmatprep.subr.mxu0 0.0
    %252 = vmatpush2.msra.mxu0 0.0
    %253 = vmatprep.subr.mxu0 0.0
    %254 = vmatpush2.msra.mxu0 0.0
    %255 = vmatprep.subr.mxu0 0.0
    %256 = vmatpush2.msra.mxu0 0.0
    %257 = vmatprep.mubr.f32.mxu0 0.0
    %258 = vmatmul.mubr.f32.gmra.mxu0 %v170
    %v259 = vpop.f32.mrf.mxu0
    %v260 = vadd.f32 %v166, %v259
    %v261 = vpop.f32.mrf.mxu0
    %262 = vmatprep.mubr.f32.mxu0 0.0
    %263 = vmatmul.mubr.f32.gmra.mxu0 %v173
    %v264 = vpop.f32.mrf.mxu0
    %v265 = vadd.f32 %v166, %v264
    %v266 = vpop.f32.mrf.mxu0
    %267 = vmatprep.mubr.f32.mxu0 0.0
    %268 = vmatmul.mubr.f32.gmra.mxu0 %v176
    %v269 = vpop.f32.mrf.mxu0
    %v270 = vadd.f32 %v166, %v269
    %v271 = vpop.f32.mrf.mxu0
    %272 = vmatprep.mubr.f32.mxu0 0.0
    %273 = vmatmul.mubr.f32.gmra.mxu0 %v179
    %v274 = vpop.f32.mrf.mxu0
    %v275 = vadd.f32 %v166, %v274
    %v276 = vpop.f32.mrf.mxu0
    %277 = vmatprep.mubr.f32.mxu0 0.0
    %278 = vmatmul.mubr.f32.gmra.mxu0 %v182
    %v279 = vpop.f32.mrf.mxu0
    %v280 = vadd.f32 %v166, %v279
    %v281 = vpop.f32.mrf.mxu0
    %282 = vmatprep.mubr.f32.mxu0 0.0
    %283 = vmatmul.mubr.f32.gmra.mxu0 %v185
    %v284 = vpop.f32.mrf.mxu0
    %v285 = vadd.f32 %v166, %v284
    %v286 = vpop.f32.mrf.mxu0
    %287 = vmatprep.mubr.f32.mxu0 0.0
    %288 = vmatmul.mubr.f32.gmra.mxu0 %v188
    %v289 = vpop.f32.mrf.mxu0
    %v290 = vadd.f32 %v166, %v289
    %v291 = vpop.f32.mrf.mxu0
    %292 = vmatprep.mubr.f32.mxu0 0.0
    %293 = vmatmul.mubr.f32.gmra.mxu0 %v191
    %v294 = vpop.f32.mrf.mxu0
    %v295 = vadd.f32 %v166, %v294
    %v296 = vpop.f32.mrf.mxu0
    %297 = vdwg.mxu0
    %vm298 = vcmask 785408
    %299 = vst.msk [vmem:[#allocation2] sm:$0xff] %vm298, %v260
    %300 = vst.msk [vmem:[#allocation2 + $0x8] sm:$0xff] %vm298, %v265
    %301 = vst.msk [vmem:[#allocation2 + $0x10] sm:$0xff] %vm298, %v270
    %302 = vst.msk [vmem:[#allocation2 + $0x18] sm:$0xff] %vm298, %v275
    %303 = vst.msk [vmem:[#allocation2 + $0x20] sm:$0xff] %vm298, %v280
    %304 = vst.msk [vmem:[#allocation2 + $0x28] sm:$0xff] %vm298, %v285
    %305 = vst.msk [vmem:[#allocation2 + $0x30] sm:$0xff] %vm298, %v290
    %306 = vst.msk [vmem:[#allocation2 + $0x38] sm:$0xff] %vm298, %v295
    %v307 = vld [vmem:[#allocation2] sm:$0xff]
    %vm308 = vcmask 261120
    %v310 = vsel %vm308, 0.0, 0
    %312 = vmatprep.subr.mxu0 0.0
    %313 = vmatpush1.msra.mxu0 0.0
    %314 = vmatprep.subr.mxu0 0.0
    %315 = vmatpush1.msra.mxu0 0.0
    %316 = vmatprep.subr.mxu0 0.0
    %317 = vmatpush1.msra.mxu0 0.0
    %318 = vmatprep.subr.mxu0 0.0
    %319 = vmatpush1.msra.mxu0 0.0
    %320 = vmatprep.subr.mxu0 0.0
    %321 = vmatpush1.msra.mxu0 0.0
    %322 = vmatprep.subr.mxu0 0.0
    %323 = vmatpush1.msra.mxu0 0.0
    %324 = vmatprep.subr.mxu0 0.0
    %325 = vmatpush1.msra.mxu0 0.0
    %326 = vmatprep.subr.mxu0 0.0
    %327 = vmatpush1.msra.mxu0 0.0
    %328 = vmatprep.subr.mxu0 0.0
    %329 = vmatpush1.msra.mxu0 0.0
    %330 = vmatprep.subr.mxu0 0.0
    %331 = vmatpush1.msra.mxu0 0.0
    %332 = vmatprep.subr.mxu0 0.0
    %333 = vmatpush1.msra.mxu0 0.0
    %334 = vmatprep.subr.mxu0 0.0
    %335 = vmatpush1.msra.mxu0 0.0
    %336 = vmatprep.subr.mxu0 0.0
    %337 = vmatpush1.msra.mxu0 %v135
    %338 = vmatprep.subr.mxu0 0.0
    %339 = vmatpush1.msra.mxu0 %v134
    %340 = vmatprep.subr.mxu0 0.0
    %341 = vmatpush1.msra.mxu0 %v133
    %342 = vmatprep.subr.mxu0 0.0
    %343 = vmatpush1.msra.mxu0 %v132
    %344 = vmatprep.subr.mxu0 0.0
    %345 = vmatpush2.msra.mxu0 0.0
    %346 = vmatprep.subr.mxu0 0.0
    %347 = vmatpush2.msra.mxu0 0.0
    %348 = vmatprep.subr.mxu0 0.0
    %349 = vmatpush2.msra.mxu0 0.0
    %350 = vmatprep.subr.mxu0 0.0
    %351 = vmatpush2.msra.mxu0 0.0
    %352 = vmatprep.subr.mxu0 0.0
    %353 = vmatpush2.msra.mxu0 0.0
    %354 = vmatprep.subr.mxu0 0.0
    %355 = vmatpush2.msra.mxu0 0.0
    %356 = vmatprep.subr.mxu0 0.0
    %357 = vmatpush2.msra.mxu0 0.0
    %358 = vmatprep.subr.mxu0 0.0
    %359 = vmatpush2.msra.mxu0 0.0
    %360 = vmatprep.subr.mxu0 0.0
    %361 = vmatpush2.msra.mxu0 0.0
    %362 = vmatprep.subr.mxu0 0.0
    %363 = vmatpush2.msra.mxu0 0.0
    %364 = vmatprep.subr.mxu0 0.0
    %365 = vmatpush2.msra.mxu0 0.0
    %366 = vmatprep.subr.mxu0 0.0
    %367 = vmatpush2.msra.mxu0 0.0
    %368 = vmatprep.subr.mxu0 0.0
    %369 = vmatpush2.msra.mxu0 0.0
    %370 = vmatprep.subr.mxu0 0.0
    %371 = vmatpush2.msra.mxu0 0.0
    %372 = vmatprep.subr.mxu0 0.0
    %373 = vmatpush2.msra.mxu0 0.0
    %374 = vmatprep.subr.mxu0 0.0
    %375 = vmatpush2.msra.mxu0 0.0
    %376 = vmatprep.mubr.f32.mxu0 0.0
    %377 = vmatmul.mubr.f32.gmra.mxu0 %v310
    %v378 = vpop.f32.mrf.mxu0
    %v379 = vadd.f32 0.0, %v378
    %v380 = vpop.f32.mrf.mxu0
    %381 = vdwg.mxu0
    %v382 = vadd.f32 %v307, %v379
    %v383 = vxor.u32 %v382, 2147483648
    %v384 = vmul.f32 %v383, 1.442695
    %v385 = vpow.pop %v384
    %v386 = vadd.f32 %v385, 1.0
    %v387 = vrcp.pop %v386
    %v388 = vmul.f32 1.0, %v387
    %389 = vrot.lane.b32.xlu0 %v147, 64
    %v390 = vpop.permute.xlu0 %389
    %v392 = vadd.f32 %v379, %v390
    %394 = vrot.lane.b32.xlu0 %v392, 64
    %v395 = vpop.permute.xlu0 %394
    %v397 = vmul.f32 %v388, %v395
    %399 = vrot.lane.b32.xlu0 %v397, 64
    %v400 = vpop.permute.xlu0 %399
    %v402 = vadd.f32 %v307, %v400
    %v403 = vtanh.pop %v402
    %v404 = vsub.f32 0.0, %v403
    %406 = vrot.lane.b32.xlu0 %v404, 96
    %v407 = vpop.permute.xlu0 %406
    %v409 = vmul.f32 %v388, %v407
    %411 = vrot.lane.b32.xlu0 %v409, 32
    %v412 = vpop.permute.xlu0 %411
    %v414 = vadd.f32 %v403, %v412
    %s415 = scalar_lea.vmem [#allocation2], 8
    %v416 = vld [vmem:[%s415] sm:$0xff]
    %418 = vrot.lane.b32.xlu0 %v414, 64
    %v419 = vpop.permute.xlu0 %418
    %v420 = vsel %vm308, %v419, 0
    %422 = vmatprep.subr.mxu0 0.0
    %423 = vmatpush1.msra.mxu0 0.0
    %424 = vmatprep.subr.mxu0 0.0
    %425 = vmatpush1.msra.mxu0 0.0
    %426 = vmatprep.subr.mxu0 0.0
    %427 = vmatpush1.msra.mxu0 0.0
    %428 = vmatprep.subr.mxu0 0.0
    %429 = vmatpush1.msra.mxu0 0.0
    %430 = vmatprep.subr.mxu0 0.0
    %431 = vmatpush1.msra.mxu0 0.0
    %432 = vmatprep.subr.mxu0 0.0
    %433 = vmatpush1.msra.mxu0 0.0
    %434 = vmatprep.subr.mxu0 0.0
    %435 = vmatpush1.msra.mxu0 0.0
    %436 = vmatprep.subr.mxu0 0.0
    %437 = vmatpush1.msra.mxu0 0.0
    %438 = vmatprep.subr.mxu0 0.0
    %439 = vmatpush1.msra.mxu0 0.0
    %440 = vmatprep.subr.mxu0 0.0
    %441 = vmatpush1.msra.mxu0 0.0
    %442 = vmatprep.subr.mxu0 0.0
    %443 = vmatpush1.msra.mxu0 0.0
    %444 = vmatprep.subr.mxu0 0.0
    %445 = vmatpush1.msra.mxu0 0.0
    %446 = vmatprep.subr.mxu0 0.0
    %447 = vmatpush1.msra.mxu0 %v135
    %448 = vmatprep.subr.mxu0 0.0
    %449 = vmatpush1.msra.mxu0 %v134
    %450 = vmatprep.subr.mxu0 0.0
    %451 = vmatpush1.msra.mxu0 %v133
    %452 = vmatprep.subr.mxu0 0.0
    %453 = vmatpush1.msra.mxu0 %v132
    %454 = vmatprep.subr.mxu0 0.0
    %455 = vmatpush2.msra.mxu0 0.0
    %456 = vmatprep.subr.mxu0 0.0
    %457 = vmatpush2.msra.mxu0 0.0
    %458 = vmatprep.subr.mxu0 0.0
    %459 = vmatpush2.msra.mxu0 0.0
    %460 = vmatprep.subr.mxu0 0.0
    %461 = vmatpush2.msra.mxu0 0.0
    %462 = vmatprep.subr.mxu0 0.0
    %463 = vmatpush2.msra.mxu0 0.0
    %464 = vmatprep.subr.mxu0 0.0
    %465 = vmatpush2.msra.mxu0 0.0
    %466 = vmatprep.subr.mxu0 0.0
    %467 = vmatpush2.msra.mxu0 0.0
    %468 = vmatprep.subr.mxu0 0.0
    %469 = vmatpush2.msra.mxu0 0.0
    %470 = vmatprep.subr.mxu0 0.0
    %471 = vmatpush2.msra.mxu0 0.0
    %472 = vmatprep.subr.mxu0 0.0
    %473 = vmatpush2.msra.mxu0 0.0
    %474 = vmatprep.subr.mxu0 0.0
    %475 = vmatpush2.msra.mxu0 0.0
    %476 = vmatprep.subr.mxu0 0.0
    %477 = vmatpush2.msra.mxu0 0.0
    %478 = vmatprep.subr.mxu0 0.0
    %479 = vmatpush2.msra.mxu0 0.0
    %480 = vmatprep.subr.mxu0 0.0
    %481 = vmatpush2.msra.mxu0 0.0
    %482 = vmatprep.subr.mxu0 0.0
    %483 = vmatpush2.msra.mxu0 0.0
    %484 = vmatprep.subr.mxu0 0.0
    %485 = vmatpush2.msra.mxu0 0.0
    %486 = vmatprep.mubr.f32.mxu0 0.0
    %487 = vmatmul.mubr.f32.gmra.mxu0 %v420
    %v488 = vpop.f32.mrf.mxu0
    %v489 = vadd.f32 0.0, %v488
    %v490 = vpop.f32.mrf.mxu0
    %491 = vdwg.mxu0
    %v492 = vadd.f32 %v416, %v489
    %v493 = vxor.u32 %v492, 2147483648
    %v494 = vmul.f32 %v493, 1.442695
    %v495 = vpow.pop %v494
    %v496 = vadd.f32 %v495, 1.0
    %v497 = vrcp.pop %v496
    %v498 = vmul.f32 1.0, %v497
    %v499 = vadd.f32 %v489, %v390
    %501 = vrot.lane.b32.xlu0 %v499, 64
    %v502 = vpop.permute.xlu0 %501
    %v504 = vmul.f32 %v498, %v502
    %506 = vrot.lane.b32.xlu0 %v504, 64
    %v507 = vpop.permute.xlu0 %506
    %v509 = vadd.f32 %v416, %v507
    %v510 = vtanh.pop %v509
    %v511 = vsub.f32 %v414, %v510
    %513 = vrot.lane.b32.xlu0 %v511, 96
    %v514 = vpop.permute.xlu0 %513
    %v516 = vmul.f32 %v498, %v514
    %518 = vrot.lane.b32.xlu0 %v516, 32
    %v519 = vpop.permute.xlu0 %518
    %v521 = vadd.f32 %v510, %v519
    %v523 = vlaneseq
    %v524 = vshrl.u32 %v523, 7
    %v525 = vsub.s32 0, %v524
    %v526 = vrot.slane %v141, %v525
    %528 = vmatprep.subr.mxu0 0.0
    %529 = vmatpush1.msra.mxu0 0.0
    %530 = vmatprep.subr.mxu0 0.0
    %531 = vmatpush1.msra.mxu0 0.0
    %532 = vmatprep.subr.mxu0 0.0
    %533 = vmatpush1.msra.mxu0 0.0
    %534 = vmatprep.subr.mxu0 0.0
    %535 = vmatpush1.msra.mxu0 0.0
    %536 = vmatprep.subr.mxu0 0.0
    %537 = vmatpush1.msra.mxu0 0.0
    %538 = vmatprep.subr.mxu0 0.0
    %539 = vmatpush1.msra.mxu0 0.0
    %540 = vmatprep.subr.mxu0 0.0
    %541 = vmatpush1.msra.mxu0 0.0
    %542 = vmatprep.subr.mxu0 0.0
    %543 = vmatpush1.msra.mxu0 0.0
    %544 = vmatprep.subr.mxu0 0.0
    %545 = vmatpush1.msra.mxu0 0.0
    %546 = vmatprep.subr.mxu0 0.0
    %547 = vmatpush1.msra.mxu0 0.0
    %548 = vmatprep.subr.mxu0 0.0
    %549 = vmatpush1.msra.mxu0 0.0
    %550 = vmatprep.subr.mxu0 0.0
    %551 = vmatpush1.msra.mxu0 0.0
    %552 = vmatprep.subr.mxu0 0.0
    %553 = vmatpush1.msra.mxu0 %v131
    %554 = vmatprep.subr.mxu0 0.0
    %555 = vmatpush1.msra.mxu0 %v130
    %556 = vmatprep.subr.mxu0 0.0
    %557 = vmatpush1.msra.mxu0 %v129
    %558 = vmatprep.subr.mxu0 0.0
    %559 = vmatpush1.msra.mxu0 %v128
    %560 = vmatprep.subr.mxu0 0.0
    %561 = vmatpush2.msra.mxu0 0.0
    %562 = vmatprep.subr.mxu0 0.0
    %563 = vmatpush2.msra.mxu0 0.0
    %564 = vmatprep.subr.mxu0 0.0
    %565 = vmatpush2.msra.mxu0 0.0
    %566 = vmatprep.subr.mxu0 0.0
    %567 = vmatpush2.msra.mxu0 0.0
    %568 = vmatprep.subr.mxu0 0.0
    %569 = vmatpush2.msra.mxu0 0.0
    %570 = vmatprep.subr.mxu0 0.0
    %571 = vmatpush2.msra.mxu0 0.0
    %572 = vmatprep.subr.mxu0 0.0
    %573 = vmatpush2.msra.mxu0 0.0
    %574 = vmatprep.subr.mxu0 0.0
    %575 = vmatpush2.msra.mxu0 0.0
    %576 = vmatprep.subr.mxu0 0.0
    %577 = vmatpush2.msra.mxu0 0.0
    %578 = vmatprep.subr.mxu0 0.0
    %579 = vmatpush2.msra.mxu0 0.0
    %580 = vmatprep.subr.mxu0 0.0
    %581 = vmatpush2.msra.mxu0 0.0
    %582 = vmatprep.subr.mxu0 0.0
    %583 = vmatpush2.msra.mxu0 0.0
    %584 = vmatprep.subr.mxu0 0.0
    %585 = vmatpush2.msra.mxu0 0.0
    %586 = vmatprep.subr.mxu0 0.0
    %587 = vmatpush2.msra.mxu0 0.0
    %588 = vmatprep.subr.mxu0 0.0
    %589 = vmatpush2.msra.mxu0 0.0
    %590 = vmatprep.subr.mxu0 0.0
    %591 = vmatpush2.msra.mxu0 0.0
    %592 = vmatprep.mubr.f32.mxu0 0.0
    %593 = vmatmul.mubr.f32.gmra.mxu0 %v420
    %v594 = vpop.f32.mrf.mxu0
    %v595 = vadd.f32 %v526, %v594
    %v596 = vpop.f32.mrf.mxu0
    %597 = vdwg.mxu0
    %598 = vmatprep.subr.mxu0 0.0
    %599 = vmatpush1.msra.mxu0 0.0
    %600 = vmatprep.subr.mxu0 0.0
    %601 = vmatpush1.msra.mxu0 0.0
    %602 = vmatprep.subr.mxu0 0.0
    %603 = vmatpush1.msra.mxu0 0.0
    %604 = vmatprep.subr.mxu0 0.0
    %605 = vmatpush1.msra.mxu0 0.0
    %606 = vmatprep.subr.mxu0 0.0
    %607 = vmatpush1.msra.mxu0 0.0
    %608 = vmatprep.subr.mxu0 0.0
    %609 = vmatpush1.msra.mxu0 0.0
    %610 = vmatprep.subr.mxu0 0.0
    %611 = vmatpush1.msra.mxu0 0.0
    %612 = vmatprep.subr.mxu0 0.0
    %613 = vmatpush1.msra.mxu0 0.0
    %614 = vmatprep.subr.mxu0 0.0
    %615 = vmatpush1.msra.mxu0 0.0
    %616 = vmatprep.subr.mxu0 0.0
    %617 = vmatpush1.msra.mxu0 0.0
    %618 = vmatprep.subr.mxu0 0.0
    %619 = vmatpush1.msra.mxu0 0.0
    %620 = vmatprep.subr.mxu0 0.0
    %621 = vmatpush1.msra.mxu0 0.0
    %622 = vmatprep.subr.mxu0 0.0
    %623 = vmatpush1.msra.mxu0 %v139
    %624 = vmatprep.subr.mxu0 0.0
    %625 = vmatpush1.msra.mxu0 %v138
    %626 = vmatprep.subr.mxu0 0.0
    %627 = vmatpush1.msra.mxu0 %v137
    %628 = vmatprep.subr.mxu0 0.0
    %629 = vmatpush1.msra.mxu0 %v136
    %630 = vmatprep.subr.mxu0 0.0
    %631 = vmatpush2.msra.mxu0 0.0
    %632 = vmatprep.subr.mxu0 0.0
    %633 = vmatpush2.msra.mxu0 0.0
    %634 = vmatprep.subr.mxu0 0.0
    %635 = vmatpush2.msra.mxu0 0.0
    %636 = vmatprep.subr.mxu0 0.0
    %637 = vmatpush2.msra.mxu0 0.0
    %638 = vmatprep.subr.mxu0 0.0
    %639 = vmatpush2.msra.mxu0 0.0
    %640 = vmatprep.subr.mxu0 0.0
    %641 = vmatpush2.msra.mxu0 0.0
    %642 = vmatprep.subr.mxu0 0.0
    %643 = vmatpush2.msra.mxu0 0.0
    %644 = vmatprep.subr.mxu0 0.0
    %645 = vmatpush2.msra.mxu0 0.0
    %646 = vmatprep.subr.mxu0 0.0
    %647 = vmatpush2.msra.mxu0 0.0
    %648 = vmatprep.subr.mxu0 0.0
    %649 = vmatpush2.msra.mxu0 0.0
    %650 = vmatprep.subr.mxu0 0.0
    %651 = vmatpush2.msra.mxu0 0.0
    %652 = vmatprep.subr.mxu0 0.0
    %653 = vmatpush2.msra.mxu0 0.0
    %654 = vmatprep.subr.mxu0 0.0
    %655 = vmatpush2.msra.mxu0 0.0
    %656 = vmatprep.subr.mxu0 0.0
    %657 = vmatpush2.msra.mxu0 0.0
    %658 = vmatprep.subr.mxu0 0.0
    %659 = vmatpush2.msra.mxu0 0.0
    %660 = vmatprep.subr.mxu0 0.0
    %661 = vmatpush2.msra.mxu0 0.0
    %662 = vmatprep.mubr.f32.mxu0 0.0
    %663 = vmatmul.mubr.f32.gmra.mxu0 %v310
    %v664 = vpop.f32.mrf.mxu0
    %v665 = vadd.f32 0.0, %v664
    %v666 = vpop.f32.mrf.mxu0
    %667 = vdwg.mxu0
    %v668 = vadd.f32 %v595, %v665
    %v669 = vxor.u32 %v668, 2147483648
    %v670 = vmul.f32 %v669, 1.442695
    %v671 = vpow.pop %v670
    %v672 = vadd.f32 %v671, 1.0
    %v673 = vrcp.pop %v672
    %v674 = vmul.f32 1.0, %v673
    %675 = vrot.lane.b32.xlu0 %v153, 64
    %v676 = vpop.permute.xlu0 %675
    %v678 = vadd.f32 %v665, %v676
    %680 = vrot.lane.b32.xlu0 %v678, 64
    %v681 = vpop.permute.xlu0 %680
    %v683 = vmul.f32 %v674, %v681
    %685 = vrot.lane.b32.xlu0 %v683, 64
    %v686 = vpop.permute.xlu0 %685
    %v688 = vadd.f32 %v595, %v686
    %v689 = vtanh.pop %v688
    %v690 = vsub.f32 0.0, %v689
    %692 = vrot.lane.b32.xlu0 %v690, 96
    %v693 = vpop.permute.xlu0 %692
    %v695 = vmul.f32 %v674, %v693
    %697 = vrot.lane.b32.xlu0 %v695, 32
    %v698 = vpop.permute.xlu0 %697
    %v700 = vadd.f32 %v689, %v698
    %s701 = scalar_lea.vmem [#allocation2], 16
    %v702 = vld [vmem:[%s701] sm:$0xff]
    %704 = vrot.lane.b32.xlu0 %v521, 64
    %v705 = vpop.permute.xlu0 %704
    %v706 = vsel %vm308, %v705, 0
    %708 = vmatprep.subr.mxu0 0.0
    %709 = vmatpush1.msra.mxu0 0.0
    %710 = vmatprep.subr.mxu0 0.0
    %711 = vmatpush1.msra.mxu0 0.0
    %712 = vmatprep.subr.mxu0 0.0
    %713 = vmatpush1.msra.mxu0 0.0
    %714 = vmatprep.subr.mxu0 0.0
    %715 = vmatpush1.msra.mxu0 0.0
    %716 = vmatprep.subr.mxu0 0.0
    %717 = vmatpush1.msra.mxu0 0.0
    %718 = vmatprep.subr.mxu0 0.0
    %719 = vmatpush1.msra.mxu0 0.0
    %720 = vmatprep.subr.mxu0 0.0
    %721 = vmatpush1.msra.mxu0 0.0
    %722 = vmatprep.subr.mxu0 0.0
    %723 = vmatpush1.msra.mxu0 0.0
    %724 = vmatprep.subr.mxu0 0.0
    %725 = vmatpush1.msra.mxu0 0.0
    %726 = vmatprep.subr.mxu0 0.0
    %727 = vmatpush1.msra.mxu0 0.0
    %728 = vmatprep.subr.mxu0 0.0
    %729 = vmatpush1.msra.mxu0 0.0
    %730 = vmatprep.subr.mxu0 0.0
    %731 = vmatpush1.msra.mxu0 0.0
    %732 = vmatprep.subr.mxu0 0.0
    %733 = vmatpush1.msra.mxu0 %v135
    %734 = vmatprep.subr.mxu0 0.0
    %735 = vmatpush1.msra.mxu0 %v134
    %736 = vmatprep.subr.mxu0 0.0
    %737 = vmatpush1.msra.mxu0 %v133
    %738 = vmatprep.subr.mxu0 0.0
    %739 = vmatpush1.msra.mxu0 %v132
    %740 = vmatprep.subr.mxu0 0.0
    %741 = vmatpush2.msra.mxu0 0.0
    %742 = vmatprep.subr.mxu0 0.0
    %743 = vmatpush2.msra.mxu0 0.0
    %744 = vmatprep.subr.mxu0 0.0
    %745 = vmatpush2.msra.mxu0 0.0
    %746 = vmatprep.subr.mxu0 0.0
    %747 = vmatpush2.msra.mxu0 0.0
    %748 = vmatprep.subr.mxu0 0.0
    %749 = vmatpush2.msra.mxu0 0.0
    %750 = vmatprep.subr.mxu0 0.0
    %751 = vmatpush2.msra.mxu0 0.0
    %752 = vmatprep.subr.mxu0 0.0
    %753 = vmatpush2.msra.mxu0 0.0
    %754 = vmatprep.subr.mxu0 0.0
    %755 = vmatpush2.msra.mxu0 0.0
    %756 = vmatprep.subr.mxu0 0.0
    %757 = vmatpush2.msra.mxu0 0.0
    %758 = vmatprep.subr.mxu0 0.0
    %759 = vmatpush2.msra.mxu0 0.0
    %760 = vmatprep.subr.mxu0 0.0
    %761 = vmatpush2.msra.mxu0 0.0
    %762 = vmatprep.subr.mxu0 0.0
    %763 = vmatpush2.msra.mxu0 0.0
    %764 = vmatprep.subr.mxu0 0.0
    %765 = vmatpush2.msra.mxu0 0.0
    %766 = vmatprep.subr.mxu0 0.0
    %767 = vmatpush2.msra.mxu0 0.0
    %768 = vmatprep.subr.mxu0 0.0
    %769 = vmatpush2.msra.mxu0 0.0
    %770 = vmatprep.subr.mxu0 0.0
    %771 = vmatpush2.msra.mxu0 0.0
    %772 = vmatprep.mubr.f32.mxu0 0.0
    %773 = vmatmul.mubr.f32.gmra.mxu0 %v706
    %v774 = vpop.f32.mrf.mxu0
    %v775 = vadd.f32 0.0, %v774
    %v776 = vpop.f32.mrf.mxu0
    %777 = vdwg.mxu0
    %v778 = vadd.f32 %v702, %v775
    %v779 = vxor.u32 %v778, 2147483648
    %v780 = vmul.f32 %v779, 1.442695
    %v781 = vpow.pop %v780
    %v782 = vadd.f32 %v781, 1.0
    %v783 = vrcp.pop %v782
    %v784 = vmul.f32 1.0, %v783
    %v785 = vadd.f32 %v775, %v390
    %787 = vrot.lane.b32.xlu0 %v785, 64
    %v788 = vpop.permute.xlu0 %787
    %v790 = vmul.f32 %v784, %v788
    %792 = vrot.lane.b32.xlu0 %v790, 64
    %v793 = vpop.permute.xlu0 %792
    %v795 = vadd.f32 %v702, %v793
    %v796 = vtanh.pop %v795
    %v797 = vsub.f32 %v521, %v796
    %799 = vrot.lane.b32.xlu0 %v797, 96
    %v800 = vpop.permute.xlu0 %799
    %v802 = vmul.f32 %v784, %v800
    %804 = vrot.lane.b32.xlu0 %v802, 32
    %v805 = vpop.permute.xlu0 %804
    %v807 = vadd.f32 %v796, %v805
    %808 = vmatprep.subr.mxu0 0.0
    %809 = vmatpush1.msra.mxu0 0.0
    %810 = vmatprep.subr.mxu0 0.0
    %811 = vmatpush1.msra.mxu0 0.0
    %812 = vmatprep.subr.mxu0 0.0
    %813 = vmatpush1.msra.mxu0 0.0
    %814 = vmatprep.subr.mxu0 0.0
    %815 = vmatpush1.msra.mxu0 0.0
    %816 = vmatprep.subr.mxu0 0.0
    %817 = vmatpush1.msra.mxu0 0.0
    %818 = vmatprep.subr.mxu0 0.0
    %819 = vmatpush1.msra.mxu0 0.0
    %820 = vmatprep.subr.mxu0 0.0
    %821 = vmatpush1.msra.mxu0 0.0
    %822 = vmatprep.subr.mxu0 0.0
    %823 = vmatpush1.msra.mxu0 0.0
    %824 = vmatprep.subr.mxu0 0.0
    %825 = vmatpush1.msra.mxu0 0.0
    %826 = vmatprep.subr.mxu0 0.0
    %827 = vmatpush1.msra.mxu0 0.0
    %828 = vmatprep.subr.mxu0 0.0
    %829 = vmatpush1.msra.mxu0 0.0
    %830 = vmatprep.subr.mxu0 0.0
    %831 = vmatpush1.msra.mxu0 0.0
    %832 = vmatprep.subr.mxu0 0.0
    %833 = vmatpush1.msra.mxu0 %v131
    %834 = vmatprep.subr.mxu0 0.0
    %835 = vmatpush1.msra.mxu0 %v130
    %836 = vmatprep.subr.mxu0 0.0
    %837 = vmatpush1.msra.mxu0 %v129
    %838 = vmatprep.subr.mxu0 0.0
    %839 = vmatpush1.msra.mxu0 %v128
    %840 = vmatprep.subr.mxu0 0.0
    %841 = vmatpush2.msra.mxu0 0.0
    %842 = vmatprep.subr.mxu0 0.0
    %843 = vmatpush2.msra.mxu0 0.0
    %844 = vmatprep.subr.mxu0 0.0
    %845 = vmatpush2.msra.mxu0 0.0
    %846 = vmatprep.subr.mxu0 0.0
    %847 = vmatpush2.msra.mxu0 0.0
    %848 = vmatprep.subr.mxu0 0.0
    %849 = vmatpush2.msra.mxu0 0.0
    %850 = vmatprep.subr.mxu0 0.0
    %851 = vmatpush2.msra.mxu0 0.0
    %852 = vmatprep.subr.mxu0 0.0
    %853 = vmatpush2.msra.mxu0 0.0
    %854 = vmatprep.subr.mxu0 0.0
    %855 = vmatpush2.msra.mxu0 0.0
    %856 = vmatprep.subr.mxu0 0.0
    %857 = vmatpush2.msra.mxu0 0.0
    %858 = vmatprep.subr.mxu0 0.0
    %859 = vmatpush2.msra.mxu0 0.0
    %860 = vmatprep.subr.mxu0 0.0
    %861 = vmatpush2.msra.mxu0 0.0
    %862 = vmatprep.subr.mxu0 0.0
    %863 = vmatpush2.msra.mxu0 0.0
    %864 = vmatprep.subr.mxu0 0.0
    %865 = vmatpush2.msra.mxu0 0.0
    %866 = vmatprep.subr.mxu0 0.0
    %867 = vmatpush2.msra.mxu0 0.0
    %868 = vmatprep.subr.mxu0 0.0
    %869 = vmatpush2.msra.mxu0 0.0
    %870 = vmatprep.subr.mxu0 0.0
    %871 = vmatpush2.msra.mxu0 0.0
    %872 = vmatprep.mubr.f32.mxu0 0.0
    %873 = vmatmul.mubr.f32.gmra.mxu0 %v706
    %v874 = vpop.f32.mrf.mxu0
    %v875 = vadd.f32 %v526, %v874
    %v876 = vpop.f32.mrf.mxu0
    %877 = vdwg.mxu0
    %879 = vrot.lane.b32.xlu0 %v700, 64
    %v880 = vpop.permute.xlu0 %879
    %v881 = vsel %vm308, %v880, 0
    %883 = vmatprep.subr.mxu0 0.0
    %884 = vmatpush1.msra.mxu0 0.0
    %885 = vmatprep.subr.mxu0 0.0
    %886 = vmatpush1.msra.mxu0 0.0
    %887 = vmatprep.subr.mxu0 0.0
    %888 = vmatpush1.msra.mxu0 0.0
    %889 = vmatprep.subr.mxu0 0.0
    %890 = vmatpush1.msra.mxu0 0.0
    %891 = vmatprep.subr.mxu0 0.0
    %892 = vmatpush1.msra.mxu0 0.0
    %893 = vmatprep.subr.mxu0 0.0
    %894 = vmatpush1.msra.mxu0 0.0
    %895 = vmatprep.subr.mxu0 0.0
    %896 = vmatpush1.msra.mxu0 0.0
    %897 = vmatprep.subr.mxu0 0.0
    %898 = vmatpush1.msra.mxu0 0.0
    %899 = vmatprep.subr.mxu0 0.0
    %900 = vmatpush1.msra.mxu0 0.0
    %901 = vmatprep.subr.mxu0 0.0
    %902 = vmatpush1.msra.mxu0 0.0
    %903 = vmatprep.subr.mxu0 0.0
    %904 = vmatpush1.msra.mxu0 0.0
    %905 = vmatprep.subr.mxu0 0.0
    %906 = vmatpush1.msra.mxu0 0.0
    %907 = vmatprep.subr.mxu0 0.0
    %908 = vmatpush1.msra.mxu0 %v139
    %909 = vmatprep.subr.mxu0 0.0
    %910 = vmatpush1.msra.mxu0 %v138
    %911 = vmatprep.subr.mxu0 0.0
    %912 = vmatpush1.msra.mxu0 %v137
    %913 = vmatprep.subr.mxu0 0.0
    %914 = vmatpush1.msra.mxu0 %v136
    %915 = vmatprep.subr.mxu0 0.0
    %916 = vmatpush2.msra.mxu0 0.0
    %917 = vmatprep.subr.mxu0 0.0
    %918 = vmatpush2.msra.mxu0 0.0
    %919 = vmatprep.subr.mxu0 0.0
    %920 = vmatpush2.msra.mxu0 0.0
    %921 = vmatprep.subr.mxu0 0.0
    %922 = vmatpush2.msra.mxu0 0.0
    %923 = vmatprep.subr.mxu0 0.0
    %924 = vmatpush2.msra.mxu0 0.0
    %925 = vmatprep.subr.mxu0 0.0
    %926 = vmatpush2.msra.mxu0 0.0
    %927 = vmatprep.subr.mxu0 0.0
    %928 = vmatpush2.msra.mxu0 0.0
    %929 = vmatprep.subr.mxu0 0.0
    %930 = vmatpush2.msra.mxu0 0.0
    %931 = vmatprep.subr.mxu0 0.0
    %932 = vmatpush2.msra.mxu0 0.0
    %933 = vmatprep.subr.mxu0 0.0
    %934 = vmatpush2.msra.mxu0 0.0
    %935 = vmatprep.subr.mxu0 0.0
    %936 = vmatpush2.msra.mxu0 0.0
    %937 = vmatprep.subr.mxu0 0.0
    %938 = vmatpush2.msra.mxu0 0.0
    %939 = vmatprep.subr.mxu0 0.0
    %940 = vmatpush2.msra.mxu0 0.0
    %941 = vmatprep.subr.mxu0 0.0
    %942 = vmatpush2.msra.mxu0 0.0
    %943 = vmatprep.subr.mxu0 0.0
    %944 = vmatpush2.msra.mxu0 0.0
    %945 = vmatprep.subr.mxu0 0.0
    %946 = vmatpush2.msra.mxu0 0.0
    %947 = vmatprep.mubr.f32.mxu0 0.0
    %948 = vmatmul.mubr.f32.gmra.mxu0 %v881
    %v949 = vpop.f32.mrf.mxu0
    %v950 = vadd.f32 0.0, %v949
    %v951 = vpop.f32.mrf.mxu0
    %952 = vdwg.mxu0
    %v953 = vadd.f32 %v875, %v950
    %v954 = vxor.u32 %v953, 2147483648
    %v955 = vmul.f32 %v954, 1.442695
    %v956 = vpow.pop %v955
    %v957 = vadd.f32 %v956, 1.0
    %v958 = vrcp.pop %v957
    %v959 = vmul.f32 1.0, %v958
    %v960 = vadd.f32 %v950, %v676
    %962 = vrot.lane.b32.xlu0 %v960, 64
    %v963 = vpop.permute.xlu0 %962
    %v965 = vmul.f32 %v959, %v963
    %967 = vrot.lane.b32.xlu0 %v965, 64
    %v968 = vpop.permute.xlu0 %967
    %v970 = vadd.f32 %v875, %v968
    %v971 = vtanh.pop %v970
    %v972 = vsub.f32 %v700, %v971
    %974 = vrot.lane.b32.xlu0 %v972, 96
    %v975 = vpop.permute.xlu0 %974
    %v977 = vmul.f32 %v959, %v975
    %979 = vrot.lane.b32.xlu0 %v977, 32
    %v980 = vpop.permute.xlu0 %979
    %v982 = vadd.f32 %v971, %v980
    %s983 = scalar_lea.vmem [#allocation2], 24
    %v984 = vld [vmem:[%s983] sm:$0xff]
    %986 = vrot.lane.b32.xlu0 %v807, 64
    %v987 = vpop.permute.xlu0 %986
    %v988 = vsel %vm308, %v987, 0
    %990 = vmatprep.subr.mxu0 0.0
    %991 = vmatpush1.msra.mxu0 0.0
    %992 = vmatprep.subr.mxu0 0.0
    %993 = vmatpush1.msra.mxu0 0.0
    %994 = vmatprep.subr.mxu0 0.0
    %995 = vmatpush1.msra.mxu0 0.0
    %996 = vmatprep.subr.mxu0 0.0
    %997 = vmatpush1.msra.mxu0 0.0
    %998 = vmatprep.subr.mxu0 0.0
    %999 = vmatpush1.msra.mxu0 0.0
    %1000 = vmatprep.subr.mxu0 0.0
    %1001 = vmatpush1.msra.mxu0 0.0
    %1002 = vmatprep.subr.mxu0 0.0
    %1003 = vmatpush1.msra.mxu0 0.0
    %1004 = vmatprep.subr.mxu0 0.0
    %1005 = vmatpush1.msra.mxu0 0.0
    %1006 = vmatprep.subr.mxu0 0.0
    %1007 = vmatpush1.msra.mxu0 0.0
    %1008 = vmatprep.subr.mxu0 0.0
    %1009 = vmatpush1.msra.mxu0 0.0
    %1010 = vmatprep.subr.mxu0 0.0
    %1011 = vmatpush1.msra.mxu0 0.0
    %1012 = vmatprep.subr.mxu0 0.0
    %1013 = vmatpush1.msra.mxu0 0.0
    %1014 = vmatprep.subr.mxu0 0.0
    %1015 = vmatpush1.msra.mxu0 %v135
    %1016 = vmatprep.subr.mxu0 0.0
    %1017 = vmatpush1.msra.mxu0 %v134
    %1018 = vmatprep.subr.mxu0 0.0
    %1019 = vmatpush1.msra.mxu0 %v133
    %1020 = vmatprep.subr.mxu0 0.0
    %1021 = vmatpush1.msra.mxu0 %v132
    %1022 = vmatprep.subr.mxu0 0.0
    %1023 = vmatpush2.msra.mxu0 0.0
    %1024 = vmatprep.subr.mxu0 0.0
    %1025 = vmatpush2.msra.mxu0 0.0
    %1026 = vmatprep.subr.mxu0 0.0
    %1027 = vmatpush2.msra.mxu0 0.0
    %1028 = vmatprep.subr.mxu0 0.0
    %1029 = vmatpush2.msra.mxu0 0.0
    %1030 = vmatprep.subr.mxu0 0.0
    %1031 = vmatpush2.msra.mxu0 0.0
    %1032 = vmatprep.subr.mxu0 0.0
    %1033 = vmatpush2.msra.mxu0 0.0
    %1034 = vmatprep.subr.mxu0 0.0
    %1035 = vmatpush2.msra.mxu0 0.0
    %1036 = vmatprep.subr.mxu0 0.0
    %1037 = vmatpush2.msra.mxu0 0.0
    %1038 = vmatprep.subr.mxu0 0.0
    %1039 = vmatpush2.msra.mxu0 0.0
    %1040 = vmatprep.subr.mxu0 0.0
    %1041 = vmatpush2.msra.mxu0 0.0
    %1042 = vmatprep.subr.mxu0 0.0
    %1043 = vmatpush2.msra.mxu0 0.0
    %1044 = vmatprep.subr.mxu0 0.0
    %1045 = vmatpush2.msra.mxu0 0.0
    %1046 = vmatprep.subr.mxu0 0.0
    %1047 = vmatpush2.msra.mxu0 0.0
    %1048 = vmatprep.subr.mxu0 0.0
    %1049 = vmatpush2.msra.mxu0 0.0
    %1050 = vmatprep.subr.mxu0 0.0
    %1051 = vmatpush2.msra.mxu0 0.0
    %1052 = vmatprep.subr.mxu0 0.0
    %1053 = vmatpush2.msra.mxu0 0.0
    %1054 = vmatprep.mubr.f32.mxu0 0.0
    %1055 = vmatmul.mubr.f32.gmra.mxu0 %v988
    %v1056 = vpop.f32.mrf.mxu0
    %v1057 = vadd.f32 0.0, %v1056
    %v1058 = vpop.f32.mrf.mxu0
    %1059 = vdwg.mxu0
    %v1060 = vadd.f32 %v984, %v1057
    %v1061 = vxor.u32 %v1060, 2147483648
    %v1062 = vmul.f32 %v1061, 1.442695
    %v1063 = vpow.pop %v1062
    %v1064 = vadd.f32 %v1063, 1.0
    %v1065 = vrcp.pop %v1064
    %v1066 = vmul.f32 1.0, %v1065
    %v1067 = vadd.f32 %v1057, %v390
    %1069 = vrot.lane.b32.xlu0 %v1067, 64
    %v1070 = vpop.permute.xlu0 %1069
    %v1072 = vmul.f32 %v1066, %v1070
    %1074 = vrot.lane.b32.xlu0 %v1072, 64
    %v1075 = vpop.permute.xlu0 %1074
    %v1077 = vadd.f32 %v984, %v1075
    %v1078 = vtanh.pop %v1077
    %v1079 = vsub.f32 %v807, %v1078
    %1081 = vrot.lane.b32.xlu0 %v1079, 96
    %v1082 = vpop.permute.xlu0 %1081
    %v1084 = vmul.f32 %v1066, %v1082
    %1086 = vrot.lane.b32.xlu0 %v1084, 32
    %v1087 = vpop.permute.xlu0 %1086
    %v1089 = vadd.f32 %v1078, %v1087
    %1090 = vmatprep.subr.mxu0 0.0
    %1091 = vmatpush1.msra.mxu0 0.0
    %1092 = vmatprep.subr.mxu0 0.0
    %1093 = vmatpush1.msra.mxu0 0.0
    %1094 = vmatprep.subr.mxu0 0.0
    %1095 = vmatpush1.msra.mxu0 0.0
    %1096 = vmatprep.subr.mxu0 0.0
    %1097 = vmatpush1.msra.mxu0 0.0
    %1098 = vmatprep.subr.mxu0 0.0
    %1099 = vmatpush1.msra.mxu0 0.0
    %1100 = vmatprep.subr.mxu0 0.0
    %1101 = vmatpush1.msra.mxu0 0.0
    %1102 = vmatprep.subr.mxu0 0.0
    %1103 = vmatpush1.msra.mxu0 0.0
    %1104 = vmatprep.subr.mxu0 0.0
    %1105 = vmatpush1.msra.mxu0 0.0
    %1106 = vmatprep.subr.mxu0 0.0
    %1107 = vmatpush1.msra.mxu0 0.0
    %1108 = vmatprep.subr.mxu0 0.0
    %1109 = vmatpush1.msra.mxu0 0.0
    %1110 = vmatprep.subr.mxu0 0.0
    %1111 = vmatpush1.msra.mxu0 0.0
    %1112 = vmatprep.subr.mxu0 0.0
    %1113 = vmatpush1.msra.mxu0 0.0
    %1114 = vmatprep.subr.mxu0 0.0
    %1115 = vmatpush1.msra.mxu0 %v131
    %1116 = vmatprep.subr.mxu0 0.0
    %1117 = vmatpush1.msra.mxu0 %v130
    %1118 = vmatprep.subr.mxu0 0.0
    %1119 = vmatpush1.msra.mxu0 %v129
    %1120 = vmatprep.subr.mxu0 0.0
    %1121 = vmatpush1.msra.mxu0 %v128
    %1122 = vmatprep.subr.mxu0 0.0
    %1123 = vmatpush2.msra.mxu0 0.0
    %1124 = vmatprep.subr.mxu0 0.0
    %1125 = vmatpush2.msra.mxu0 0.0
    %1126 = vmatprep.subr.mxu0 0.0
    %1127 = vmatpush2.msra.mxu0 0.0
    %1128 = vmatprep.subr.mxu0 0.0
    %1129 = vmatpush2.msra.mxu0 0.0
    %1130 = vmatprep.subr.mxu0 0.0
    %1131 = vmatpush2.msra.mxu0 0.0
    %1132 = vmatprep.subr.mxu0 0.0
    %1133 = vmatpush2.msra.mxu0 0.0
    %1134 = vmatprep.subr.mxu0 0.0
    %1135 = vmatpush2.msra.mxu0 0.0
    %1136 = vmatprep.subr.mxu0 0.0
    %1137 = vmatpush2.msra.mxu0 0.0
    %1138 = vmatprep.subr.mxu0 0.0
    %1139 = vmatpush2.msra.mxu0 0.0
    %1140 = vmatprep.subr.mxu0 0.0
    %1141 = vmatpush2.msra.mxu0 0.0
    %1142 = vmatprep.subr.mxu0 0.0
    %1143 = vmatpush2.msra.mxu0 0.0
    %1144 = vmatprep.subr.mxu0 0.0
    %1145 = vmatpush2.msra.mxu0 0.0
    %1146 = vmatprep.subr.mxu0 0.0
    %1147 = vmatpush2.msra.mxu0 0.0
    %1148 = vmatprep.subr.mxu0 0.0
    %1149 = vmatpush2.msra.mxu0 0.0
    %1150 = vmatprep.subr.mxu0 0.0
    %1151 = vmatpush2.msra.mxu0 0.0
    %1152 = vmatprep.subr.mxu0 0.0
    %1153 = vmatpush2.msra.mxu0 0.0
    %1154 = vmatprep.mubr.f32.mxu0 0.0
    %1155 = vmatmul.mubr.f32.gmra.mxu0 %v988
    %v1156 = vpop.f32.mrf.mxu0
    %v1157 = vadd.f32 %v526, %v1156
    %v1158 = vpop.f32.mrf.mxu0
    %1159 = vdwg.mxu0
    %1161 = vrot.lane.b32.xlu0 %v982, 64
    %v1162 = vpop.permute.xlu0 %1161
    %v1163 = vsel %vm308, %v1162, 0
    %1165 = vmatprep.subr.mxu0 0.0
    %1166 = vmatpush1.msra.mxu0 0.0
    %1167 = vmatprep.subr.mxu0 0.0
    %1168 = vmatpush1.msra.mxu0 0.0
    %1169 = vmatprep.subr.mxu0 0.0
    %1170 = vmatpush1.msra.mxu0 0.0
    %1171 = vmatprep.subr.mxu0 0.0
    %1172 = vmatpush1.msra.mxu0 0.0
    %1173 = vmatprep.subr.mxu0 0.0
    %1174 = vmatpush1.msra.mxu0 0.0
    %1175 = vmatprep.subr.mxu0 0.0
    %1176 = vmatpush1.msra.mxu0 0.0
    %1177 = vmatprep.subr.mxu0 0.0
    %1178 = vmatpush1.msra.mxu0 0.0
    %1179 = vmatprep.subr.mxu0 0.0
    %1180 = vmatpush1.msra.mxu0 0.0
    %1181 = vmatprep.subr.mxu0 0.0
    %1182 = vmatpush1.msra.mxu0 0.0
    %1183 = vmatprep.subr.mxu0 0.0
    %1184 = vmatpush1.msra.mxu0 0.0
    %1185 = vmatprep.subr.mxu0 0.0
    %1186 = vmatpush1.msra.mxu0 0.0
    %1187 = vmatprep.subr.mxu0 0.0
    %1188 = vmatpush1.msra.mxu0 0.0
    %1189 = vmatprep.subr.mxu0 0.0
    %1190 = vmatpush1.msra.mxu0 %v139
    %1191 = vmatprep.subr.mxu0 0.0
    %1192 = vmatpush1.msra.mxu0 %v138
    %1193 = vmatprep.subr.mxu0 0.0
    %1194 = vmatpush1.msra.mxu0 %v137
    %1195 = vmatprep.subr.mxu0 0.0
    %1196 = vmatpush1.msra.mxu0 %v136
    %1197 = vmatprep.subr.mxu0 0.0
    %1198 = vmatpush2.msra.mxu0 0.0
    %1199 = vmatprep.subr.mxu0 0.0
    %1200 = vmatpush2.msra.mxu0 0.0
    %1201 = vmatprep.subr.mxu0 0.0
    %1202 = vmatpush2.msra.mxu0 0.0
    %1203 = vmatprep.subr.mxu0 0.0
    %1204 = vmatpush2.msra.mxu0 0.0
    %1205 = vmatprep.subr.mxu0 0.0
    %1206 = vmatpush2.msra.mxu0 0.0
    %1207 = vmatprep.subr.mxu0 0.0
    %1208 = vmatpush2.msra.mxu0 0.0
    %1209 = vmatprep.subr.mxu0 0.0
    %1210 = vmatpush2.msra.mxu0 0.0
    %1211 = vmatprep.subr.mxu0 0.0
    %1212 = vmatpush2.msra.mxu0 0.0
    %1213 = vmatprep.subr.mxu0 0.0
    %1214 = vmatpush2.msra.mxu0 0.0
    %1215 = vmatprep.subr.mxu0 0.0
    %1216 = vmatpush2.msra.mxu0 0.0
    %1217 = vmatprep.subr.mxu0 0.0
    %1218 = vmatpush2.msra.mxu0 0.0
    %1219 = vmatprep.subr.mxu0 0.0
    %1220 = vmatpush2.msra.mxu0 0.0
    %1221 = vmatprep.subr.mxu0 0.0
    %1222 = vmatpush2.msra.mxu0 0.0
    %1223 = vmatprep.subr.mxu0 0.0
    %1224 = vmatpush2.msra.mxu0 0.0
    %1225 = vmatprep.subr.mxu0 0.0
    %1226 = vmatpush2.msra.mxu0 0.0
    %1227 = vmatprep.subr.mxu0 0.0
    %1228 = vmatpush2.msra.mxu0 0.0
    %1229 = vmatprep.mubr.f32.mxu0 0.0
    %1230 = vmatmul.mubr.f32.gmra.mxu0 %v1163
    %v1231 = vpop.f32.mrf.mxu0
    %v1232 = vadd.f32 0.0, %v1231
    %v1233 = vpop.f32.mrf.mxu0
    %1234 = vdwg.mxu0
    %v1235 = vadd.f32 %v1157, %v1232
    %v1236 = vxor.u32 %v1235, 2147483648
    %v1237 = vmul.f32 %v1236, 1.442695
    %v1238 = vpow.pop %v1237
    %v1239 = vadd.f32 %v1238, 1.0
    %v1240 = vrcp.pop %v1239
    %v1241 = vmul.f32 1.0, %v1240
    %v1242 = vadd.f32 %v1232, %v676
    %1244 = vrot.lane.b32.xlu0 %v1242, 64
    %v1245 = vpop.permute.xlu0 %1244
    %v1247 = vmul.f32 %v1241, %v1245
    %1249 = vrot.lane.b32.xlu0 %v1247, 64
    %v1250 = vpop.permute.xlu0 %1249
    %v1252 = vadd.f32 %v1157, %v1250
    %v1253 = vtanh.pop %v1252
    %v1254 = vsub.f32 %v982, %v1253
    %1256 = vrot.lane.b32.xlu0 %v1254, 96
    %v1257 = vpop.permute.xlu0 %1256
    %v1259 = vmul.f32 %v1241, %v1257
    %1261 = vrot.lane.b32.xlu0 %v1259, 32
    %v1262 = vpop.permute.xlu0 %1261
    %v1264 = vadd.f32 %v1253, %v1262
    %s1265 = scalar_lea.vmem [#allocation2], 32
    %v1266 = vld [vmem:[%s1265] sm:$0xff]
    %1268 = vrot.lane.b32.xlu0 %v1089, 64
    %v1269 = vpop.permute.xlu0 %1268
    %v1270 = vsel %vm308, %v1269, 0
    %1272 = vmatprep.subr.mxu0 0.0
    %1273 = vmatpush1.msra.mxu0 0.0
    %1274 = vmatprep.subr.mxu0 0.0
    %1275 = vmatpush1.msra.mxu0 0.0
    %1276 = vmatprep.subr.mxu0 0.0
    %1277 = vmatpush1.msra.mxu0 0.0
    %1278 = vmatprep.subr.mxu0 0.0
    %1279 = vmatpush1.msra.mxu0 0.0
    %1280 = vmatprep.subr.mxu0 0.0
    %1281 = vmatpush1.msra.mxu0 0.0
    %1282 = vmatprep.subr.mxu0 0.0
    %1283 = vmatpush1.msra.mxu0 0.0
    %1284 = vmatprep.subr.mxu0 0.0
    %1285 = vmatpush1.msra.mxu0 0.0
    %1286 = vmatprep.subr.mxu0 0.0
    %1287 = vmatpush1.msra.mxu0 0.0
    %1288 = vmatprep.subr.mxu0 0.0
    %1289 = vmatpush1.msra.mxu0 0.0
    %1290 = vmatprep.subr.mxu0 0.0
    %1291 = vmatpush1.msra.mxu0 0.0
    %1292 = vmatprep.subr.mxu0 0.0
    %1293 = vmatpush1.msra.mxu0 0.0
    %1294 = vmatprep.subr.mxu0 0.0
    %1295 = vmatpush1.msra.mxu0 0.0
    %1296 = vmatprep.subr.mxu0 0.0
    %1297 = vmatpush1.msra.mxu0 %v135
    %1298 = vmatprep.subr.mxu0 0.0
    %1299 = vmatpush1.msra.mxu0 %v134
    %1300 = vmatprep.subr.mxu0 0.0
    %1301 = vmatpush1.msra.mxu0 %v133
    %1302 = vmatprep.subr.mxu0 0.0
    %1303 = vmatpush1.msra.mxu0 %v132
    %1304 = vmatprep.subr.mxu0 0.0
    %1305 = vmatpush2.msra.mxu0 0.0
    %1306 = vmatprep.subr.mxu0 0.0
    %1307 = vmatpush2.msra.mxu0 0.0
    %1308 = vmatprep.subr.mxu0 0.0
    %1309 = vmatpush2.msra.mxu0 0.0
    %1310 = vmatprep.subr.mxu0 0.0
    %1311 = vmatpush2.msra.mxu0 0.0
    %1312 = vmatprep.subr.mxu0 0.0
    %1313 = vmatpush2.msra.mxu0 0.0
    %1314 = vmatprep.subr.mxu0 0.0
    %1315 = vmatpush2.msra.mxu0 0.0
    %1316 = vmatprep.subr.mxu0 0.0
    %1317 = vmatpush2.msra.mxu0 0.0
    %1318 = vmatprep.subr.mxu0 0.0
    %1319 = vmatpush2.msra.mxu0 0.0
    %1320 = vmatprep.subr.mxu0 0.0
    %1321 = vmatpush2.msra.mxu0 0.0
    %1322 = vmatprep.subr.mxu0 0.0
    %1323 = vmatpush2.msra.mxu0 0.0
    %1324 = vmatprep.subr.mxu0 0.0
    %1325 = vmatpush2.msra.mxu0 0.0
    %1326 = vmatprep.subr.mxu0 0.0
    %1327 = vmatpush2.msra.mxu0 0.0
    %1328 = vmatprep.subr.mxu0 0.0
    %1329 = vmatpush2.msra.mxu0 0.0
    %1330 = vmatprep.subr.mxu0 0.0
    %1331 = vmatpush2.msra.mxu0 0.0
    %1332 = vmatprep.subr.mxu0 0.0
    %1333 = vmatpush2.msra.mxu0 0.0
    %1334 = vmatprep.subr.mxu0 0.0
    %1335 = vmatpush2.msra.mxu0 0.0
    %1336 = vmatprep.mubr.f32.mxu0 0.0
    %1337 = vmatmul.mubr.f32.gmra.mxu0 %v1270
    %v1338 = vpop.f32.mrf.mxu0
    %v1339 = vadd.f32 0.0, %v1338
    %v1340 = vpop.f32.mrf.mxu0
    %1341 = vdwg.mxu0
    %v1342 = vadd.f32 %v1266, %v1339
    %v1343 = vxor.u32 %v1342, 2147483648
    %v1344 = vmul.f32 %v1343, 1.442695
    %v1345 = vpow.pop %v1344
    %v1346 = vadd.f32 %v1345, 1.0
    %v1347 = vrcp.pop %v1346
    %v1348 = vmul.f32 1.0, %v1347
    %v1349 = vadd.f32 %v1339, %v390
    %1351 = vrot.lane.b32.xlu0 %v1349, 64
    %v1352 = vpop.permute.xlu0 %1351
    %v1354 = vmul.f32 %v1348, %v1352
    %1356 = vrot.lane.b32.xlu0 %v1354, 64
    %v1357 = vpop.permute.xlu0 %1356
    %v1359 = vadd.f32 %v1266, %v1357
    %v1360 = vtanh.pop %v1359
    %v1361 = vsub.f32 %v1089, %v1360
    %1363 = vrot.lane.b32.xlu0 %v1361, 96
    %v1364 = vpop.permute.xlu0 %1363
    %v1366 = vmul.f32 %v1348, %v1364
    %1368 = vrot.lane.b32.xlu0 %v1366, 32
    %v1369 = vpop.permute.xlu0 %1368
    %v1371 = vadd.f32 %v1360, %v1369
    %1372 = vmatprep.subr.mxu0 0.0
    %1373 = vmatpush1.msra.mxu0 0.0
    %1374 = vmatprep.subr.mxu0 0.0
    %1375 = vmatpush1.msra.mxu0 0.0
    %1376 = vmatprep.subr.mxu0 0.0
    %1377 = vmatpush1.msra.mxu0 0.0
    %1378 = vmatprep.subr.mxu0 0.0
    %1379 = vmatpush1.msra.mxu0 0.0
    %1380 = vmatprep.subr.mxu0 0.0
    %1381 = vmatpush1.msra.mxu0 0.0
    %1382 = vmatprep.subr.mxu0 0.0
    %1383 = vmatpush1.msra.mxu0 0.0
    %1384 = vmatprep.subr.mxu0 0.0
    %1385 = vmatpush1.msra.mxu0 0.0
    %1386 = vmatprep.subr.mxu0 0.0
    %1387 = vmatpush1.msra.mxu0 0.0
    %1388 = vmatprep.subr.mxu0 0.0
    %1389 = vmatpush1.msra.mxu0 0.0
    %1390 = vmatprep.subr.mxu0 0.0
    %1391 = vmatpush1.msra.mxu0 0.0
    %1392 = vmatprep.subr.mxu0 0.0
    %1393 = vmatpush1.msra.mxu0 0.0
    %1394 = vmatprep.subr.mxu0 0.0
    %1395 = vmatpush1.msra.mxu0 0.0
    %1396 = vmatprep.subr.mxu0 0.0
    %1397 = vmatpush1.msra.mxu0 %v131
    %1398 = vmatprep.subr.mxu0 0.0
    %1399 = vmatpush1.msra.mxu0 %v130
    %1400 = vmatprep.subr.mxu0 0.0
    %1401 = vmatpush1.msra.mxu0 %v129
    %1402 = vmatprep.subr.mxu0 0.0
    %1403 = vmatpush1.msra.mxu0 %v128
    %1404 = vmatprep.subr.mxu0 0.0
    %1405 = vmatpush2.msra.mxu0 0.0
    %1406 = vmatprep.subr.mxu0 0.0
    %1407 = vmatpush2.msra.mxu0 0.0
    %1408 = vmatprep.subr.mxu0 0.0
    %1409 = vmatpush2.msra.mxu0 0.0
    %1410 = vmatprep.subr.mxu0 0.0
    %1411 = vmatpush2.msra.mxu0 0.0
    %1412 = vmatprep.subr.mxu0 0.0
    %1413 = vmatpush2.msra.mxu0 0.0
    %1414 = vmatprep.subr.mxu0 0.0
    %1415 = vmatpush2.msra.mxu0 0.0
    %1416 = vmatprep.subr.mxu0 0.0
    %1417 = vmatpush2.msra.mxu0 0.0
    %1418 = vmatprep.subr.mxu0 0.0
    %1419 = vmatpush2.msra.mxu0 0.0
    %1420 = vmatprep.subr.mxu0 0.0
    %1421 = vmatpush2.msra.mxu0 0.0
    %1422 = vmatprep.subr.mxu0 0.0
    %1423 = vmatpush2.msra.mxu0 0.0
    %1424 = vmatprep.subr.mxu0 0.0
    %1425 = vmatpush2.msra.mxu0 0.0
    %1426 = vmatprep.subr.mxu0 0.0
    %1427 = vmatpush2.msra.mxu0 0.0
    %1428 = vmatprep.subr.mxu0 0.0
    %1429 = vmatpush2.msra.mxu0 0.0
    %1430 = vmatprep.subr.mxu0 0.0
    %1431 = vmatpush2.msra.mxu0 0.0
    %1432 = vmatprep.subr.mxu0 0.0
    %1433 = vmatpush2.msra.mxu0 0.0
    %1434 = vmatprep.subr.mxu0 0.0
    %1435 = vmatpush2.msra.mxu0 0.0
    %1436 = vmatprep.mubr.f32.mxu0 0.0
    %1437 = vmatmul.mubr.f32.gmra.mxu0 %v1270
    %v1438 = vpop.f32.mrf.mxu0
    %v1439 = vadd.f32 %v526, %v1438
    %v1440 = vpop.f32.mrf.mxu0
    %1441 = vdwg.mxu0
    %1443 = vrot.lane.b32.xlu0 %v1264, 64
    %v1444 = vpop.permute.xlu0 %1443
    %v1445 = vsel %vm308, %v1444, 0
    %1447 = vmatprep.subr.mxu0 0.0
    %1448 = vmatpush1.msra.mxu0 0.0
    %1449 = vmatprep.subr.mxu0 0.0
    %1450 = vmatpush1.msra.mxu0 0.0
    %1451 = vmatprep.subr.mxu0 0.0
    %1452 = vmatpush1.msra.mxu0 0.0
    %1453 = vmatprep.subr.mxu0 0.0
    %1454 = vmatpush1.msra.mxu0 0.0
    %1455 = vmatprep.subr.mxu0 0.0
    %1456 = vmatpush1.msra.mxu0 0.0
    %1457 = vmatprep.subr.mxu0 0.0
    %1458 = vmatpush1.msra.mxu0 0.0
    %1459 = vmatprep.subr.mxu0 0.0
    %1460 = vmatpush1.msra.mxu0 0.0
    %1461 = vmatprep.subr.mxu0 0.0
    %1462 = vmatpush1.msra.mxu0 0.0
    %1463 = vmatprep.subr.mxu0 0.0
    %1464 = vmatpush1.msra.mxu0 0.0
    %1465 = vmatprep.subr.mxu0 0.0
    %1466 = vmatpush1.msra.mxu0 0.0
    %1467 = vmatprep.subr.mxu0 0.0
    %1468 = vmatpush1.msra.mxu0 0.0
    %1469 = vmatprep.subr.mxu0 0.0
    %1470 = vmatpush1.msra.mxu0 0.0
    %1471 = vmatprep.subr.mxu0 0.0
    %1472 = vmatpush1.msra.mxu0 %v139
    %1473 = vmatprep.subr.mxu0 0.0
    %1474 = vmatpush1.msra.mxu0 %v138
    %1475 = vmatprep.subr.mxu0 0.0
    %1476 = vmatpush1.msra.mxu0 %v137
    %1477 = vmatprep.subr.mxu0 0.0
    %1478 = vmatpush1.msra.mxu0 %v136
    %1479 = vmatprep.subr.mxu0 0.0
    %1480 = vmatpush2.msra.mxu0 0.0
    %1481 = vmatprep.subr.mxu0 0.0
    %1482 = vmatpush2.msra.mxu0 0.0
    %1483 = vmatprep.subr.mxu0 0.0
    %1484 = vmatpush2.msra.mxu0 0.0
    %1485 = vmatprep.subr.mxu0 0.0
    %1486 = vmatpush2.msra.mxu0 0.0
    %1487 = vmatprep.subr.mxu0 0.0
    %1488 = vmatpush2.msra.mxu0 0.0
    %1489 = vmatprep.subr.mxu0 0.0
    %1490 = vmatpush2.msra.mxu0 0.0
    %1491 = vmatprep.subr.mxu0 0.0
    %1492 = vmatpush2.msra.mxu0 0.0
    %1493 = vmatprep.subr.mxu0 0.0
    %1494 = vmatpush2.msra.mxu0 0.0
    %1495 = vmatprep.subr.mxu0 0.0
    %1496 = vmatpush2.msra.mxu0 0.0
    %1497 = vmatprep.subr.mxu0 0.0
    %1498 = vmatpush2.msra.mxu0 0.0
    %1499 = vmatprep.subr.mxu0 0.0
    %1500 = vmatpush2.msra.mxu0 0.0
    %1501 = vmatprep.subr.mxu0 0.0
    %1502 = vmatpush2.msra.mxu0 0.0
    %1503 = vmatprep.subr.mxu0 0.0
    %1504 = vmatpush2.msra.mxu0 0.0
    %1505 = vmatprep.subr.mxu0 0.0
    %1506 = vmatpush2.msra.mxu0 0.0
    %1507 = vmatprep.subr.mxu0 0.0
    %1508 = vmatpush2.msra.mxu0 0.0
    %1509 = vmatprep.subr.mxu0 0.0
    %1510 = vmatpush2.msra.mxu0 0.0
    %1511 = vmatprep.mubr.f32.mxu0 0.0
    %1512 = vmatmul.mubr.f32.gmra.mxu0 %v1445
    %v1513 = vpop.f32.mrf.mxu0
    %v1514 = vadd.f32 0.0, %v1513
    %v1515 = vpop.f32.mrf.mxu0
    %1516 = vdwg.mxu0
    %v1517 = vadd.f32 %v1439, %v1514
    %v1518 = vxor.u32 %v1517, 2147483648
    %v1519 = vmul.f32 %v1518, 1.442695
    %v1520 = vpow.pop %v1519
    %v1521 = vadd.f32 %v1520, 1.0
    %v1522 = vrcp.pop %v1521
    %v1523 = vmul.f32 1.0, %v1522
    %v1524 = vadd.f32 %v1514, %v676
    %1526 = vrot.lane.b32.xlu0 %v1524, 64
    %v1527 = vpop.permute.xlu0 %1526
    %v1529 = vmul.f32 %v1523, %v1527
    %1531 = vrot.lane.b32.xlu0 %v1529, 64
    %v1532 = vpop.permute.xlu0 %1531
    %v1534 = vadd.f32 %v1439, %v1532
    %v1535 = vtanh.pop %v1534
    %v1536 = vsub.f32 %v1264, %v1535
    %1538 = vrot.lane.b32.xlu0 %v1536, 96
    %v1539 = vpop.permute.xlu0 %1538
    %v1541 = vmul.f32 %v1523, %v1539
    %1543 = vrot.lane.b32.xlu0 %v1541, 32
    %v1544 = vpop.permute.xlu0 %1543
    %v1546 = vadd.f32 %v1535, %v1544
    %s1547 = scalar_lea.vmem [#allocation2], 40
    %v1548 = vld [vmem:[%s1547] sm:$0xff]
    %1550 = vrot.lane.b32.xlu0 %v1371, 64
    %v1551 = vpop.permute.xlu0 %1550
    %v1552 = vsel %vm308, %v1551, 0
    %1554 = vmatprep.subr.mxu0 0.0
    %1555 = vmatpush1.msra.mxu0 0.0
    %1556 = vmatprep.subr.mxu0 0.0
    %1557 = vmatpush1.msra.mxu0 0.0
    %1558 = vmatprep.subr.mxu0 0.0
    %1559 = vmatpush1.msra.mxu0 0.0
    %1560 = vmatprep.subr.mxu0 0.0
    %1561 = vmatpush1.msra.mxu0 0.0
    %1562 = vmatprep.subr.mxu0 0.0
    %1563 = vmatpush1.msra.mxu0 0.0
    %1564 = vmatprep.subr.mxu0 0.0
    %1565 = vmatpush1.msra.mxu0 0.0
    %1566 = vmatprep.subr.mxu0 0.0
    %1567 = vmatpush1.msra.mxu0 0.0
    %1568 = vmatprep.subr.mxu0 0.0
    %1569 = vmatpush1.msra.mxu0 0.0
    %1570 = vmatprep.subr.mxu0 0.0
    %1571 = vmatpush1.msra.mxu0 0.0
    %1572 = vmatprep.subr.mxu0 0.0
    %1573 = vmatpush1.msra.mxu0 0.0
    %1574 = vmatprep.subr.mxu0 0.0
    %1575 = vmatpush1.msra.mxu0 0.0
    %1576 = vmatprep.subr.mxu0 0.0
    %1577 = vmatpush1.msra.mxu0 0.0
    %1578 = vmatprep.subr.mxu0 0.0
    %1579 = vmatpush1.msra.mxu0 %v135
    %1580 = vmatprep.subr.mxu0 0.0
    %1581 = vmatpush1.msra.mxu0 %v134
    %1582 = vmatprep.subr.mxu0 0.0
    %1583 = vmatpush1.msra.mxu0 %v133
    %1584 = vmatprep.subr.mxu0 0.0
    %1585 = vmatpush1.msra.mxu0 %v132
    %1586 = vmatprep.subr.mxu0 0.0
    %1587 = vmatpush2.msra.mxu0 0.0
    %1588 = vmatprep.subr.mxu0 0.0
    %1589 = vmatpush2.msra.mxu0 0.0
    %1590 = vmatprep.subr.mxu0 0.0
    %1591 = vmatpush2.msra.mxu0 0.0
    %1592 = vmatprep.subr.mxu0 0.0
    %1593 = vmatpush2.msra.mxu0 0.0
    %1594 = vmatprep.subr.mxu0 0.0
    %1595 = vmatpush2.msra.mxu0 0.0
    %1596 = vmatprep.subr.mxu0 0.0
    %1597 = vmatpush2.msra.mxu0 0.0
    %1598 = vmatprep.subr.mxu0 0.0
    %1599 = vmatpush2.msra.mxu0 0.0
    %1600 = vmatprep.subr.mxu0 0.0
    %1601 = vmatpush2.msra.mxu0 0.0
    %1602 = vmatprep.subr.mxu0 0.0
    %1603 = vmatpush2.msra.mxu0 0.0
    %1604 = vmatprep.subr.mxu0 0.0
    %1605 = vmatpush2.msra.mxu0 0.0
    %1606 = vmatprep.subr.mxu0 0.0
    %1607 = vmatpush2.msra.mxu0 0.0
    %1608 = vmatprep.subr.mxu0 0.0
    %1609 = vmatpush2.msra.mxu0 0.0
    %1610 = vmatprep.subr.mxu0 0.0
    %1611 = vmatpush2.msra.mxu0 0.0
    %1612 = vmatprep.subr.mxu0 0.0
    %1613 = vmatpush2.msra.mxu0 0.0
    %1614 = vmatprep.subr.mxu0 0.0
    %1615 = vmatpush2.msra.mxu0 0.0
    %1616 = vmatprep.subr.mxu0 0.0
    %1617 = vmatpush2.msra.mxu0 0.0
    %1618 = vmatprep.mubr.f32.mxu0 0.0
    %1619 = vmatmul.mubr.f32.gmra.mxu0 %v1552
    %v1620 = vpop.f32.mrf.mxu0
    %v1621 = vadd.f32 0.0, %v1620
    %v1622 = vpop.f32.mrf.mxu0
    %1623 = vdwg.mxu0
    %v1624 = vadd.f32 %v1548, %v1621
    %v1625 = vxor.u32 %v1624, 2147483648
    %v1626 = vmul.f32 %v1625, 1.442695
    %v1627 = vpow.pop %v1626
    %v1628 = vadd.f32 %v1627, 1.0
    %v1629 = vrcp.pop %v1628
    %v1630 = vmul.f32 1.0, %v1629
    %v1631 = vadd.f32 %v1621, %v390
    %1633 = vrot.lane.b32.xlu0 %v1631, 64
    %v1634 = vpop.permute.xlu0 %1633
    %v1636 = vmul.f32 %v1630, %v1634
    %1638 = vrot.lane.b32.xlu0 %v1636, 64
    %v1639 = vpop.permute.xlu0 %1638
    %v1641 = vadd.f32 %v1548, %v1639
    %v1642 = vtanh.pop %v1641
    %v1643 = vsub.f32 %v1371, %v1642
    %1645 = vrot.lane.b32.xlu0 %v1643, 96
    %v1646 = vpop.permute.xlu0 %1645
    %v1648 = vmul.f32 %v1630, %v1646
    %1650 = vrot.lane.b32.xlu0 %v1648, 32
    %v1651 = vpop.permute.xlu0 %1650
    %v1653 = vadd.f32 %v1642, %v1651
    %1654 = vmatprep.subr.mxu0 0.0
    %1655 = vmatpush1.msra.mxu0 0.0
    %1656 = vmatprep.subr.mxu0 0.0
    %1657 = vmatpush1.msra.mxu0 0.0
    %1658 = vmatprep.subr.mxu0 0.0
    %1659 = vmatpush1.msra.mxu0 0.0
    %1660 = vmatprep.subr.mxu0 0.0
    %1661 = vmatpush1.msra.mxu0 0.0
    %1662 = vmatprep.subr.mxu0 0.0
    %1663 = vmatpush1.msra.mxu0 0.0
    %1664 = vmatprep.subr.mxu0 0.0
    %1665 = vmatpush1.msra.mxu0 0.0
    %1666 = vmatprep.subr.mxu0 0.0
    %1667 = vmatpush1.msra.mxu0 0.0
    %1668 = vmatprep.subr.mxu0 0.0
    %1669 = vmatpush1.msra.mxu0 0.0
    %1670 = vmatprep.subr.mxu0 0.0
    %1671 = vmatpush1.msra.mxu0 0.0
    %1672 = vmatprep.subr.mxu0 0.0
    %1673 = vmatpush1.msra.mxu0 0.0
    %1674 = vmatprep.subr.mxu0 0.0
    %1675 = vmatpush1.msra.mxu0 0.0
    %1676 = vmatprep.subr.mxu0 0.0
    %1677 = vmatpush1.msra.mxu0 0.0
    %1678 = vmatprep.subr.mxu0 0.0
    %1679 = vmatpush1.msra.mxu0 %v131
    %1680 = vmatprep.subr.mxu0 0.0
    %1681 = vmatpush1.msra.mxu0 %v130
    %1682 = vmatprep.subr.mxu0 0.0
    %1683 = vmatpush1.msra.mxu0 %v129
    %1684 = vmatprep.subr.mxu0 0.0
    %1685 = vmatpush1.msra.mxu0 %v128
    %1686 = vmatprep.subr.mxu0 0.0
    %1687 = vmatpush2.msra.mxu0 0.0
    %1688 = vmatprep.subr.mxu0 0.0
    %1689 = vmatpush2.msra.mxu0 0.0
    %1690 = vmatprep.subr.mxu0 0.0
    %1691 = vmatpush2.msra.mxu0 0.0
    %1692 = vmatprep.subr.mxu0 0.0
    %1693 = vmatpush2.msra.mxu0 0.0
    %1694 = vmatprep.subr.mxu0 0.0
    %1695 = vmatpush2.msra.mxu0 0.0
    %1696 = vmatprep.subr.mxu0 0.0
    %1697 = vmatpush2.msra.mxu0 0.0
    %1698 = vmatprep.subr.mxu0 0.0
    %1699 = vmatpush2.msra.mxu0 0.0
    %1700 = vmatprep.subr.mxu0 0.0
    %1701 = vmatpush2.msra.mxu0 0.0
    %1702 = vmatprep.subr.mxu0 0.0
    %1703 = vmatpush2.msra.mxu0 0.0
    %1704 = vmatprep.subr.mxu0 0.0
    %1705 = vmatpush2.msra.mxu0 0.0
    %1706 = vmatprep.subr.mxu0 0.0
    %1707 = vmatpush2.msra.mxu0 0.0
    %1708 = vmatprep.subr.mxu0 0.0
    %1709 = vmatpush2.msra.mxu0 0.0
    %1710 = vmatprep.subr.mxu0 0.0
    %1711 = vmatpush2.msra.mxu0 0.0
    %1712 = vmatprep.subr.mxu0 0.0
    %1713 = vmatpush2.msra.mxu0 0.0
    %1714 = vmatprep.subr.mxu0 0.0
    %1715 = vmatpush2.msra.mxu0 0.0
    %1716 = vmatprep.subr.mxu0 0.0
    %1717 = vmatpush2.msra.mxu0 0.0
    %1718 = vmatprep.mubr.f32.mxu0 0.0
    %1719 = vmatmul.mubr.f32.gmra.mxu0 %v1552
    %v1720 = vpop.f32.mrf.mxu0
    %v1721 = vadd.f32 %v526, %v1720
    %v1722 = vpop.f32.mrf.mxu0
    %1723 = vdwg.mxu0
    %1725 = vrot.lane.b32.xlu0 %v1546, 64
    %v1726 = vpop.permute.xlu0 %1725
    %v1727 = vsel %vm308, %v1726, 0
    %1729 = vmatprep.subr.mxu0 0.0
    %1730 = vmatpush1.msra.mxu0 0.0
    %1731 = vmatprep.subr.mxu0 0.0
    %1732 = vmatpush1.msra.mxu0 0.0
    %1733 = vmatprep.subr.mxu0 0.0
    %1734 = vmatpush1.msra.mxu0 0.0
    %1735 = vmatprep.subr.mxu0 0.0
    %1736 = vmatpush1.msra.mxu0 0.0
    %1737 = vmatprep.subr.mxu0 0.0
    %1738 = vmatpush1.msra.mxu0 0.0
    %1739 = vmatprep.subr.mxu0 0.0
    %1740 = vmatpush1.msra.mxu0 0.0
    %1741 = vmatprep.subr.mxu0 0.0
    %1742 = vmatpush1.msra.mxu0 0.0
    %1743 = vmatprep.subr.mxu0 0.0
    %1744 = vmatpush1.msra.mxu0 0.0
    %1745 = vmatprep.subr.mxu0 0.0
    %1746 = vmatpush1.msra.mxu0 0.0
    %1747 = vmatprep.subr.mxu0 0.0
    %1748 = vmatpush1.msra.mxu0 0.0
    %1749 = vmatprep.subr.mxu0 0.0
    %1750 = vmatpush1.msra.mxu0 0.0
    %1751 = vmatprep.subr.mxu0 0.0
    %1752 = vmatpush1.msra.mxu0 0.0
    %1753 = vmatprep.subr.mxu0 0.0
    %1754 = vmatpush1.msra.mxu0 %v139
    %1755 = vmatprep.subr.mxu0 0.0
    %1756 = vmatpush1.msra.mxu0 %v138
    %1757 = vmatprep.subr.mxu0 0.0
    %1758 = vmatpush1.msra.mxu0 %v137
    %1759 = vmatprep.subr.mxu0 0.0
    %1760 = vmatpush1.msra.mxu0 %v136
    %1761 = vmatprep.subr.mxu0 0.0
    %1762 = vmatpush2.msra.mxu0 0.0
    %1763 = vmatprep.subr.mxu0 0.0
    %1764 = vmatpush2.msra.mxu0 0.0
    %1765 = vmatprep.subr.mxu0 0.0
    %1766 = vmatpush2.msra.mxu0 0.0
    %1767 = vmatprep.subr.mxu0 0.0
    %1768 = vmatpush2.msra.mxu0 0.0
    %1769 = vmatprep.subr.mxu0 0.0
    %1770 = vmatpush2.msra.mxu0 0.0
    %1771 = vmatprep.subr.mxu0 0.0
    %1772 = vmatpush2.msra.mxu0 0.0
    %1773 = vmatprep.subr.mxu0 0.0
    %1774 = vmatpush2.msra.mxu0 0.0
    %1775 = vmatprep.subr.mxu0 0.0
    %1776 = vmatpush2.msra.mxu0 0.0
    %1777 = vmatprep.subr.mxu0 0.0
    %1778 = vmatpush2.msra.mxu0 0.0
    %1779 = vmatprep.subr.mxu0 0.0
    %1780 = vmatpush2.msra.mxu0 0.0
    %1781 = vmatprep.subr.mxu0 0.0
    %1782 = vmatpush2.msra.mxu0 0.0
    %1783 = vmatprep.subr.mxu0 0.0
    %1784 = vmatpush2.msra.mxu0 0.0
    %1785 = vmatprep.subr.mxu0 0.0
    %1786 = vmatpush2.msra.mxu0 0.0
    %1787 = vmatprep.subr.mxu0 0.0
    %1788 = vmatpush2.msra.mxu0 0.0
    %1789 = vmatprep.subr.mxu0 0.0
    %1790 = vmatpush2.msra.mxu0 0.0
    %1791 = vmatprep.subr.mxu0 0.0
    %1792 = vmatpush2.msra.mxu0 0.0
    %1793 = vmatprep.mubr.f32.mxu0 0.0
    %1794 = vmatmul.mubr.f32.gmra.mxu0 %v1727
    %v1795 = vpop.f32.mrf.mxu0
    %v1796 = vadd.f32 0.0, %v1795
    %v1797 = vpop.f32.mrf.mxu0
    %1798 = vdwg.mxu0
    %v1799 = vadd.f32 %v1721, %v1796
    %v1800 = vxor.u32 %v1799, 2147483648
    %v1801 = vmul.f32 %v1800, 1.442695
    %v1802 = vpow.pop %v1801
    %v1803 = vadd.f32 %v1802, 1.0
    %v1804 = vrcp.pop %v1803
    %v1805 = vmul.f32 1.0, %v1804
    %v1806 = vadd.f32 %v1796, %v676
    %1808 = vrot.lane.b32.xlu0 %v1806, 64
    %v1809 = vpop.permute.xlu0 %1808
    %v1811 = vmul.f32 %v1805, %v1809
    %1813 = vrot.lane.b32.xlu0 %v1811, 64
    %v1814 = vpop.permute.xlu0 %1813
    %v1816 = vadd.f32 %v1721, %v1814
    %v1817 = vtanh.pop %v1816
    %v1818 = vsub.f32 %v1546, %v1817
    %1820 = vrot.lane.b32.xlu0 %v1818, 96
    %v1821 = vpop.permute.xlu0 %1820
    %v1823 = vmul.f32 %v1805, %v1821
    %1825 = vrot.lane.b32.xlu0 %v1823, 32
    %v1826 = vpop.permute.xlu0 %1825
    %v1828 = vadd.f32 %v1817, %v1826
    %s1829 = scalar_lea.vmem [#allocation2], 48
    %v1830 = vld [vmem:[%s1829] sm:$0xff]
    %1832 = vrot.lane.b32.xlu0 %v1653, 64
    %v1833 = vpop.permute.xlu0 %1832
    %v1834 = vsel %vm308, %v1833, 0
    %1836 = vmatprep.subr.mxu0 0.0
    %1837 = vmatpush1.msra.mxu0 0.0
    %1838 = vmatprep.subr.mxu0 0.0
    %1839 = vmatpush1.msra.mxu0 0.0
    %1840 = vmatprep.subr.mxu0 0.0
    %1841 = vmatpush1.msra.mxu0 0.0
    %1842 = vmatprep.subr.mxu0 0.0
    %1843 = vmatpush1.msra.mxu0 0.0
    %1844 = vmatprep.subr.mxu0 0.0
    %1845 = vmatpush1.msra.mxu0 0.0
    %1846 = vmatprep.subr.mxu0 0.0
    %1847 = vmatpush1.msra.mxu0 0.0
    %1848 = vmatprep.subr.mxu0 0.0
    %1849 = vmatpush1.msra.mxu0 0.0
    %1850 = vmatprep.subr.mxu0 0.0
    %1851 = vmatpush1.msra.mxu0 0.0
    %1852 = vmatprep.subr.mxu0 0.0
    %1853 = vmatpush1.msra.mxu0 0.0
    %1854 = vmatprep.subr.mxu0 0.0
    %1855 = vmatpush1.msra.mxu0 0.0
    %1856 = vmatprep.subr.mxu0 0.0
    %1857 = vmatpush1.msra.mxu0 0.0
    %1858 = vmatprep.subr.mxu0 0.0
    %1859 = vmatpush1.msra.mxu0 0.0
    %1860 = vmatprep.subr.mxu0 0.0
    %1861 = vmatpush1.msra.mxu0 %v135
    %1862 = vmatprep.subr.mxu0 0.0
    %1863 = vmatpush1.msra.mxu0 %v134
    %1864 = vmatprep.subr.mxu0 0.0
    %1865 = vmatpush1.msra.mxu0 %v133
    %1866 = vmatprep.subr.mxu0 0.0
    %1867 = vmatpush1.msra.mxu0 %v132
    %1868 = vmatprep.subr.mxu0 0.0
    %1869 = vmatpush2.msra.mxu0 0.0
    %1870 = vmatprep.subr.mxu0 0.0
    %1871 = vmatpush2.msra.mxu0 0.0
    %1872 = vmatprep.subr.mxu0 0.0
    %1873 = vmatpush2.msra.mxu0 0.0
    %1874 = vmatprep.subr.mxu0 0.0
    %1875 = vmatpush2.msra.mxu0 0.0
    %1876 = vmatprep.subr.mxu0 0.0
    %1877 = vmatpush2.msra.mxu0 0.0
    %1878 = vmatprep.subr.mxu0 0.0
    %1879 = vmatpush2.msra.mxu0 0.0
    %1880 = vmatprep.subr.mxu0 0.0
    %1881 = vmatpush2.msra.mxu0 0.0
    %1882 = vmatprep.subr.mxu0 0.0
    %1883 = vmatpush2.msra.mxu0 0.0
    %1884 = vmatprep.subr.mxu0 0.0
    %1885 = vmatpush2.msra.mxu0 0.0
    %1886 = vmatprep.subr.mxu0 0.0
    %1887 = vmatpush2.msra.mxu0 0.0
    %1888 = vmatprep.subr.mxu0 0.0
    %1889 = vmatpush2.msra.mxu0 0.0
    %1890 = vmatprep.subr.mxu0 0.0
    %1891 = vmatpush2.msra.mxu0 0.0
    %1892 = vmatprep.subr.mxu0 0.0
    %1893 = vmatpush2.msra.mxu0 0.0
    %1894 = vmatprep.subr.mxu0 0.0
    %1895 = vmatpush2.msra.mxu0 0.0
    %1896 = vmatprep.subr.mxu0 0.0
    %1897 = vmatpush2.msra.mxu0 0.0
    %1898 = vmatprep.subr.mxu0 0.0
    %1899 = vmatpush2.msra.mxu0 0.0
    %1900 = vmatprep.mubr.f32.mxu0 0.0
    %1901 = vmatmul.mubr.f32.gmra.mxu0 %v1834
    %v1902 = vpop.f32.mrf.mxu0
    %v1903 = vadd.f32 0.0, %v1902
    %v1904 = vpop.f32.mrf.mxu0
    %1905 = vdwg.mxu0
    %v1906 = vadd.f32 %v1830, %v1903
    %v1907 = vxor.u32 %v1906, 2147483648
    %v1908 = vmul.f32 %v1907, 1.442695
    %v1909 = vpow.pop %v1908
    %v1910 = vadd.f32 %v1909, 1.0
    %v1911 = vrcp.pop %v1910
    %v1912 = vmul.f32 1.0, %v1911
    %v1913 = vadd.f32 %v1903, %v390
    %1915 = vrot.lane.b32.xlu0 %v1913, 64
    %v1916 = vpop.permute.xlu0 %1915
    %v1918 = vmul.f32 %v1912, %v1916
    %1920 = vrot.lane.b32.xlu0 %v1918, 64
    %v1921 = vpop.permute.xlu0 %1920
    %v1923 = vadd.f32 %v1830, %v1921
    %v1924 = vtanh.pop %v1923
    %v1925 = vsub.f32 %v1653, %v1924
    %1927 = vrot.lane.b32.xlu0 %v1925, 96
    %v1928 = vpop.permute.xlu0 %1927
    %v1930 = vmul.f32 %v1912, %v1928
    %1932 = vrot.lane.b32.xlu0 %v1930, 32
    %v1933 = vpop.permute.xlu0 %1932
    %v1935 = vadd.f32 %v1924, %v1933
    %1936 = vmatprep.subr.mxu0 0.0
    %1937 = vmatpush1.msra.mxu0 0.0
    %1938 = vmatprep.subr.mxu0 0.0
    %1939 = vmatpush1.msra.mxu0 0.0
    %1940 = vmatprep.subr.mxu0 0.0
    %1941 = vmatpush1.msra.mxu0 0.0
    %1942 = vmatprep.subr.mxu0 0.0
    %1943 = vmatpush1.msra.mxu0 0.0
    %1944 = vmatprep.subr.mxu0 0.0
    %1945 = vmatpush1.msra.mxu0 0.0
    %1946 = vmatprep.subr.mxu0 0.0
    %1947 = vmatpush1.msra.mxu0 0.0
    %1948 = vmatprep.subr.mxu0 0.0
    %1949 = vmatpush1.msra.mxu0 0.0
    %1950 = vmatprep.subr.mxu0 0.0
    %1951 = vmatpush1.msra.mxu0 0.0
    %1952 = vmatprep.subr.mxu0 0.0
    %1953 = vmatpush1.msra.mxu0 0.0
    %1954 = vmatprep.subr.mxu0 0.0
    %1955 = vmatpush1.msra.mxu0 0.0
    %1956 = vmatprep.subr.mxu0 0.0
    %1957 = vmatpush1.msra.mxu0 0.0
    %1958 = vmatprep.subr.mxu0 0.0
    %1959 = vmatpush1.msra.mxu0 0.0
    %1960 = vmatprep.subr.mxu0 0.0
    %1961 = vmatpush1.msra.mxu0 %v131
    %1962 = vmatprep.subr.mxu0 0.0
    %1963 = vmatpush1.msra.mxu0 %v130
    %1964 = vmatprep.subr.mxu0 0.0
    %1965 = vmatpush1.msra.mxu0 %v129
    %1966 = vmatprep.subr.mxu0 0.0
    %1967 = vmatpush1.msra.mxu0 %v128
    %1968 = vmatprep.subr.mxu0 0.0
    %1969 = vmatpush2.msra.mxu0 0.0
    %1970 = vmatprep.subr.mxu0 0.0
    %1971 = vmatpush2.msra.mxu0 0.0
    %1972 = vmatprep.subr.mxu0 0.0
    %1973 = vmatpush2.msra.mxu0 0.0
    %1974 = vmatprep.subr.mxu0 0.0
    %1975 = vmatpush2.msra.mxu0 0.0
    %1976 = vmatprep.subr.mxu0 0.0
    %1977 = vmatpush2.msra.mxu0 0.0
    %1978 = vmatprep.subr.mxu0 0.0
    %1979 = vmatpush2.msra.mxu0 0.0
    %1980 = vmatprep.subr.mxu0 0.0
    %1981 = vmatpush2.msra.mxu0 0.0
    %1982 = vmatprep.subr.mxu0 0.0
    %1983 = vmatpush2.msra.mxu0 0.0
    %1984 = vmatprep.subr.mxu0 0.0
    %1985 = vmatpush2.msra.mxu0 0.0
    %1986 = vmatprep.subr.mxu0 0.0
    %1987 = vmatpush2.msra.mxu0 0.0
    %1988 = vmatprep.subr.mxu0 0.0
    %1989 = vmatpush2.msra.mxu0 0.0
    %1990 = vmatprep.subr.mxu0 0.0
    %1991 = vmatpush2.msra.mxu0 0.0
    %1992 = vmatprep.subr.mxu0 0.0
    %1993 = vmatpush2.msra.mxu0 0.0
    %1994 = vmatprep.subr.mxu0 0.0
    %1995 = vmatpush2.msra.mxu0 0.0
    %1996 = vmatprep.subr.mxu0 0.0
    %1997 = vmatpush2.msra.mxu0 0.0
    %1998 = vmatprep.subr.mxu0 0.0
    %1999 = vmatpush2.msra.mxu0 0.0
    %2000 = vmatprep.mubr.f32.mxu0 0.0
    %2001 = vmatmul.mubr.f32.gmra.mxu0 %v1834
    %v2002 = vpop.f32.mrf.mxu0
    %v2003 = vadd.f32 %v526, %v2002
    %v2004 = vpop.f32.mrf.mxu0
    %2005 = vdwg.mxu0
    %2007 = vrot.lane.b32.xlu0 %v1828, 64
    %v2008 = vpop.permute.xlu0 %2007
    %v2009 = vsel %vm308, %v2008, 0
    %2011 = vmatprep.subr.mxu0 0.0
    %2012 = vmatpush1.msra.mxu0 0.0
    %2013 = vmatprep.subr.mxu0 0.0
    %2014 = vmatpush1.msra.mxu0 0.0
    %2015 = vmatprep.subr.mxu0 0.0
    %2016 = vmatpush1.msra.mxu0 0.0
    %2017 = vmatprep.subr.mxu0 0.0
    %2018 = vmatpush1.msra.mxu0 0.0
    %2019 = vmatprep.subr.mxu0 0.0
    %2020 = vmatpush1.msra.mxu0 0.0
    %2021 = vmatprep.subr.mxu0 0.0
    %2022 = vmatpush1.msra.mxu0 0.0
    %2023 = vmatprep.subr.mxu0 0.0
    %2024 = vmatpush1.msra.mxu0 0.0
    %2025 = vmatprep.subr.mxu0 0.0
    %2026 = vmatpush1.msra.mxu0 0.0
    %2027 = vmatprep.subr.mxu0 0.0
    %2028 = vmatpush1.msra.mxu0 0.0
    %2029 = vmatprep.subr.mxu0 0.0
    %2030 = vmatpush1.msra.mxu0 0.0
    %2031 = vmatprep.subr.mxu0 0.0
    %2032 = vmatpush1.msra.mxu0 0.0
    %2033 = vmatprep.subr.mxu0 0.0
    %2034 = vmatpush1.msra.mxu0 0.0
    %2035 = vmatprep.subr.mxu0 0.0
    %2036 = vmatpush1.msra.mxu0 %v139
    %2037 = vmatprep.subr.mxu0 0.0
    %2038 = vmatpush1.msra.mxu0 %v138
    %2039 = vmatprep.subr.mxu0 0.0
    %2040 = vmatpush1.msra.mxu0 %v137
    %2041 = vmatprep.subr.mxu0 0.0
    %2042 = vmatpush1.msra.mxu0 %v136
    %2043 = vmatprep.subr.mxu0 0.0
    %2044 = vmatpush2.msra.mxu0 0.0
    %2045 = vmatprep.subr.mxu0 0.0
    %2046 = vmatpush2.msra.mxu0 0.0
    %2047 = vmatprep.subr.mxu0 0.0
    %2048 = vmatpush2.msra.mxu0 0.0
    %2049 = vmatprep.subr.mxu0 0.0
    %2050 = vmatpush2.msra.mxu0 0.0
    %2051 = vmatprep.subr.mxu0 0.0
    %2052 = vmatpush2.msra.mxu0 0.0
    %2053 = vmatprep.subr.mxu0 0.0
    %2054 = vmatpush2.msra.mxu0 0.0
    %2055 = vmatprep.subr.mxu0 0.0
    %2056 = vmatpush2.msra.mxu0 0.0
    %2057 = vmatprep.subr.mxu0 0.0
    %2058 = vmatpush2.msra.mxu0 0.0
    %2059 = vmatprep.subr.mxu0 0.0
    %2060 = vmatpush2.msra.mxu0 0.0
    %2061 = vmatprep.subr.mxu0 0.0
    %2062 = vmatpush2.msra.mxu0 0.0
    %2063 = vmatprep.subr.mxu0 0.0
    %2064 = vmatpush2.msra.mxu0 0.0
    %2065 = vmatprep.subr.mxu0 0.0
    %2066 = vmatpush2.msra.mxu0 0.0
    %2067 = vmatprep.subr.mxu0 0.0
    %2068 = vmatpush2.msra.mxu0 0.0
    %2069 = vmatprep.subr.mxu0 0.0
    %2070 = vmatpush2.msra.mxu0 0.0
    %2071 = vmatprep.subr.mxu0 0.0
    %2072 = vmatpush2.msra.mxu0 0.0
    %2073 = vmatprep.subr.mxu0 0.0
    %2074 = vmatpush2.msra.mxu0 0.0
    %2075 = vmatprep.mubr.f32.mxu0 0.0
    %2076 = vmatmul.mubr.f32.gmra.mxu0 %v2009
    %v2077 = vpop.f32.mrf.mxu0
    %v2078 = vadd.f32 0.0, %v2077
    %v2079 = vpop.f32.mrf.mxu0
    %2080 = vdwg.mxu0
    %v2081 = vadd.f32 %v2003, %v2078
    %v2082 = vxor.u32 %v2081, 2147483648
    %v2083 = vmul.f32 %v2082, 1.442695
    %v2084 = vpow.pop %v2083
    %v2085 = vadd.f32 %v2084, 1.0
    %v2086 = vrcp.pop %v2085
    %v2087 = vmul.f32 1.0, %v2086
    %v2088 = vadd.f32 %v2078, %v676
    %2090 = vrot.lane.b32.xlu0 %v2088, 64
    %v2091 = vpop.permute.xlu0 %2090
    %v2093 = vmul.f32 %v2087, %v2091
    %2095 = vrot.lane.b32.xlu0 %v2093, 64
    %v2096 = vpop.permute.xlu0 %2095
    %v2098 = vadd.f32 %v2003, %v2096
    %v2099 = vtanh.pop %v2098
    %v2100 = vsub.f32 %v1828, %v2099
    %2102 = vrot.lane.b32.xlu0 %v2100, 96
    %v2103 = vpop.permute.xlu0 %2102
    %v2105 = vmul.f32 %v2087, %v2103
    %2107 = vrot.lane.b32.xlu0 %v2105, 32
    %v2108 = vpop.permute.xlu0 %2107
    %v2110 = vadd.f32 %v2099, %v2108
    %s2111 = scalar_lea.vmem [#allocation2], 56
    %v2112 = vld [vmem:[%s2111] sm:$0xff]
    %2114 = vrot.lane.b32.xlu0 %v1935, 64
    %v2115 = vpop.permute.xlu0 %2114
    %v2116 = vsel %vm308, %v2115, 0
    %2118 = vmatprep.subr.mxu0 0.0
    %2119 = vmatpush1.msra.mxu0 0.0
    %2120 = vmatprep.subr.mxu0 0.0
    %2121 = vmatpush1.msra.mxu0 0.0
    %2122 = vmatprep.subr.mxu0 0.0
    %2123 = vmatpush1.msra.mxu0 0.0
    %2124 = vmatprep.subr.mxu0 0.0
    %2125 = vmatpush1.msra.mxu0 0.0
    %2126 = vmatprep.subr.mxu0 0.0
    %2127 = vmatpush1.msra.mxu0 0.0
    %2128 = vmatprep.subr.mxu0 0.0
    %2129 = vmatpush1.msra.mxu0 0.0
    %2130 = vmatprep.subr.mxu0 0.0
    %2131 = vmatpush1.msra.mxu0 0.0
    %2132 = vmatprep.subr.mxu0 0.0
    %2133 = vmatpush1.msra.mxu0 0.0
    %2134 = vmatprep.subr.mxu0 0.0
    %2135 = vmatpush1.msra.mxu0 0.0
    %2136 = vmatprep.subr.mxu0 0.0
    %2137 = vmatpush1.msra.mxu0 0.0
    %2138 = vmatprep.subr.mxu0 0.0
    %2139 = vmatpush1.msra.mxu0 0.0
    %2140 = vmatprep.subr.mxu0 0.0
    %2141 = vmatpush1.msra.mxu0 0.0
    %2142 = vmatprep.subr.mxu0 0.0
    %2143 = vmatpush1.msra.mxu0 %v135
    %2144 = vmatprep.subr.mxu0 0.0
    %2145 = vmatpush1.msra.mxu0 %v134
    %2146 = vmatprep.subr.mxu0 0.0
    %2147 = vmatpush1.msra.mxu0 %v133
    %2148 = vmatprep.subr.mxu0 0.0
    %2149 = vmatpush1.msra.mxu0 %v132
    %2150 = vmatprep.subr.mxu0 0.0
    %2151 = vmatpush2.msra.mxu0 0.0
    %2152 = vmatprep.subr.mxu0 0.0
    %2153 = vmatpush2.msra.mxu0 0.0
    %2154 = vmatprep.subr.mxu0 0.0
    %2155 = vmatpush2.msra.mxu0 0.0
    %2156 = vmatprep.subr.mxu0 0.0
    %2157 = vmatpush2.msra.mxu0 0.0
    %2158 = vmatprep.subr.mxu0 0.0
    %2159 = vmatpush2.msra.mxu0 0.0
    %2160 = vmatprep.subr.mxu0 0.0
    %2161 = vmatpush2.msra.mxu0 0.0
    %2162 = vmatprep.subr.mxu0 0.0
    %2163 = vmatpush2.msra.mxu0 0.0
    %2164 = vmatprep.subr.mxu0 0.0
    %2165 = vmatpush2.msra.mxu0 0.0
    %2166 = vmatprep.subr.mxu0 0.0
    %2167 = vmatpush2.msra.mxu0 0.0
    %2168 = vmatprep.subr.mxu0 0.0
    %2169 = vmatpush2.msra.mxu0 0.0
    %2170 = vmatprep.subr.mxu0 0.0
    %2171 = vmatpush2.msra.mxu0 0.0
    %2172 = vmatprep.subr.mxu0 0.0
    %2173 = vmatpush2.msra.mxu0 0.0
    %2174 = vmatprep.subr.mxu0 0.0
    %2175 = vmatpush2.msra.mxu0 0.0
    %2176 = vmatprep.subr.mxu0 0.0
    %2177 = vmatpush2.msra.mxu0 0.0
    %2178 = vmatprep.subr.mxu0 0.0
    %2179 = vmatpush2.msra.mxu0 0.0
    %2180 = vmatprep.subr.mxu0 0.0
    %2181 = vmatpush2.msra.mxu0 0.0
    %2182 = vmatprep.mubr.f32.mxu0 0.0
    %2183 = vmatmul.mubr.f32.gmra.mxu0 %v2116
    %v2184 = vpop.f32.mrf.mxu0
    %v2185 = vadd.f32 0.0, %v2184
    %v2186 = vpop.f32.mrf.mxu0
    %2187 = vdwg.mxu0
    %v2188 = vadd.f32 %v2112, %v2185
    %v2189 = vxor.u32 %v2188, 2147483648
    %v2190 = vmul.f32 %v2189, 1.442695
    %v2191 = vpow.pop %v2190
    %v2192 = vadd.f32 %v2191, 1.0
    %v2193 = vrcp.pop %v2192
    %v2194 = vmul.f32 1.0, %v2193
    %v2195 = vadd.f32 %v2185, %v390
    %2197 = vrot.lane.b32.xlu0 %v2195, 64
    %v2198 = vpop.permute.xlu0 %2197
    %v2200 = vmul.f32 %v2194, %v2198
    %2202 = vrot.lane.b32.xlu0 %v2200, 64
    %v2203 = vpop.permute.xlu0 %2202
    %v2205 = vadd.f32 %v2112, %v2203
    %v2206 = vtanh.pop %v2205
    %v2207 = vsub.f32 %v1935, %v2206
    %2209 = vrot.lane.b32.xlu0 %v2207, 96
    %v2210 = vpop.permute.xlu0 %2209
    %v2212 = vmul.f32 %v2194, %v2210
    %2214 = vrot.lane.b32.xlu0 %v2212, 32
    %v2215 = vpop.permute.xlu0 %2214
    %v2217 = vadd.f32 %v2206, %v2215
    %2218 = vmatprep.subr.mxu0 0.0
    %2219 = vmatpush1.msra.mxu0 0.0
    %2220 = vmatprep.subr.mxu0 0.0
    %2221 = vmatpush1.msra.mxu0 0.0
    %2222 = vmatprep.subr.mxu0 0.0
    %2223 = vmatpush1.msra.mxu0 0.0
    %2224 = vmatprep.subr.mxu0 0.0
    %2225 = vmatpush1.msra.mxu0 0.0
    %2226 = vmatprep.subr.mxu0 0.0
    %2227 = vmatpush1.msra.mxu0 0.0
    %2228 = vmatprep.subr.mxu0 0.0
    %2229 = vmatpush1.msra.mxu0 0.0
    %2230 = vmatprep.subr.mxu0 0.0
    %2231 = vmatpush1.msra.mxu0 0.0
    %2232 = vmatprep.subr.mxu0 0.0
    %2233 = vmatpush1.msra.mxu0 0.0
    %2234 = vmatprep.subr.mxu0 0.0
    %2235 = vmatpush1.msra.mxu0 0.0
    %2236 = vmatprep.subr.mxu0 0.0
    %2237 = vmatpush1.msra.mxu0 0.0
    %2238 = vmatprep.subr.mxu0 0.0
    %2239 = vmatpush1.msra.mxu0 0.0
    %2240 = vmatprep.subr.mxu0 0.0
    %2241 = vmatpush1.msra.mxu0 0.0
    %2242 = vmatprep.subr.mxu0 0.0
    %2243 = vmatpush1.msra.mxu0 %v131
    %2244 = vmatprep.subr.mxu0 0.0
    %2245 = vmatpush1.msra.mxu0 %v130
    %2246 = vmatprep.subr.mxu0 0.0
    %2247 = vmatpush1.msra.mxu0 %v129
    %2248 = vmatprep.subr.mxu0 0.0
    %2249 = vmatpush1.msra.mxu0 %v128
    %2250 = vmatprep.subr.mxu0 0.0
    %2251 = vmatpush2.msra.mxu0 0.0
    %2252 = vmatprep.subr.mxu0 0.0
    %2253 = vmatpush2.msra.mxu0 0.0
    %2254 = vmatprep.subr.mxu0 0.0
    %2255 = vmatpush2.msra.mxu0 0.0
    %2256 = vmatprep.subr.mxu0 0.0
    %2257 = vmatpush2.msra.mxu0 0.0
    %2258 = vmatprep.subr.mxu0 0.0
    %2259 = vmatpush2.msra.mxu0 0.0
    %2260 = vmatprep.subr.mxu0 0.0
    %2261 = vmatpush2.msra.mxu0 0.0
    %2262 = vmatprep.subr.mxu0 0.0
    %2263 = vmatpush2.msra.mxu0 0.0
    %2264 = vmatprep.subr.mxu0 0.0
    %2265 = vmatpush2.msra.mxu0 0.0
    %2266 = vmatprep.subr.mxu0 0.0
    %2267 = vmatpush2.msra.mxu0 0.0
    %2268 = vmatprep.subr.mxu0 0.0
    %2269 = vmatpush2.msra.mxu0 0.0
    %2270 = vmatprep.subr.mxu0 0.0
    %2271 = vmatpush2.msra.mxu0 0.0
    %2272 = vmatprep.subr.mxu0 0.0
    %2273 = vmatpush2.msra.mxu0 0.0
    %2274 = vmatprep.subr.mxu0 0.0
    %2275 = vmatpush2.msra.mxu0 0.0
    %2276 = vmatprep.subr.mxu0 0.0
    %2277 = vmatpush2.msra.mxu0 0.0
    %2278 = vmatprep.subr.mxu0 0.0
    %2279 = vmatpush2.msra.mxu0 0.0
    %2280 = vmatprep.subr.mxu0 0.0
    %2281 = vmatpush2.msra.mxu0 0.0
    %2282 = vmatprep.mubr.f32.mxu0 0.0
    %2283 = vmatmul.mubr.f32.gmra.mxu0 %v2116
    %v2284 = vpop.f32.mrf.mxu0
    %v2285 = vadd.f32 %v526, %v2284
    %v2286 = vpop.f32.mrf.mxu0
    %2287 = vdwg.mxu0
    %2289 = vrot.lane.b32.xlu0 %v2110, 64
    %v2290 = vpop.permute.xlu0 %2289
    %v2291 = vsel %vm308, %v2290, 0
    %2293 = vmatprep.subr.mxu0 0.0
    %2294 = vmatpush1.msra.mxu0 0.0
    %2295 = vmatprep.subr.mxu0 0.0
    %2296 = vmatpush1.msra.mxu0 0.0
    %2297 = vmatprep.subr.mxu0 0.0
    %2298 = vmatpush1.msra.mxu0 0.0
    %2299 = vmatprep.subr.mxu0 0.0
    %2300 = vmatpush1.msra.mxu0 0.0
    %2301 = vmatprep.subr.mxu0 0.0
    %2302 = vmatpush1.msra.mxu0 0.0
    %2303 = vmatprep.subr.mxu0 0.0
    %2304 = vmatpush1.msra.mxu0 0.0
    %2305 = vmatprep.subr.mxu0 0.0
    %2306 = vmatpush1.msra.mxu0 0.0
    %2307 = vmatprep.subr.mxu0 0.0
    %2308 = vmatpush1.msra.mxu0 0.0
    %2309 = vmatprep.subr.mxu0 0.0
    %2310 = vmatpush1.msra.mxu0 0.0
    %2311 = vmatprep.subr.mxu0 0.0
    %2312 = vmatpush1.msra.mxu0 0.0
    %2313 = vmatprep.subr.mxu0 0.0
    %2314 = vmatpush1.msra.mxu0 0.0
    %2315 = vmatprep.subr.mxu0 0.0
    %2316 = vmatpush1.msra.mxu0 0.0
    %2317 = vmatprep.subr.mxu0 0.0
    %2318 = vmatpush1.msra.mxu0 %v139
    %2319 = vmatprep.subr.mxu0 0.0
    %2320 = vmatpush1.msra.mxu0 %v138
    %2321 = vmatprep.subr.mxu0 0.0
    %2322 = vmatpush1.msra.mxu0 %v137
    %2323 = vmatprep.subr.mxu0 0.0
    %2324 = vmatpush1.msra.mxu0 %v136
    %2325 = vmatprep.subr.mxu0 0.0
    %2326 = vmatpush2.msra.mxu0 0.0
    %2327 = vmatprep.subr.mxu0 0.0
    %2328 = vmatpush2.msra.mxu0 0.0
    %2329 = vmatprep.subr.mxu0 0.0
    %2330 = vmatpush2.msra.mxu0 0.0
    %2331 = vmatprep.subr.mxu0 0.0
    %2332 = vmatpush2.msra.mxu0 0.0
    %2333 = vmatprep.subr.mxu0 0.0
    %2334 = vmatpush2.msra.mxu0 0.0
    %2335 = vmatprep.subr.mxu0 0.0
    %2336 = vmatpush2.msra.mxu0 0.0
    %2337 = vmatprep.subr.mxu0 0.0
    %2338 = vmatpush2.msra.mxu0 0.0
    %2339 = vmatprep.subr.mxu0 0.0
    %2340 = vmatpush2.msra.mxu0 0.0
    %2341 = vmatprep.subr.mxu0 0.0
    %2342 = vmatpush2.msra.mxu0 0.0
    %2343 = vmatprep.subr.mxu0 0.0
    %2344 = vmatpush2.msra.mxu0 0.0
    %2345 = vmatprep.subr.mxu0 0.0
    %2346 = vmatpush2.msra.mxu0 0.0
    %2347 = vmatprep.subr.mxu0 0.0
    %2348 = vmatpush2.msra.mxu0 0.0
    %2349 = vmatprep.subr.mxu0 0.0
    %2350 = vmatpush2.msra.mxu0 0.0
    %2351 = vmatprep.subr.mxu0 0.0
    %2352 = vmatpush2.msra.mxu0 0.0
    %2353 = vmatprep.subr.mxu0 0.0
    %2354 = vmatpush2.msra.mxu0 0.0
    %2355 = vmatprep.subr.mxu0 0.0
    %2356 = vmatpush2.msra.mxu0 0.0
    %2357 = vmatprep.mubr.f32.mxu0 0.0
    %2358 = vmatmul.mubr.f32.gmra.mxu0 %v2291
    %v2359 = vpop.f32.mrf.mxu0
    %v2360 = vadd.f32 0.0, %v2359
    %v2361 = vpop.f32.mrf.mxu0
    %2362 = vdwg.mxu0
    %v2363 = vadd.f32 %v2285, %v2360
    %v2364 = vxor.u32 %v2363, 2147483648
    %v2365 = vmul.f32 %v2364, 1.442695
    %v2366 = vpow.pop %v2365
    %v2367 = vadd.f32 %v2366, 1.0
    %v2368 = vrcp.pop %v2367
    %v2369 = vmul.f32 1.0, %v2368
    %v2370 = vadd.f32 %v2360, %v676
    %2372 = vrot.lane.b32.xlu0 %v2370, 64
    %v2373 = vpop.permute.xlu0 %2372
    %v2375 = vmul.f32 %v2369, %v2373
    %2377 = vrot.lane.b32.xlu0 %v2375, 64
    %v2378 = vpop.permute.xlu0 %2377
    %v2380 = vadd.f32 %v2285, %v2378
    %v2381 = vtanh.pop %v2380
    %v2382 = vsub.f32 %v2110, %v2381
    %2384 = vrot.lane.b32.xlu0 %v2382, 96
    %v2385 = vpop.permute.xlu0 %2384
    %v2387 = vmul.f32 %v2369, %v2385
    %2389 = vrot.lane.b32.xlu0 %v2387, 32
    %v2390 = vpop.permute.xlu0 %2389
    %v2392 = vadd.f32 %v2381, %v2390
    %2394 = vrot.lane.b32.xlu0 %v2217, 64
    %v2395 = vpop.permute.xlu0 %2394
    %v2396 = vsel %vm308, %v2395, 0
    %2398 = vmatprep.subr.mxu0 0.0
    %2399 = vmatpush1.msra.mxu0 0.0
    %2400 = vmatprep.subr.mxu0 0.0
    %2401 = vmatpush1.msra.mxu0 0.0
    %2402 = vmatprep.subr.mxu0 0.0
    %2403 = vmatpush1.msra.mxu0 0.0
    %2404 = vmatprep.subr.mxu0 0.0
    %2405 = vmatpush1.msra.mxu0 0.0
    %2406 = vmatprep.subr.mxu0 0.0
    %2407 = vmatpush1.msra.mxu0 0.0
    %2408 = vmatprep.subr.mxu0 0.0
    %2409 = vmatpush1.msra.mxu0 0.0
    %2410 = vmatprep.subr.mxu0 0.0
    %2411 = vmatpush1.msra.mxu0 0.0
    %2412 = vmatprep.subr.mxu0 0.0
    %2413 = vmatpush1.msra.mxu0 0.0
    %2414 = vmatprep.subr.mxu0 0.0
    %2415 = vmatpush1.msra.mxu0 0.0
    %2416 = vmatprep.subr.mxu0 0.0
    %2417 = vmatpush1.msra.mxu0 0.0
    %2418 = vmatprep.subr.mxu0 0.0
    %2419 = vmatpush1.msra.mxu0 0.0
    %2420 = vmatprep.subr.mxu0 0.0
    %2421 = vmatpush1.msra.mxu0 0.0
    %2422 = vmatprep.subr.mxu0 0.0
    %2423 = vmatpush1.msra.mxu0 %v131
    %2424 = vmatprep.subr.mxu0 0.0
    %2425 = vmatpush1.msra.mxu0 %v130
    %2426 = vmatprep.subr.mxu0 0.0
    %2427 = vmatpush1.msra.mxu0 %v129
    %2428 = vmatprep.subr.mxu0 0.0
    %2429 = vmatpush1.msra.mxu0 %v128
    %2430 = vmatprep.subr.mxu0 0.0
    %2431 = vmatpush2.msra.mxu0 0.0
    %2432 = vmatprep.subr.mxu0 0.0
    %2433 = vmatpush2.msra.mxu0 0.0
    %2434 = vmatprep.subr.mxu0 0.0
    %2435 = vmatpush2.msra.mxu0 0.0
    %2436 = vmatprep.subr.mxu0 0.0
    %2437 = vmatpush2.msra.mxu0 0.0
    %2438 = vmatprep.subr.mxu0 0.0
    %2439 = vmatpush2.msra.mxu0 0.0
    %2440 = vmatprep.subr.mxu0 0.0
    %2441 = vmatpush2.msra.mxu0 0.0
    %2442 = vmatprep.subr.mxu0 0.0
    %2443 = vmatpush2.msra.mxu0 0.0
    %2444 = vmatprep.subr.mxu0 0.0
    %2445 = vmatpush2.msra.mxu0 0.0
    %2446 = vmatprep.subr.mxu0 0.0
    %2447 = vmatpush2.msra.mxu0 0.0
    %2448 = vmatprep.subr.mxu0 0.0
    %2449 = vmatpush2.msra.mxu0 0.0
    %2450 = vmatprep.subr.mxu0 0.0
    %2451 = vmatpush2.msra.mxu0 0.0
    %2452 = vmatprep.subr.mxu0 0.0
    %2453 = vmatpush2.msra.mxu0 0.0
    %2454 = vmatprep.subr.mxu0 0.0
    %2455 = vmatpush2.msra.mxu0 0.0
    %2456 = vmatprep.subr.mxu0 0.0
    %2457 = vmatpush2.msra.mxu0 0.0
    %2458 = vmatprep.subr.mxu0 0.0
    %2459 = vmatpush2.msra.mxu0 0.0
    %2460 = vmatprep.subr.mxu0 0.0
    %2461 = vmatpush2.msra.mxu0 0.0
    %2462 = vmatprep.mubr.f32.mxu0 0.0
    %2463 = vmatmul.mubr.f32.gmra.mxu0 %v2396
    %v2464 = vpop.f32.mrf.mxu0
    %v2465 = vadd.f32 %v526, %v2464
    %v2466 = vpop.f32.mrf.mxu0
    %2467 = vdwg.mxu0
    %2469 = vrot.lane.b32.xlu0 %v2392, 64
    %v2470 = vpop.permute.xlu0 %2469
    %v2471 = vsel %vm308, %v2470, 0
    %2473 = vmatprep.subr.mxu0 0.0
    %2474 = vmatpush1.msra.mxu0 0.0
    %2475 = vmatprep.subr.mxu0 0.0
    %2476 = vmatpush1.msra.mxu0 0.0
    %2477 = vmatprep.subr.mxu0 0.0
    %2478 = vmatpush1.msra.mxu0 0.0
    %2479 = vmatprep.subr.mxu0 0.0
    %2480 = vmatpush1.msra.mxu0 0.0
    %2481 = vmatprep.subr.mxu0 0.0
    %2482 = vmatpush1.msra.mxu0 0.0
    %2483 = vmatprep.subr.mxu0 0.0
    %2484 = vmatpush1.msra.mxu0 0.0
    %2485 = vmatprep.subr.mxu0 0.0
    %2486 = vmatpush1.msra.mxu0 0.0
    %2487 = vmatprep.subr.mxu0 0.0
    %2488 = vmatpush1.msra.mxu0 0.0
    %2489 = vmatprep.subr.mxu0 0.0
    %2490 = vmatpush1.msra.mxu0 0.0
    %2491 = vmatprep.subr.mxu0 0.0
    %2492 = vmatpush1.msra.mxu0 0.0
    %2493 = vmatprep.subr.mxu0 0.0
    %2494 = vmatpush1.msra.mxu0 0.0
    %2495 = vmatprep.subr.mxu0 0.0
    %2496 = vmatpush1.msra.mxu0 0.0
    %2497 = vmatprep.subr.mxu0 0.0
    %2498 = vmatpush1.msra.mxu0 %v139
    %2499 = vmatprep.subr.mxu0 0.0
    %2500 = vmatpush1.msra.mxu0 %v138
    %2501 = vmatprep.subr.mxu0 0.0
    %2502 = vmatpush1.msra.mxu0 %v137
    %2503 = vmatprep.subr.mxu0 0.0
    %2504 = vmatpush1.msra.mxu0 %v136
    %2505 = vmatprep.subr.mxu0 0.0
    %2506 = vmatpush2.msra.mxu0 0.0
    %2507 = vmatprep.subr.mxu0 0.0
    %2508 = vmatpush2.msra.mxu0 0.0
    %2509 = vmatprep.subr.mxu0 0.0
    %2510 = vmatpush2.msra.mxu0 0.0
    %2511 = vmatprep.subr.mxu0 0.0
    %2512 = vmatpush2.msra.mxu0 0.0
    %2513 = vmatprep.subr.mxu0 0.0
    %2514 = vmatpush2.msra.mxu0 0.0
    %2515 = vmatprep.subr.mxu0 0.0
    %2516 = vmatpush2.msra.mxu0 0.0
    %2517 = vmatprep.subr.mxu0 0.0
    %2518 = vmatpush2.msra.mxu0 0.0
    %2519 = vmatprep.subr.mxu0 0.0
    %2520 = vmatpush2.msra.mxu0 0.0
    %2521 = vmatprep.subr.mxu0 0.0
    %2522 = vmatpush2.msra.mxu0 0.0
    %2523 = vmatprep.subr.mxu0 0.0
    %2524 = vmatpush2.msra.mxu0 0.0
    %2525 = vmatprep.subr.mxu0 0.0
    %2526 = vmatpush2.msra.mxu0 0.0
    %2527 = vmatprep.subr.mxu0 0.0
    %2528 = vmatpush2.msra.mxu0 0.0
    %2529 = vmatprep.subr.mxu0 0.0
    %2530 = vmatpush2.msra.mxu0 0.0
    %2531 = vmatprep.subr.mxu0 0.0
    %2532 = vmatpush2.msra.mxu0 0.0
    %2533 = vmatprep.subr.mxu0 0.0
    %2534 = vmatpush2.msra.mxu0 0.0
    %2535 = vmatprep.subr.mxu0 0.0
    %2536 = vmatpush2.msra.mxu0 0.0
    %2537 = vmatprep.mubr.f32.mxu0 0.0
    %2538 = vmatmul.mubr.f32.gmra.mxu0 %v2471
    %v2539 = vpop.f32.mrf.mxu0
    %v2540 = vadd.f32 0.0, %v2539
    %v2541 = vpop.f32.mrf.mxu0
    %2542 = vdwg.mxu0
    %v2543 = vadd.f32 %v2465, %v2540
    %v2544 = vxor.u32 %v2543, 2147483648
    %v2545 = vmul.f32 %v2544, 1.442695
    %v2546 = vpow.pop %v2545
    %v2547 = vadd.f32 %v2546, 1.0
    %v2548 = vrcp.pop %v2547
    %v2549 = vmul.f32 1.0, %v2548
    %v2550 = vadd.f32 %v2540, %v676
    %2552 = vrot.lane.b32.xlu0 %v2550, 64
    %v2553 = vpop.permute.xlu0 %2552
    %v2555 = vmul.f32 %v2549, %v2553
    %2557 = vrot.lane.b32.xlu0 %v2555, 64
    %v2558 = vpop.permute.xlu0 %2557
    %v2560 = vadd.f32 %v2465, %v2558
    %v2561 = vtanh.pop %v2560
    %v2562 = vsub.f32 %v2392, %v2561
    %2564 = vrot.lane.b32.xlu0 %v2562, 96
    %v2565 = vpop.permute.xlu0 %2564
    %v2567 = vmul.f32 %v2549, %v2565
    %2569 = vrot.lane.b32.xlu0 %v2567, 32
    %v2570 = vpop.permute.xlu0 %2569
    %v2572 = vadd.f32 %v2561, %v2570
    %v2573 = vld [vmem:[%s9] sm:$0xff]
    %v2574 = vld [vmem:[%s9 + $0x8] sm:$0xff]
    %v2575 = vld [vmem:[%s9 + $0x10] sm:$0xff]
    %v2576 = vld [vmem:[%s9 + $0x18] sm:$0xff]
    %v2577 = vld [vmem:[%s10] sm:$0x1]
    %v2579 = vlaneseq
    %v2580 = vshrl.u32 %v2579, 7
    %v2581 = vsub.s32 0, %v2580
    %v2582 = vrot.slane %v2577, %v2581
    %2585 = vrot.lane.b32.xlu0 %v2572, 64
    %v2586 = vpop.permute.xlu0 %2585
    %v2587 = vsel %vm308, %v2586, 0
    %2589 = vmatprep.subr.mxu0 0.0
    %2590 = vmatpush1.msra.mxu0 0.0
    %2591 = vmatprep.subr.mxu0 0.0
    %2592 = vmatpush1.msra.mxu0 0.0
    %2593 = vmatprep.subr.mxu0 0.0
    %2594 = vmatpush1.msra.mxu0 0.0
    %2595 = vmatprep.subr.mxu0 0.0
    %2596 = vmatpush1.msra.mxu0 0.0
    %2597 = vmatprep.subr.mxu0 0.0
    %2598 = vmatpush1.msra.mxu0 0.0
    %2599 = vmatprep.subr.mxu0 0.0
    %2600 = vmatpush1.msra.mxu0 0.0
    %2601 = vmatprep.subr.mxu0 0.0
    %2602 = vmatpush1.msra.mxu0 0.0
    %2603 = vmatprep.subr.mxu0 0.0
    %2604 = vmatpush1.msra.mxu0 0.0
    %2605 = vmatprep.subr.mxu0 0.0
    %2606 = vmatpush1.msra.mxu0 0.0
    %2607 = vmatprep.subr.mxu0 0.0
    %2608 = vmatpush1.msra.mxu0 0.0
    %2609 = vmatprep.subr.mxu0 0.0
    %2610 = vmatpush1.msra.mxu0 0.0
    %2611 = vmatprep.subr.mxu0 0.0
    %2612 = vmatpush1.msra.mxu0 0.0
    %2613 = vmatprep.subr.mxu0 0.0
    %2614 = vmatpush1.msra.mxu0 %v2576
    %2615 = vmatprep.subr.mxu0 0.0
    %2616 = vmatpush1.msra.mxu0 %v2575
    %2617 = vmatprep.subr.mxu0 0.0
    %2618 = vmatpush1.msra.mxu0 %v2574
    %2619 = vmatprep.subr.mxu0 0.0
    %2620 = vmatpush1.msra.mxu0 %v2573
    %2621 = vmatprep.subr.mxu0 0.0
    %2622 = vmatpush2.msra.mxu0 0.0
    %2623 = vmatprep.subr.mxu0 0.0
    %2624 = vmatpush2.msra.mxu0 0.0
    %2625 = vmatprep.subr.mxu0 0.0
    %2626 = vmatpush2.msra.mxu0 0.0
    %2627 = vmatprep.subr.mxu0 0.0
    %2628 = vmatpush2.msra.mxu0 0.0
    %2629 = vmatprep.subr.mxu0 0.0
    %2630 = vmatpush2.msra.mxu0 0.0
    %2631 = vmatprep.subr.mxu0 0.0
    %2632 = vmatpush2.msra.mxu0 0.0
    %2633 = vmatprep.subr.mxu0 0.0
    %2634 = vmatpush2.msra.mxu0 0.0
    %2635 = vmatprep.subr.mxu0 0.0
    %2636 = vmatpush2.msra.mxu0 0.0
    %2637 = vmatprep.subr.mxu0 0.0
    %2638 = vmatpush2.msra.mxu0 0.0
    %2639 = vmatprep.subr.mxu0 0.0
    %2640 = vmatpush2.msra.mxu0 0.0
    %2641 = vmatprep.subr.mxu0 0.0
    %2642 = vmatpush2.msra.mxu0 0.0
    %2643 = vmatprep.subr.mxu0 0.0
    %2644 = vmatpush2.msra.mxu0 0.0
    %2645 = vmatprep.subr.mxu0 0.0
    %2646 = vmatpush2.msra.mxu0 0.0
    %2647 = vmatprep.subr.mxu0 0.0
    %2648 = vmatpush2.msra.mxu0 0.0
    %2649 = vmatprep.subr.mxu0 0.0
    %2650 = vmatpush2.msra.mxu0 0.0
    %2651 = vmatprep.subr.mxu0 0.0
    %2652 = vmatpush2.msra.mxu0 0.0
    %2653 = vmatprep.mubr.f32.mxu0 0.0
    %2654 = vmatmul.mubr.f32.gmra.mxu0 %v2587
    %v2655 = vpop.f32.mrf.mxu0
    %v2656 = vadd.f32 %v2582, %v2655
    %v2657 = vpop.f32.mrf.mxu0
    %2658 = vdwg.mxu0
    %vm2659 = vcmask 80896
    %2660 = vst.msk [vmem:[#allocation15] sm:$0xff] %vm2659, %v2656
    // Predicated region
    $region74: #{tpu_custom_call.1} parent=1 // pred_check
      _
    $region75: #{tpu_custom_call.1} parent=1 // pred_check_branch
      %2662 = sbr.rel (0) target = $region77
    $region76: #{tpu_custom_call.1} parent=1 // pred_region
      %s2664 = ssub.s32 128, 128
      %2665 = vsyncadd [#allocation5], %s2664
      %s2667 = sshll.u32 [#allocation15], 4
      %s2668 = int_to_ptr.vmem [resolvable:$true] %s2667
      %2670 = dma.vmem_to_hbm [thread:$0]  %s2668, 128, %s11, [#allocation5]
    $region77: #{tpu_custom_call.1} parent=1 // pred_fallthru
      _
    // Predicated region
    $region78: #{tpu_custom_call.1} parent=1 // pred_check
      _
    $region79: #{tpu_custom_call.1} parent=1 // pred_check_branch
      %2672 = sbr.rel (0) target = $region81
    $region80: #{tpu_custom_call.1} parent=1 // pred_region
      %2673 = dma.done [#allocation5], 128
    $region81: #{tpu_custom_call.1} parent=1 // pred_fallthru
      _
    %2674 = vsyncpa [#allocation4], 1
    %2675 = vsyncpa [#allocation7], 1
    %2676 = vsyncpa [#allocation10], 1
    %2677 = vsyncpa [#allocation13], 1
    %2678 = vsyncpa [#allocation5], 1

</llo_original>
